<compile_context>
chip_gen: v7x
topology: tpu7x:2x2x1
jax: 0.10.0
libtpu: 0.0.40
codegen_flags: <defaults>
</compile_context>

<pallas_src>
import functools

import jax
import jax.numpy as jnp
import numpy as np
from jax.experimental import pallas as pl
from jax.experimental.pallas import tpu as pltpu


def _nearest_kernel(x_ref, emb_ref, embsq_ref, res_ref, idx_ref):
    """One (d, TN) tile of pixel vectors against the full (d, K) codebook."""
    x = x_ref[...]                                   # (d, TN)  input dtype
    emb = emb_ref[...]                               # (d, K)   input dtype
    emb_sq = embsq_ref[...]                          # (1, K)   f32 (possibly group-scaled)

    # scores[n, k] = ||e_k||^2(*scale_g) - 2 * x_n . e_k
    # (the row-constant ||x_n||^2 term is dropped: it cannot change the argmin)
    xe = jax.lax.dot_general(                        # (TN, K) on MXU
        x, emb, dimension_numbers=(((0,), (0,)), ((), ())),
        preferred_element_type=jnp.float32)
    scores = emb_sq - 2.0 * xe                       # (TN, K) f32

    idx = jnp.argmin(scores, axis=-1).astype(jnp.int32)       # (TN,)  lane-axis argmin

    # Gather winning codewords via one-hot matmul (exact: one-hot entries are 0/1),
    # produced directly in the lane-dense (d, TN) output layout.
    onehot = (jax.lax.broadcasted_iota(jnp.int32, scores.shape, 1)
              == idx[:, None]).astype(emb.dtype)               # (TN, K)
    res = jax.lax.dot_general(                       # (d, TN)
        emb, onehot, dimension_numbers=(((1,), (1,)), ((), ())),
        preferred_element_type=jnp.float32)
    res_ref[...] = res.astype(res_ref.dtype)

    idx_ref[...] = idx[None, :]                      # (1, TN) lane-dense index store


def _nearest_embed_pallas(x3, emb, emb_sq_rows, *, tile_n=512):
    """x3:(BG, d, HW) pixel vectors (channel-middle layout), emb:(d, K) codebook,
    emb_sq_rows:(R, 1, K) f32 codeword squared-norms with R in {1, BG}.

    Returns (res:(BG, d, HW) nearest codewords, idx:(BG, HW) int32 argmins).
    """
    BG, d, HW = x3.shape
    K = emb.shape[1]

    # Tile along the spatial (lane) axis; keep it a multiple of 128 and clamp to the
    # (128-rounded) spatial extent for tiny inputs.
    tn = max(128, ((int(tile_n) + 127) // 128) * 128)
    hw128 = ((HW + 127) // 128) * 128
    tn = min(tn, hw128)
    HWp = ((HW + tn - 1) // tn) * tn
    pad = HWp - HW
    xp = jnp.pad(x3, ((0, 0), (0, 0), (0, pad))) if pad else x3
    nt = HWp // tn

    per_bg = emb_sq_rows.shape[0] == BG
    embsq_map = (lambda b, n: (b, 0, 0)) if per_bg else (lambda b, n: (0, 0, 0))

    # TODO(synk): for very large codebooks (K >= 8192) add a grid axis over K with a
    # running (min_score, argmin) carried in VMEM scratch so only a (d, TK) slab is
    # resident per step (keeps VMEM bounded on v7x's 64 MiB).
    res, idx = pl.pallas_call(
        _nearest_kernel,
        out_shape=(jax.ShapeDtypeStruct((BG, d, HWp), x3.dtype),
                   jax.ShapeDtypeStruct((BG, 1, HWp), jnp.int32)),
        grid=(BG, nt),
        in_specs=[pl.BlockSpec((None, d, tn), lambda b, n: (b, 0, n)),
                  pl.BlockSpec((d, K), lambda b, n: (0, 0)),        # fetched once
                  pl.BlockSpec((None, 1, K), embsq_map)],
        out_specs=(pl.BlockSpec((None, d, tn), lambda b, n: (b, 0, n)),
                   pl.BlockSpec((None, 1, tn), lambda b, n: (b, 0, n))),
        compiler_params=pltpu.CompilerParams(
            dimension_semantics=("parallel", "parallel"),
            vmem_limit_bytes=64 * 1024 * 1024),
    )(xp, emb, emb_sq_rows)

    return res[:, :, :HW], idx[:, 0, :HW]


@functools.partial(jax.jit,
                   static_argnames=("hyperbolic", "bounded_measure", "n_groups", "tile_n"))
def nearest_embed_forward(x, emb, *, hyperbolic=False, bounded_measure=False,
                          n_groups=1, tile_n=512):
    """Forward pass of NearestEmbed. x:(B, D, H, W) NCHW, emb:(d, K), D = n_groups*d.

    Returns (result:(B, D, H, W), argmins:(B, n_groups, H, W) int32).
    """
    if hyperbolic:
        # TODO(synk): hyperbolic path needs external metrics.PoincareDistance / manifold; not translatable.
        raise NotImplementedError("hyperbolic NearestEmbed path not implemented")

    B, D, H, W = x.shape
    d, K = emb.shape
    assert D % n_groups == 0 and D // n_groups == d
    BG, HW = B * n_groups, H * W

    # NCHW (B, G*d, H, W) -> (B*G, d, H*W): pure reshape, no HBM shuffle.
    x3 = x.reshape(BG, d, HW)

    emb_f32 = emb.astype(jnp.float32)
    emb_sq = jnp.sum(emb_f32 ** 2, axis=0)                      # (K,)  ||e_k||^2

    if bounded_measure:
        # cosine-similarity-like bounded measure:
        #   argmin_k || x/||X_g||  -  e_k/||E|| ||^2
        #   == argmin_k ( ||e_k||^2 * (||X_g||/||E||)  -  2 x.e_k )
        # i.e. fold both global norms into the per-group codeword-norm vector
        # (no rescaling pass over x needed; one shared codebook serves both matmuls).
        emb_norm = jnp.sqrt(jnp.sum(emb_f32 ** 2))                                   # scalar
        xg_f32 = x3.astype(jnp.float32).reshape(B, n_groups, d * HW)
        x_norms = jnp.sqrt(jnp.sum(xg_f32 ** 2, axis=(0, 2)))                        # (G,)
        embsq_rows = emb_sq[None, :] * (x_norms / emb_norm)[:, None]                 # (G, K)
        embsq_rows = jnp.tile(embsq_rows, (B, 1)).reshape(BG, 1, K)                  # row b*G+g
    else:
        embsq_rows = emb_sq.reshape(1, 1, K)

    res3, idx = _nearest_embed_pallas(x3, emb, embsq_rows, tile_n=tile_n)

    argmins = idx.reshape(B, n_groups, H, W)          # NOTE: torch uses int64; int32 here
    result = res3.reshape(B, D, H, W)                 # pure reshape back to NCHW

    if bounded_measure:
        # per-group renormalisation of the gathered codewords: r_g <- r_g / ||r_g|| * ||E||
        res_norms = jnp.sqrt(jnp.sum(
            res3.astype(jnp.float32).reshape(B, n_groups, d * HW) ** 2, axis=(0, 2)))  # (G,)
        scale = emb_norm / res_norms
        result = (result.reshape(B, n_groups, d, H, W)
                  * scale[None, :, None, None, None]).reshape(B, D, H, W)

    result = result / (n_groups ** 0.5)
    return result.astype(x.dtype), argmins


def _reference(x, emb, n_groups, bounded_measure=False):
    """Pure-JAX reference matching the PyTorch forward (Euclidean paths)."""
    B, D, H, W = x.shape
    d, K = emb.shape
    results, argmins = [], []
    for g in range(n_groups):
        xg = x[:, g * d:(g + 1) * d]                     # (B, d, H, W)
        xe = xg[:, :, :, :, None]                        # (B, d, H, W, 1)
        ee = emb.reshape(1, d, 1, 1, K)
        if bounded_measure:
            xn = jnp.sqrt(jnp.sum(xg ** 2))
            en = jnp.sqrt(jnp.sum(emb ** 2))
            dist = jnp.linalg.norm(xe / xn - ee / en, axis=1) ** 2 / 2
        else:
            dist = jnp.linalg.norm(xe - ee, axis=1)      # (B, H, W, K)
        am = jnp.argmin(dist, axis=-1)                   # (B, H, W)
        res = jnp.transpose(emb.T[am], (0, 3, 1, 2))     # (B, d, H, W)
        if bounded_measure:
            res = res / jnp.sqrt(jnp.sum(res ** 2)) * jnp.sqrt(jnp.sum(emb ** 2))
        results.append(res)
        argmins.append(am)
    result = jnp.concatenate(results, axis=1) / (n_groups ** 0.5)
    return result, jnp.stack(argmins, axis=1)


if __name__ == "__main__":
    key = jax.random.PRNGKey(0)

    # --- Test A: Euclidean, unbounded, n_groups=1 ----------------------------
    B, D, H, W = 2, 4, 16, 16
    n_groups, K = 1, 8
    d = D // n_groups
    kx, kw, key = jax.random.split(key, 3)
    x = jax.random.normal(kx, (B, D, H, W), dtype=jnp.float32)
    weight = jax.random.uniform(kw, (d, K), dtype=jnp.float32)   # torch.rand(d, K)

    result, argmins = nearest_embed_forward(
        x, weight, hyperbolic=False, bounded_measure=False, n_groups=n_groups)
    jax.block_until_ready((result, argmins))

    ref_res, ref_arg = _reference(x, weight, n_groups, bounded_measure=False)
    assert result.shape == (B, D, H, W) and argmins.shape == (B, n_groups, H, W)
    np.testing.assert_array_equal(np.asarray(argmins), np.asarray(ref_arg))
    np.testing.assert_allclose(np.asarray(result), np.asarray(ref_res), rtol=1e-5, atol=1e-5)

    # --- Test B: bounded measure (cosine-like), n_groups=2 --------------------
    B2, D2, H2, W2 = 2, 8, 8, 8
    n_groups2, K2 = 2, 16
    d2 = D2 // n_groups2
    kx2, kw2, key = jax.random.split(key, 3)
    x2 = jax.random.normal(kx2, (B2, D2, H2, W2), dtype=jnp.float32)
    weight2 = jax.random.uniform(kw2, (d2, K2), dtype=jnp.float32)

    result2, argmins2 = nearest_embed_forward(
        x2, weight2, hyperbolic=False, bounded_measure=True, n_groups=n_groups2)
    jax.block_until_ready((result2, argmins2))

    ref_res2, ref_arg2 = _reference(x2, weight2, n_groups2, bounded_measure=True)
    assert result2.shape == (B2, D2, H2, W2) and argmins2.shape == (B2, n_groups2, H2, W2)
    np.testing.assert_array_equal(np.asarray(argmins2), np.asarray(ref_arg2))
    np.testing.assert_allclose(np.asarray(result2), np.asarray(ref_res2), rtol=1e-5, atol=1e-5)

    print("KERNEL_OK")
</pallas_src>

<mosaic_0001>
module attributes {stable_mosaic.version = 11 : i64} {
  func.func @_nearest_kernel(%arg0: i32, %arg1: i32, %arg2: memref<1x4x256xf32, #tpu.memory_space<vmem>>, %arg3: memref<4x8xf32, #tpu.memory_space<vmem>>, %arg4: memref<1x1x8xf32, #tpu.memory_space<vmem>>, %arg5: memref<1x4x256xf32, #tpu.memory_space<vmem>>, %arg6: memref<1x1x256xi32, #tpu.memory_space<vmem>>) attributes {dimension_semantics = [#tpu.dimension_semantics<parallel>, #tpu.dimension_semantics<parallel>], iteration_bounds = array<i64: 2, 1>, scalar_prefetch = 0 : i64, scratch_operands = 0 : i64, tpu.core_type = #tpu.core_type<tc>, window_params = [{transform_indices = @transform_0, window_bounds = array<i64: 1, 4, 256>}, {pipeline_mode = #tpu.pipeline_mode<synchronous>, transform_indices = @transform_1, window_bounds = array<i64: 4, 8>}, {pipeline_mode = #tpu.pipeline_mode<synchronous>, transform_indices = @transform_2, window_bounds = array<i64: 1, 1, 8>}, {transform_indices = @transform_3, window_bounds = array<i64: 1, 4, 256>}, {transform_indices = @transform_4, window_bounds = array<i64: 1, 1, 256>}]} {
    %c0 = arith.constant 0 : index
    %c0_0 = arith.constant 0 : index
    %c0_1 = arith.constant 0 : index
    %0 = vector.load %arg2[%c0, %c0_0, %c0_1] : memref<1x4x256xf32, #tpu.memory_space<vmem>>, vector<1x4x256xf32>
    %1 = vector.shape_cast %0 : vector<1x4x256xf32> to vector<4x256xf32>
    %c0_2 = arith.constant 0 : index
    %c0_3 = arith.constant 0 : index
    %2 = vector.load %arg3[%c0_2, %c0_3] : memref<4x8xf32, #tpu.memory_space<vmem>>, vector<4x8xf32>
    %c0_4 = arith.constant 0 : index
    %c0_5 = arith.constant 0 : index
    %c0_6 = arith.constant 0 : index
    %3 = vector.load %arg4[%c0_4, %c0_5, %c0_6] : memref<1x1x8xf32, #tpu.memory_space<vmem>>, vector<1x1x8xf32>
    %4 = vector.shape_cast %3 : vector<1x1x8xf32> to vector<1x8xf32>
    %cst = arith.constant dense<0.000000e+00> : vector<256x8xf32>
    %5 = tpu.matmul %1, %2, %cst {dimension_numbers = #tpu.dot_dimension_numbers<[0], [0], [1], [1], [0, 1, 1, 1], [], []>} : vector<4x256xf32>, vector<4x8xf32>, vector<256x8xf32> -> vector<256x8xf32>
    %cst_7 = arith.constant 2.000000e+00 : f32
    %6 = vector.broadcast %cst_7 : f32 to vector<256x8xf32>
    %7 = arith.mulf %6, %5 : vector<256x8xf32>
    %8 = vector.broadcast %4 : vector<1x8xf32> to vector<256x8xf32>
    %9 = arith.subf %8, %7 : vector<256x8xf32>
    %10 = tpu.reduce_index %9 {axis = 1 : i32, kind = #tpu.reduction_kind<arg_min>} : vector<256x8xf32> -> vector<256xi32>
    %11 = tpu.iota {dimensions = array<i32: 1>} : vector<256x8xi32>
    %12 = vector.shape_cast %10 : vector<256xi32> to vector<256x1xi32>
    %13 = vector.broadcast %12 : vector<256x1xi32> to vector<256x8xi32>
    %14 = arith.cmpi eq, %11, %13 : vector<256x8xi32>
    %15 = arith.extui %14 : vector<256x8xi1> to vector<256x8xi32>
    %16 = arith.sitofp %15 : vector<256x8xi32> to vector<256x8xf32>
    %cst_8 = arith.constant dense<0.000000e+00> : vector<4x256xf32>
    %17 = tpu.matmul %2, %16, %cst_8 {dimension_numbers = #tpu.dot_dimension_numbers<[1], [1], [0], [0], [0, 0, 1, 0], [], []>} : vector<4x8xf32>, vector<256x8xf32>, vector<4x256xf32> -> vector<4x256xf32>
    %c0_9 = arith.constant 0 : index
    %c0_10 = arith.constant 0 : index
    %c0_11 = arith.constant 0 : index
    %18 = vector.load %arg5[%c0_9, %c0_10, %c0_11] : memref<1x4x256xf32, #tpu.memory_space<vmem>>, vector<1x4x256xf32>
    %19 = vector.shape_cast %18 : vector<1x4x256xf32> to vector<4x256xf32>
    %20 = vector.shape_cast %17 : vector<4x256xf32> to vector<1x4x256xf32>
    tpu.vector_store %arg5[%c0_9, %c0_10, %c0_11], %20 {strides = array<i32>} : memref<1x4x256xf32, #tpu.memory_space<vmem>>, vector<1x4x256xf32>,
    %21 = vector.shape_cast %10 : vector<256xi32> to vector<1x256xi32>
    %c0_12 = arith.constant 0 : index
    %c0_13 = arith.constant 0 : index
    %c0_14 = arith.constant 0 : index
    %22 = vector.load %arg6[%c0_12, %c0_13, %c0_14] : memref<1x1x256xi32, #tpu.memory_space<vmem>>, vector<1x1x256xi32>
    %23 = vector.shape_cast %22 : vector<1x1x256xi32> to vector<1x256xi32>
    %24 = vector.shape_cast %21 : vector<1x256xi32> to vector<1x1x256xi32>
    tpu.vector_store %arg6[%c0_12, %c0_13, %c0_14], %24 {strides = array<i32>} : memref<1x1x256xi32, #tpu.memory_space<vmem>>, vector<1x1x256xi32>,
    return
  }
  func.func @transform_0(%arg0: i32, %arg1: i32) -> (i32, i32, i32) {
    %c0_i32 = arith.constant 0 : i32
    %c0_i32_0 = arith.constant 0 : i32
    return %arg0, %c0_i32, %arg1 : i32, i32, i32
  }
  func.func @transform_1(%arg0: i32, %arg1: i32) -> (i32, i32) {
    %c0_i32 = arith.constant 0 : i32
    %c0_i32_0 = arith.constant 0 : i32
    %c0_i32_1 = arith.constant 0 : i32
    return %c0_i32, %c0_i32_0 : i32, i32
  }
  func.func @transform_2(%arg0: i32, %arg1: i32) -> (i32, i32, i32) {
    %c0_i32 = arith.constant 0 : i32
    %c0_i32_0 = arith.constant 0 : i32
    %c0_i32_1 = arith.constant 0 : i32
    %c0_i32_2 = arith.constant 0 : i32
    return %c0_i32, %c0_i32_0, %c0_i32_1 : i32, i32, i32
  }
  func.func @transform_3(%arg0: i32, %arg1: i32) -> (i32, i32, i32) {
    %c0_i32 = arith.constant 0 : i32
    %c0_i32_0 = arith.constant 0 : i32
    return %arg0, %c0_i32, %arg1 : i32, i32, i32
  }
  func.func @transform_4(%arg0: i32, %arg1: i32) -> (i32, i32, i32) {
    %c0_i32 = arith.constant 0 : i32
    %c0_i32_0 = arith.constant 0 : i32
    return %arg0, %c0_i32, %arg1 : i32, i32, i32
  }
}

</mosaic_0001>

<llo_original>
// kernel: squeeze.1
$region0: #{squeeze.1}
  %s0 = inlined_call_operand.vmem [shape: s32[2,256], index: 0, kind: input, shape index: {}]
  %s1 = inlined_call_operand.hbm [shape: s32[2,1,16,16], index: 1, kind: output, shape index: {}]
  $region1: #{squeeze.1} parent=0
    #allocation0 [shape = 'u8[16384]{0}', space=vmem, size = 0x4000, scoped, tag = 'operand span for operand 1']
    #allocation1 [shape = 's32[1]{0}', space=sflag, size = 0x4, scoped, tag = 'scoped memory for squeeze.1']
    #allocation2 [shape = 'u8[8192]{0}', space=vmem, size = 0x2000, scoped, tag = 'scoped mem for input reshape']
    %2 = vsyncpa [#allocation1], 0
    %s4 = sshllo.u32 0, 2
    %s5 = scalar_lea.vmem %s0, 2
    %v6 = vld [vmem:[%s5] sm:%s4]
    %s7 = scalar_lea.vmem [#allocation2], 8
    %8 = vst [vmem:[%s7] sm:%s4] %v6
    %v9 = vld [vmem:[%s0] sm:%s4]
    %10 = vst [vmem:[#allocation2] sm:%s4] %v9
    %v11 = vld [vmem:[#allocation2] sm:$0x3]
    %vm12 = vcmask 130048
    %13 = vst.msk [vmem:[#allocation0] ss:$16 sm:$0x3] %vm12, %v11
    %s14 = scalar_lea.vmem [#allocation2], 8
    %v15 = vld [vmem:[%s14] sm:$0x3]
    %vm16 = vcmask 130048
    %s17 = scalar_lea.vmem [#allocation0], 8
    %18 = vst.msk [vmem:[%s17] ss:$16 sm:$0x3] %vm16, %v15
    %v19 = vld.sshfl [vmem:[#allocation2] sm:$0xff pattern:$0x99999180]
    %20 = vrot.lane.b32.xlu0 %v19, 112
    %v21 = vpop.permute.xlu0 %20
    %vm22 = vcmask 130048
    %s23 = scalar_lea.vmem [#allocation0], 1
    %24 = vst.msk [vmem:[%s23] ss:$8 sm:$0xf] %vm22, %v21
    %v25 = vld.sshfl [vmem:[#allocation2] sm:$0xff pattern:$0x99999180]
    %26 = vrot.lane.b32.xlu0 %v25, 96
    %v27 = vpop.permute.xlu0 %26
    %vm28 = vcmask 130048
    %s29 = scalar_lea.vmem [#allocation0], 2
    %30 = vst.msk [vmem:[%s29] ss:$8 sm:$0xf] %vm28, %v27
    %v31 = vld.sshfl [vmem:[#allocation2] sm:$0xff pattern:$0x99999180]
    %32 = vrot.lane.b32.xlu0 %v31, 80
    %v33 = vpop.permute.xlu0 %32
    %vm34 = vcmask 130048
    %s35 = scalar_lea.vmem [#allocation0], 3
    %36 = vst.msk [vmem:[%s35] ss:$8 sm:$0xf] %vm34, %v33
    %v37 = vld.sshfl [vmem:[#allocation2] sm:$0xff pattern:$0x99999180]
    %38 = vrot.lane.b32.xlu0 %v37, 64
    %v39 = vpop.permute.xlu0 %38
    %vm40 = vcmask 130048
    %s41 = scalar_lea.vmem [#allocation0], 4
    %42 = vst.msk [vmem:[%s41] ss:$8 sm:$0xf] %vm40, %v39
    %v43 = vld.sshfl [vmem:[#allocation2] sm:$0xff pattern:$0x99999180]
    %44 = vrot.lane.b32.xlu0 %v43, 48
    %v45 = vpop.permute.xlu0 %44
    %vm46 = vcmask 130048
    %s47 = scalar_lea.vmem [#allocation0], 5
    %48 = vst.msk [vmem:[%s47] ss:$8 sm:$0xf] %vm46, %v45
    %v49 = vld.sshfl [vmem:[#allocation2] sm:$0xff pattern:$0x99999180]
    %50 = vrot.lane.b32.xlu0 %v49, 32
    %v51 = vpop.permute.xlu0 %50
    %vm52 = vcmask 130048
    %s53 = scalar_lea.vmem [#allocation0], 6
    %54 = vst.msk [vmem:[%s53] ss:$8 sm:$0xf] %vm52, %v51
    %v55 = vld.sshfl [vmem:[#allocation2] sm:$0xff pattern:$0x99999180]
    %56 = vrot.lane.b32.xlu0 %v55, 16
    %v57 = vpop.permute.xlu0 %56
    %vm58 = vcmask 130048
    %s59 = scalar_lea.vmem [#allocation0], 7
    %60 = vst.msk [vmem:[%s59] ss:$8 sm:$0xf] %vm58, %v57
    %s62 = ssub.s32 512, 512
    %63 = vsyncadd [#allocation1], %s62
    %s65 = sshll.u32 [#allocation0], 4
    %s66 = int_to_ptr.vmem [resolvable:$true] %s65
    %68 = dma.vmem_to_hbm [thread:$0]  %s66, 512, %s1, [#allocation1]
    %69 = dma.done [#allocation1], 512
    %70 = vsyncpa [#allocation1], 1

// kernel: nearest_embed_forward.1
$region0: #{nearest_embed_forward.1}
  #allocation0 [shape = 'u32[]', space=smem, size = 0x4, offset = 0x4, fixed_abs, tag = 'smem constant byte address 0x4 - core index']
  #allocation1 [shape = 'u32[144,128]{1,0:T(1,128)}', space=vmem, size = 0x12000, scoped, tag = 'internal scratch']
  %s0 = inlined_call_operand.hbm [shape: f32[2,4,256], index: 0, kind: input, shape index: {}]
  %s1 = inlined_call_operand.hbm [shape: f32[4,8], index: 1, kind: input, shape index: {}]
  %s2 = inlined_call_operand.hbm [shape: f32[1,1,8], index: 2, kind: input, shape index: {}]
  %s3 = inlined_call_operand.hbm [shape: f32[2,4,256], index: 3, kind: output, shape index: {0}]
  %s4 = inlined_call_operand.hbm [shape: s32[2,1,256], index: 4, kind: output, shape index: {1}]
  %5 = xla_tuple %s3, %s4
  %s6 = sld [smem:[#allocation0]]
  $region65: #{nearest_embed_forward.1} parent=0
    _
  %s8 = ssub.s32 1, %s6
  %s9 = scalar_select 0, %s8, %s6
  $region1: #{nearest_embed_forward.1} parent=0
    #allocation2 [shape = 'u8[8192]{0}', space=vmem, size = 0x2000, scoped, tag = 'input window, operand 0']
    #allocation3 [shape = 's32[2]{0}', space=sflag, size = 0x8, scoped, tag = 'scoped memory for nearest_embed_forward.1']
    #allocation4 [shape = 's32[2]{0}', space=sflag, size = 0x8, scoped, tag = 'scoped memory for nearest_embed_forward.1']
    #allocation5 [shape = 'u8[2048]{0}', space=vmem, size = 0x800, scoped, tag = 'input window, operand 1, single buffered']
    #allocation6 [shape = 's32[1]{0}', space=sflag, size = 0x4, scoped, tag = 'scoped memory for nearest_embed_forward.1']
    #allocation7 [shape = 'u8[512]{0}', space=vmem, size = 0x400, scoped, tag = 'input window, operand 2, single buffered']
    #allocation8 [shape = 'u8[8192]{0}', space=vmem, size = 0x2000, scoped, tag = 'output window, operand 0']
    #allocation9 [shape = 'u8[2048]{0}', space=vmem, size = 0x800, scoped, tag = 'output window, operand 1']
    #allocation10 [shape = 's32[2]{0}', space=sflag, size = 0x8, scoped, tag = 'scoped memory for nearest_embed_forward.1']
    %10 = vsyncpa [#allocation3], 0
    %s11 = scalar_lea.sflag [#allocation3], 1
    %12 = vsyncpa %s11, 0
    %13 = vsyncpa [#allocation6], 0
    %14 = vsyncpa [#allocation4], 0
    %s15 = scalar_lea.sflag [#allocation4], 1
    %16 = vsyncpa %s15, 0
    %17 = vsyncpa [#allocation10], 0
    %s18 = scalar_lea.sflag [#allocation10], 1
    %19 = vsyncpa %s18, 0
    loop: start=0, step=1, limit=4
    $region2: #{nearest_embed_forward.1} parent=1 // loop_pre_header
      _
    $region3: #{nearest_embed_forward.1} parent=1 // loop_header
      %s21 = sphi 0, %s25
      %p22 = scmp.ge.s32.totalorder %s21, 4
      %s28 = sphi 0, %s40
      %s29 = sphi 0, %s36
      %s30 = sphi 0, %s28
      %s31 = sphi 0, %s29
      %s32 = sphi 0, %s30
      %s33 = sphi 0, %s31
      %s45 = sphi 0, %s47
      %s48 = sphi 0, %s45
      %s49 = sphi 0, %s48
      %s65 = sphi 0, %s49
      %s69 = sphi 0, %s69
      %s71 = sphi 0, %s69
      %s72 = sphi 0, %s71
      %s86 = sphi 0, %s72
      %s90 = sphi 0, %s90
      %s92 = sphi 0, %s90
      %s93 = sphi 0, %s92
      %s107 = sphi 0, %s93
      %s115 = sphi 0, %s117
      %s118 = sphi 0, %s115
      %s119 = sphi 0, %s118
      %s135 = sphi 0, %s119
      %s143 = sphi 0, %s145
      %s146 = sphi 0, %s143
      %s147 = sphi 0, %s146
      %s163 = sphi 0, %s147
    $region4: #{nearest_embed_forward.1} parent=1 // loop_header_branch
      %24 = sbr.rel (%p22) target = $region8
    $region5: #{nearest_embed_forward.1} parent=1 // loop_body
      %s26 = ssub.s32 %s21, 1
      %s27 = ssub.s32 %s21, 2
      %s34 = sadd.s32 1, %s29
      %p35 = scmp.ge.s32.totalorder %s34, 1
      %s36 = scalar_select %p35, 0, %s34
      %s37 = sadd.s32 1, %s28
      %s38 = scalar_select %p35, %s37, %s28
      %p39 = scmp.ge.s32.totalorder %s38, 2
      %s40 = scalar_select %p39, 0, %s38
      %s41 = ssub.s32 %s28, %s40
      %s42 = ssub.s32 %s29, %s36
      %s43 = sor.u32 %s41, %s42
      %p44 = scmp.eq.s32.totalorder %s43, 0
      %s46 = sadd.s32 %s45, 1
      %s47 = scalar_select %p44, %s45, %s46
      %p50 = pneg %p44
      %p51 = scmp.eq.s32.totalorder %s21, 1
      %p52 = por %p50, %p51
      %p53 = scmp.ne.s32.totalorder %s45, %s48
      %p54 = scmp.eq.s32.totalorder %s21, 0
      %p55 = por %p53, %p54
      %p56 = scmp.ne.s32.totalorder %s45, %s48
      %p57 = scmp.eq.s32.totalorder %s26, 1
      %p58 = por %p56, %p57
      %p59 = scmp.ne.s32.totalorder %s48, %s49
      %p60 = scmp.eq.s32.totalorder %s26, 0
      %p61 = por %p59, %p60
      %p62 = scmp.ne.s32.totalorder %s48, %s49
      %p63 = scmp.eq.s32.totalorder %s27, 1
      %p64 = por %p62, %p63
      %p66 = scmp.ne.s32.totalorder %s49, %s65
      %p67 = scmp.eq.s32.totalorder %s27, 0
      %p68 = por %p66, %p67
      %s70 = sadd.s32 %s69, 1
      %p73 = scmp.eq.s32.totalorder %s21, 1
      %p74 = scmp.ne.s32.totalorder %s69, %s71
      %p75 = scmp.eq.s32.totalorder %s21, 0
      %p76 = por %p74, %p75
      %p77 = scmp.ne.s32.totalorder %s69, %s71
      %p78 = scmp.eq.s32.totalorder %s26, 1
      %p79 = por %p77, %p78
      %p80 = scmp.ne.s32.totalorder %s71, %s72
      %p81 = scmp.eq.s32.totalorder %s26, 0
      %p82 = por %p80, %p81
      %p83 = scmp.ne.s32.totalorder %s71, %s72
      %p84 = scmp.eq.s32.totalorder %s27, 1
      %p85 = por %p83, %p84
      %p87 = scmp.ne.s32.totalorder %s72, %s86
      %p88 = scmp.eq.s32.totalorder %s27, 0
      %p89 = por %p87, %p88
      %s91 = sadd.s32 %s90, 1
      %p94 = scmp.eq.s32.totalorder %s21, 1
      %p95 = scmp.ne.s32.totalorder %s90, %s92
      %p96 = scmp.eq.s32.totalorder %s21, 0
      %p97 = por %p95, %p96
      %p98 = scmp.ne.s32.totalorder %s90, %s92
      %p99 = scmp.eq.s32.totalorder %s26, 1
      %p100 = por %p98, %p99
      %p101 = scmp.ne.s32.totalorder %s92, %s93
      %p102 = scmp.eq.s32.totalorder %s26, 0
      %p103 = por %p101, %p102
      %p104 = scmp.ne.s32.totalorder %s92, %s93
      %p105 = scmp.eq.s32.totalorder %s27, 1
      %p106 = por %p104, %p105
      %p108 = scmp.ne.s32.totalorder %s93, %s107
      %p109 = scmp.eq.s32.totalorder %s27, 0
      %p110 = por %p108, %p109
      %s111 = ssub.s32 %s28, %s40
      %s112 = ssub.s32 %s29, %s36
      %s113 = sor.u32 %s111, %s112
      %p114 = scmp.eq.s32.totalorder %s113, 0
      %s116 = sadd.s32 %s115, 1
      %s117 = scalar_select %p114, %s115, %s116
      %p120 = pneg %p114
      %p121 = scmp.eq.s32.totalorder %s21, 1
      %p122 = por %p120, %p121
      %p123 = scmp.ne.s32.totalorder %s115, %s118
      %p124 = scmp.eq.s32.totalorder %s21, 0
      %p125 = por %p123, %p124
      %p126 = scmp.ne.s32.totalorder %s115, %s118
      %p127 = scmp.eq.s32.totalorder %s26, 1
      %p128 = por %p126, %p127
      %p129 = scmp.ne.s32.totalorder %s118, %s119
      %p130 = scmp.eq.s32.totalorder %s26, 0
      %p131 = por %p129, %p130
      %p132 = scmp.ne.s32.totalorder %s118, %s119
      %p133 = scmp.eq.s32.totalorder %s27, 1
      %p134 = por %p132, %p133
      %p136 = scmp.ne.s32.totalorder %s119, %s135
      %p137 = scmp.eq.s32.totalorder %s27, 0
      %p138 = por %p136, %p137
      %s139 = ssub.s32 %s28, %s40
      %s140 = ssub.s32 %s29, %s36
      %s141 = sor.u32 %s139, %s140
      %p142 = scmp.eq.s32.totalorder %s141, 0
      %s144 = sadd.s32 %s143, 1
      %s145 = scalar_select %p142, %s143, %s144
      %p148 = pneg %p142
      %p149 = scmp.eq.s32.totalorder %s21, 1
      %p150 = por %p148, %p149
      %p151 = scmp.ne.s32.totalorder %s143, %s146
      %p152 = scmp.eq.s32.totalorder %s21, 0
      %p153 = por %p151, %p152
      %p154 = scmp.ne.s32.totalorder %s143, %s146
      %p155 = scmp.eq.s32.totalorder %s26, 1
      %p156 = por %p154, %p155
      %p157 = scmp.ne.s32.totalorder %s146, %s147
      %p158 = scmp.eq.s32.totalorder %s26, 0
      %p159 = por %p157, %p158
      %p160 = scmp.ne.s32.totalorder %s146, %s147
      %p161 = scmp.eq.s32.totalorder %s27, 1
      %p162 = por %p160, %p161
      %p164 = scmp.ne.s32.totalorder %s147, %s163
      %p165 = scmp.eq.s32.totalorder %s27, 0
      %p166 = por %p164, %p165
      %p167 = scmp.le.s32.totalorder 1, %s21
      %p168 = scmp.lt.s32.totalorder %s21, 3
      %p169 = pnand %p167, %p168
      %p170 = pneg %p169
      // Predicated region
      $region9: #{nearest_embed_forward.1} parent=5 // pred_check
        _
      $region10: #{nearest_embed_forward.1} parent=5 // pred_check_branch
        %172 = sbr.rel (%p169) target = $region12
      $region11: #{nearest_embed_forward.1} parent=5 // pred_region
        %s173 = ssub.s32 %s21, 1
        // Predicated region
        $region13: #{nearest_embed_forward.1} parent=11 // pred_check
          %p174 = pneg %p82
        $region14: #{nearest_embed_forward.1} parent=11 // pred_check_branch
          %176 = sbr.rel (%p174) target = $region16
        $region15: #{nearest_embed_forward.1} parent=11 // pred_region
          %s178 = ssub.s32 64, 64
          %179 = vsyncadd [#allocation6], %s178
          %s181 = sshll.u32 [#allocation5], 4
          %s182 = int_to_ptr.vmem [resolvable:$true] %s181
          %184 = dma.hbm_to_vmem [thread:$0]  %s1, 64, %s182, [#allocation6]
        $region16: #{nearest_embed_forward.1} parent=11 // pred_fallthru
          _
        // Predicated region
        $region17: #{nearest_embed_forward.1} parent=11 // pred_check
          %p185 = pneg %p103
        $region18: #{nearest_embed_forward.1} parent=11 // pred_check_branch
          %187 = sbr.rel (%p185) target = $region20
        $region19: #{nearest_embed_forward.1} parent=11 // pred_region
          %s189 = ssub.s32 16, 16
          %190 = vsyncadd [#allocation6], %s189
          %s192 = sshll.u32 [#allocation7], 4
          %s193 = int_to_ptr.vmem [resolvable:$true] %s192
          %195 = dma.hbm_to_vmem [thread:$0]  %s2, 16, %s193, [#allocation6]
        $region20: #{nearest_embed_forward.1} parent=11 // pred_fallthru
          _
      $region12: #{nearest_embed_forward.1} parent=5 // pred_fallthru
        _
      %p196 = scmp.lt.s32.totalorder %s21, 2
      // Predicated region
      $region21: #{nearest_embed_forward.1} parent=5 // pred_check
        %p197 = pneg %p196
      $region22: #{nearest_embed_forward.1} parent=5 // pred_check_branch
        %199 = sbr.rel (%p197) target = $region24
      $region23: #{nearest_embed_forward.1} parent=5 // pred_region
        // Predicated region
        $region25: #{nearest_embed_forward.1} parent=23 // pred_check
          %p200 = pneg %p55
        $region26: #{nearest_embed_forward.1} parent=23 // pred_check_branch
          %202 = sbr.rel (%p200) target = $region28
        $region27: #{nearest_embed_forward.1} parent=23 // pred_region
          %s203 = sand.u32 %s45, 1
          %s204 = scalar_lea.sflag [#allocation3], %s203
          %s205 = sand.u32 %s45, 1
          %s206 = smul.addr %s205, 8
          %s207 = scalar_lea.vmem [#allocation2], %s206
          %s208 = smul.u32 2, %s29
          %s210 = ssub.s32 128, 128
          %211 = vsyncadd %s204, %s210
          %s212 = smul.addr %s28, 2
          %s213 = sadd.s32 %s208, %s212
          %s214 = smul.addr %s213, 64
          %s215 = scalar_lea.hbm %s0, %s214
          %s217 = sshll.u32 %s207, 4
          %s218 = int_to_ptr.vmem [resolvable:$true] %s217
          %220 = dma.hbm_to_vmem [thread:$0]  %s215, 128, %s218, %s204
        $region28: #{nearest_embed_forward.1} parent=23 // pred_fallthru
          _
      $region24: #{nearest_embed_forward.1} parent=5 // pred_fallthru
        _
      %p221 = scmp.le.s32.totalorder 1, %s21
      %p222 = scmp.lt.s32.totalorder %s21, 3
      %p223 = pnand %p221, %p222
      %p224 = pneg %p223
      // Predicated region
      $region29: #{nearest_embed_forward.1} parent=5 // pred_check
        _
      $region30: #{nearest_embed_forward.1} parent=5 // pred_check_branch
        %226 = sbr.rel (%p223) target = $region32
      $region31: #{nearest_embed_forward.1} parent=5 // pred_region
        %s227 = ssub.s32 %s21, 1
        %s228 = sand.u32 %s48, 1
        %s229 = scalar_lea.sflag [#allocation3], %s228
        %s230 = sand.u32 %s48, 1
        %s231 = smul.addr %s230, 8
        %s232 = scalar_lea.vmem [#allocation2], %s231
        // Predicated region
        $region33: #{nearest_embed_forward.1} parent=31 // pred_check
          %p233 = pneg %p61
        $region34: #{nearest_embed_forward.1} parent=31 // pred_check_branch
          %235 = sbr.rel (%p233) target = $region36
        $region35: #{nearest_embed_forward.1} parent=31 // pred_region
          %236 = dma.done %s229, 128
        $region36: #{nearest_embed_forward.1} parent=31 // pred_fallthru
          _
        // Predicated region
        $region37: #{nearest_embed_forward.1} parent=31 // pred_check
          %p237 = pneg %p82
        $region38: #{nearest_embed_forward.1} parent=31 // pred_check_branch
          %239 = sbr.rel (%p237) target = $region40
        $region39: #{nearest_embed_forward.1} parent=31 // pred_region
          %240 = dma.done [#allocation6], 64
        $region40: #{nearest_embed_forward.1} parent=31 // pred_fallthru
          _
        // Predicated region
        $region41: #{nearest_embed_forward.1} parent=31 // pred_check
          %p241 = pneg %p103
        $region42: #{nearest_embed_forward.1} parent=31 // pred_check_branch
          %243 = sbr.rel (%p241) target = $region44
        $region43: #{nearest_embed_forward.1} parent=31 // pred_region
          %244 = dma.done [#allocation6], 16
        $region44: #{nearest_embed_forward.1} parent=31 // pred_fallthru
          _
        %s245 = sand.u32 %s48, 1
        %s246 = scalar_lea.sflag [#allocation3], %s245
        %s247 = sand.u32 %s48, 1
        %s248 = smul.addr %s247, 8
        %s249 = scalar_lea.vmem [#allocation2], %s248
        %p250 = pneg %p61
        %p251 = pneg %p58
        %p252 = pneg %p82
        %p253 = pneg %p79
        %p254 = pneg %p103
        %p255 = pneg %p100
        %p256 = pneg %p131
        %p257 = pneg %p128
        %s258 = sand.u32 %s118, 1
        %s259 = scalar_lea.sflag [#allocation4], %s258
        %s260 = sand.u32 %s118, 1
        %s261 = smul.addr %s260, 8
        %s262 = scalar_lea.vmem [#allocation8], %s261
        %p263 = pneg %p159
        %p264 = pneg %p156
        %s265 = sand.u32 %s146, 1
        %s266 = scalar_lea.sflag [#allocation10], %s265
        %s267 = sand.u32 %s146, 1
        %s268 = smul.addr %s267, 2
        %s269 = scalar_lea.vmem [#allocation9], %s268
        %s270 = smul.u32 2, %s31
        %s271 = smul.u32 2, %s31
        %s272 = smul.u32 2, %s31
        %v273 = vld [vmem:[%s232] sm:$0xff]
        %v274 = vld [vmem:[#allocation5] sm:$0xf]
        %v275 = vld [vmem:[#allocation7] sm:$0x1]
        %v277 = vcombine.high %v273, %v273
        %279 = vxpose.xlu0.b32.start [1/16] %v273, 128
        %280 = vxpose.xlu0.b32.cont [2/16] 0.0, 128
        %281 = vxpose.xlu0.b32.cont [3/16] 0.0, 128
        %282 = vxpose.xlu0.b32.cont [4/16] 0.0, 128
        %283 = vxpose.xlu0.b32.cont [5/16] 0.0, 128
        %284 = vxpose.xlu0.b32.cont [6/16] 0.0, 128
        %285 = vxpose.xlu0.b32.cont [7/16] 0.0, 128
        %286 = vxpose.xlu0.b32.cont [8/16] 0.0, 128
        %287 = vxpose.xlu0.b32.cont [9/16] 0.0, 128
        %288 = vxpose.xlu0.b32.cont [10/16] 0.0, 128
        %289 = vxpose.xlu0.b32.cont [11/16] 0.0, 128
        %290 = vxpose.xlu0.b32.cont [12/16] 0.0, 128
        %291 = vxpose.xlu0.b32.cont [13/16] 0.0, 128
        %292 = vxpose.xlu0.b32.cont [14/16] 0.0, 128
        %293 = vxpose.xlu0.b32.cont [15/16] 0.0, 128
        %294 = vxpose.xlu0.b32.end [16/16] 0.0, 128
        %v295 = vpop.trf.xlu0
        %v296 = vpop.trf.xlu0
        %v297 = vpop.trf.xlu0
        %v298 = vpop.trf.xlu0
        %v299 = vpop.trf.xlu0
        %v300 = vpop.trf.xlu0
        %v301 = vpop.trf.xlu0
        %v302 = vpop.trf.xlu0
        %v303 = vpop.trf.xlu0
        %v304 = vpop.trf.xlu0
        %v305 = vpop.trf.xlu0
        %v306 = vpop.trf.xlu0
        %v307 = vpop.trf.xlu0
        %v308 = vpop.trf.xlu0
        %v309 = vpop.trf.xlu0
        %v310 = vpop.trf.xlu0
        %311 = vxpose.xlu0.b32.start [1/16] %v277, 128
        %312 = vxpose.xlu0.b32.cont [2/16] 0.0, 128
        %313 = vxpose.xlu0.b32.cont [3/16] 0.0, 128
        %314 = vxpose.xlu0.b32.cont [4/16] 0.0, 128
        %315 = vxpose.xlu0.b32.cont [5/16] 0.0, 128
        %316 = vxpose.xlu0.b32.cont [6/16] 0.0, 128
        %317 = vxpose.xlu0.b32.cont [7/16] 0.0, 128
        %318 = vxpose.xlu0.b32.cont [8/16] 0.0, 128
        %319 = vxpose.xlu0.b32.cont [9/16] 0.0, 128
        %320 = vxpose.xlu0.b32.cont [10/16] 0.0, 128
        %321 = vxpose.xlu0.b32.cont [11/16] 0.0, 128
        %322 = vxpose.xlu0.b32.cont [12/16] 0.0, 128
        %323 = vxpose.xlu0.b32.cont [13/16] 0.0, 128
        %324 = vxpose.xlu0.b32.cont [14/16] 0.0, 128
        %325 = vxpose.xlu0.b32.cont [15/16] 0.0, 128
        %326 = vxpose.xlu0.b32.end [16/16] 0.0, 128
        %v327 = vpop.trf.xlu0
        %v328 = vpop.trf.xlu0
        %v329 = vpop.trf.xlu0
        %v330 = vpop.trf.xlu0
        %v331 = vpop.trf.xlu0
        %v332 = vpop.trf.xlu0
        %v333 = vpop.trf.xlu0
        %v334 = vpop.trf.xlu0
        %v335 = vpop.trf.xlu0
        %v336 = vpop.trf.xlu0
        %v337 = vpop.trf.xlu0
        %v338 = vpop.trf.xlu0
        %v339 = vpop.trf.xlu0
        %v340 = vpop.trf.xlu0
        %v341 = vpop.trf.xlu0
        %v342 = vpop.trf.xlu0
        %vm343 = vcmask 31744
        %v345 = vsel %vm343, %v295, 0
        %v348 = vsel %vm343, %v296, 0
        %v351 = vsel %vm343, %v297, 0
        %v354 = vsel %vm343, %v298, 0
        %v357 = vsel %vm343, %v299, 0
        %v360 = vsel %vm343, %v300, 0
        %v363 = vsel %vm343, %v301, 0
        %v366 = vsel %vm343, %v302, 0
        %v369 = vsel %vm343, %v303, 0
        %v372 = vsel %vm343, %v304, 0
        %v375 = vsel %vm343, %v305, 0
        %v378 = vsel %vm343, %v306, 0
        %v381 = vsel %vm343, %v307, 0
        %v384 = vsel %vm343, %v308, 0
        %v387 = vsel %vm343, %v309, 0
        %v390 = vsel %vm343, %v310, 0
        %v393 = vsel %vm343, %v327, 0
        %v396 = vsel %vm343, %v328, 0
        %v399 = vsel %vm343, %v329, 0
        %v402 = vsel %vm343, %v330, 0
        %v405 = vsel %vm343, %v331, 0
        %v408 = vsel %vm343, %v332, 0
        %v411 = vsel %vm343, %v333, 0
        %v414 = vsel %vm343, %v334, 0
        %v417 = vsel %vm343, %v335, 0
        %v420 = vsel %vm343, %v336, 0
        %v423 = vsel %vm343, %v337, 0
        %v426 = vsel %vm343, %v338, 0
        %v429 = vsel %vm343, %v339, 0
        %v432 = vsel %vm343, %v340, 0
        %v435 = vsel %vm343, %v341, 0
        %v438 = vsel %vm343, %v342, 0
        %vm440 = vcmask 1043456
        %v442 = vsel %vm440, %v274, 0
        %444 = vmatprep.subr.mxu0 0.0
        %445 = vmatpush1.msra.mxu0 %v442
        %446 = vmatprep.subr.mxu0 0.0
        %447 = vmatpush1.msra.mxu0 0.0
        %448 = vmatprep.subr.mxu0 0.0
        %449 = vmatpush1.msra.mxu0 0.0
        %450 = vmatprep.subr.mxu0 0.0
        %451 = vmatpush1.msra.mxu0 0.0
        %452 = vmatprep.subr.mxu0 0.0
        %453 = vmatpush1.msra.mxu0 0.0
        %454 = vmatprep.subr.mxu0 0.0
        %455 = vmatpush1.msra.mxu0 0.0
        %456 = vmatprep.subr.mxu0 0.0
        %457 = vmatpush1.msra.mxu0 0.0
        %458 = vmatprep.subr.mxu0 0.0
        %459 = vmatpush1.msra.mxu0 0.0
        %460 = vmatprep.subr.mxu0 0.0
        %461 = vmatpush1.msra.mxu0 0.0
        %462 = vmatprep.subr.mxu0 0.0
        %463 = vmatpush1.msra.mxu0 0.0
        %464 = vmatprep.subr.mxu0 0.0
        %465 = vmatpush1.msra.mxu0 0.0
        %466 = vmatprep.subr.mxu0 0.0
        %467 = vmatpush1.msra.mxu0 0.0
        %468 = vmatprep.subr.mxu0 0.0
        %469 = vmatpush1.msra.mxu0 0.0
        %470 = vmatprep.subr.mxu0 0.0
        %471 = vmatpush1.msra.mxu0 0.0
        %472 = vmatprep.subr.mxu0 0.0
        %473 = vmatpush1.msra.mxu0 0.0
        %474 = vmatprep.subr.mxu0 0.0
        %475 = vmatpush1.msra.mxu0 0.0
        %476 = vmatprep.subr.mxu0 0.0
        %477 = vmatpush1.msra.mxu0 0.0
        %478 = vmatprep.subr.mxu0 0.0
        %479 = vmatpush1.msra.mxu0 0.0
        %480 = vmatprep.subr.mxu0 0.0
        %481 = vmatpush1.msra.mxu0 0.0
        %482 = vmatprep.subr.mxu0 0.0
        %483 = vmatpush1.msra.mxu0 0.0
        %484 = vmatprep.subr.mxu0 0.0
        %485 = vmatpush1.msra.mxu0 0.0
        %486 = vmatprep.subr.mxu0 0.0
        %487 = vmatpush1.msra.mxu0 0.0
        %488 = vmatprep.subr.mxu0 0.0
        %489 = vmatpush1.msra.mxu0 0.0
        %490 = vmatprep.subr.mxu0 0.0
        %491 = vmatpush1.msra.mxu0 0.0
        %492 = vmatprep.subr.mxu0 0.0
        %493 = vmatpush1.msra.mxu0 0.0
        %494 = vmatprep.subr.mxu0 0.0
        %495 = vmatpush1.msra.mxu0 0.0
        %496 = vmatprep.subr.mxu0 0.0
        %497 = vmatpush1.msra.mxu0 0.0
        %498 = vmatprep.subr.mxu0 0.0
        %499 = vmatpush1.msra.mxu0 0.0
        %500 = vmatprep.subr.mxu0 0.0
        %501 = vmatpush1.msra.mxu0 0.0
        %502 = vmatprep.subr.mxu0 0.0
        %503 = vmatpush1.msra.mxu0 0.0
        %504 = vmatprep.subr.mxu0 0.0
        %505 = vmatpush1.msra.mxu0 0.0
        %506 = vmatprep.subr.mxu0 0.0
        %507 = vmatpush1.msra.mxu0 0.0
        %508 = vmatprep.mubr.f32.mxu0 0.0
        %509 = vmatmul.mubr.f32.gmra.mrb[0].mxu0 %v345
        %v510 = vpop.f32.mrb[0].mxu0
        %v511 = vadd.f32 0.0, %v510
        %v512 = vpop.f32.mrb[0].mxu0
        %513 = vmatprep.mubr.f32.mxu0 0.0
        %514 = vmatmul.mubr.f32.gmra.mrb[0].mxu0 %v348
        %v515 = vpop.f32.mrb[0].mxu0
        %v516 = vadd.f32 0.0, %v515
        %v517 = vpop.f32.mrb[0].mxu0
        %518 = vmatprep.mubr.f32.mxu0 0.0
        %519 = vmatmul.mubr.f32.gmra.mrb[0].mxu0 %v351
        %v520 = vpop.f32.mrb[0].mxu0
        %v521 = vadd.f32 0.0, %v520
        %v522 = vpop.f32.mrb[0].mxu0
        %523 = vmatprep.mubr.f32.mxu0 0.0
        %524 = vmatmul.mubr.f32.gmra.mrb[0].mxu0 %v354
        %v525 = vpop.f32.mrb[0].mxu0
        %v526 = vadd.f32 0.0, %v525
        %v527 = vpop.f32.mrb[0].mxu0
        %528 = vmatprep.mubr.f32.mxu0 0.0
        %529 = vmatmul.mubr.f32.gmra.mrb[0].mxu0 %v357
        %v530 = vpop.f32.mrb[0].mxu0
        %v531 = vadd.f32 0.0, %v530
        %v532 = vpop.f32.mrb[0].mxu0
        %533 = vmatprep.mubr.f32.mxu0 0.0
        %534 = vmatmul.mubr.f32.gmra.mrb[0].mxu0 %v360
        %v535 = vpop.f32.mrb[0].mxu0
        %v536 = vadd.f32 0.0, %v535
        %v537 = vpop.f32.mrb[0].mxu0
        %538 = vmatprep.mubr.f32.mxu0 0.0
        %539 = vmatmul.mubr.f32.gmra.mrb[0].mxu0 %v363
        %v540 = vpop.f32.mrb[0].mxu0
        %v541 = vadd.f32 0.0, %v540
        %v542 = vpop.f32.mrb[0].mxu0
        %543 = vmatprep.mubr.f32.mxu0 0.0
        %544 = vmatmul.mubr.f32.gmra.mrb[0].mxu0 %v366
        %v545 = vpop.f32.mrb[0].mxu0
        %v546 = vadd.f32 0.0, %v545
        %v547 = vpop.f32.mrb[0].mxu0
        %548 = vmatprep.mubr.f32.mxu0 0.0
        %549 = vmatmul.mubr.f32.gmra.mrb[0].mxu0 %v369
        %v550 = vpop.f32.mrb[0].mxu0
        %v551 = vadd.f32 0.0, %v550
        %v552 = vpop.f32.mrb[0].mxu0
        %553 = vmatprep.mubr.f32.mxu0 0.0
        %554 = vmatmul.mubr.f32.gmra.mrb[0].mxu0 %v372
        %v555 = vpop.f32.mrb[0].mxu0
        %v556 = vadd.f32 0.0, %v555
        %v557 = vpop.f32.mrb[0].mxu0
        %558 = vmatprep.mubr.f32.mxu0 0.0
        %559 = vmatmul.mubr.f32.gmra.mrb[0].mxu0 %v375
        %v560 = vpop.f32.mrb[0].mxu0
        %v561 = vadd.f32 0.0, %v560
        %v562 = vpop.f32.mrb[0].mxu0
        %563 = vmatprep.mubr.f32.mxu0 0.0
        %564 = vmatmul.mubr.f32.gmra.mrb[0].mxu0 %v378
        %v565 = vpop.f32.mrb[0].mxu0
        %v566 = vadd.f32 0.0, %v565
        %v567 = vpop.f32.mrb[0].mxu0
        %568 = vmatprep.mubr.f32.mxu0 0.0
        %569 = vmatmul.mubr.f32.gmra.mrb[0].mxu0 %v381
        %v570 = vpop.f32.mrb[0].mxu0
        %v571 = vadd.f32 0.0, %v570
        %v572 = vpop.f32.mrb[0].mxu0
        %573 = vmatprep.mubr.f32.mxu0 0.0
        %574 = vmatmul.mubr.f32.gmra.mrb[0].mxu0 %v384
        %v575 = vpop.f32.mrb[0].mxu0
        %v576 = vadd.f32 0.0, %v575
        %v577 = vpop.f32.mrb[0].mxu0
        %578 = vmatprep.mubr.f32.mxu0 0.0
        %579 = vmatmul.mubr.f32.gmra.mrb[0].mxu0 %v387
        %v580 = vpop.f32.mrb[0].mxu0
        %v581 = vadd.f32 0.0, %v580
        %v582 = vpop.f32.mrb[0].mxu0
        %583 = vmatprep.mubr.f32.mxu0 0.0
        %584 = vmatmul.mubr.f32.gmra.mrb[0].mxu0 %v390
        %v585 = vpop.f32.mrb[0].mxu0
        %v586 = vadd.f32 0.0, %v585
        %v587 = vpop.f32.mrb[0].mxu0
        %588 = vmatprep.mubr.f32.mxu0 0.0
        %589 = vmatmul.mubr.f32.gmra.mrb[0].mxu0 %v393
        %v590 = vpop.f32.mrb[0].mxu0
        %v591 = vadd.f32 0.0, %v590
        %v592 = vpop.f32.mrb[0].mxu0
        %593 = vmatprep.mubr.f32.mxu0 0.0
        %594 = vmatmul.mubr.f32.gmra.mrb[0].mxu0 %v396
        %v595 = vpop.f32.mrb[0].mxu0
        %v596 = vadd.f32 0.0, %v595
        %v597 = vpop.f32.mrb[0].mxu0
        %598 = vmatprep.mubr.f32.mxu0 0.0
        %599 = vmatmul.mubr.f32.gmra.mrb[0].mxu0 %v399
        %v600 = vpop.f32.mrb[0].mxu0
        %v601 = vadd.f32 0.0, %v600
        %v602 = vpop.f32.mrb[0].mxu0
        %603 = vmatprep.mubr.f32.mxu0 0.0
        %604 = vmatmul.mubr.f32.gmra.mrb[0].mxu0 %v402
        %v605 = vpop.f32.mrb[0].mxu0
        %v606 = vadd.f32 0.0, %v605
        %v607 = vpop.f32.mrb[0].mxu0
        %608 = vmatprep.mubr.f32.mxu0 0.0
        %609 = vmatmul.mubr.f32.gmra.mrb[0].mxu0 %v405
        %v610 = vpop.f32.mrb[0].mxu0
        %v611 = vadd.f32 0.0, %v610
        %v612 = vpop.f32.mrb[0].mxu0
        %613 = vmatprep.mubr.f32.mxu0 0.0
        %614 = vmatmul.mubr.f32.gmra.mrb[0].mxu0 %v408
        %v615 = vpop.f32.mrb[0].mxu0
        %v616 = vadd.f32 0.0, %v615
        %v617 = vpop.f32.mrb[0].mxu0
        %618 = vmatprep.mubr.f32.mxu0 0.0
        %619 = vmatmul.mubr.f32.gmra.mrb[0].mxu0 %v411
        %v620 = vpop.f32.mrb[0].mxu0
        %v621 = vadd.f32 0.0, %v620
        %v622 = vpop.f32.mrb[0].mxu0
        %623 = vmatprep.mubr.f32.mxu0 0.0
        %624 = vmatmul.mubr.f32.gmra.mrb[0].mxu0 %v414
        %v625 = vpop.f32.mrb[0].mxu0
        %v626 = vadd.f32 0.0, %v625
        %v627 = vpop.f32.mrb[0].mxu0
        %628 = vmatprep.mubr.f32.mxu0 0.0
        %629 = vmatmul.mubr.f32.gmra.mrb[0].mxu0 %v417
        %v630 = vpop.f32.mrb[0].mxu0
        %v631 = vadd.f32 0.0, %v630
        %v632 = vpop.f32.mrb[0].mxu0
        %633 = vmatprep.mubr.f32.mxu0 0.0
        %634 = vmatmul.mubr.f32.gmra.mrb[0].mxu0 %v420
        %v635 = vpop.f32.mrb[0].mxu0
        %v636 = vadd.f32 0.0, %v635
        %v637 = vpop.f32.mrb[0].mxu0
        %638 = vmatprep.mubr.f32.mxu0 0.0
        %639 = vmatmul.mubr.f32.gmra.mrb[0].mxu0 %v423
        %v640 = vpop.f32.mrb[0].mxu0
        %v641 = vadd.f32 0.0, %v640
        %v642 = vpop.f32.mrb[0].mxu0
        %643 = vmatprep.mubr.f32.mxu0 0.0
        %644 = vmatmul.mubr.f32.gmra.mrb[0].mxu0 %v426
        %v645 = vpop.f32.mrb[0].mxu0
        %v646 = vadd.f32 0.0, %v645
        %v647 = vpop.f32.mrb[0].mxu0
        %648 = vmatprep.mubr.f32.mxu0 0.0
        %649 = vmatmul.mubr.f32.gmra.mrb[0].mxu0 %v429
        %v650 = vpop.f32.mrb[0].mxu0
        %v651 = vadd.f32 0.0, %v650
        %v652 = vpop.f32.mrb[0].mxu0
        %653 = vmatprep.mubr.f32.mxu0 0.0
        %654 = vmatmul.mubr.f32.gmra.mrb[0].mxu0 %v432
        %v655 = vpop.f32.mrb[0].mxu0
        %v656 = vadd.f32 0.0, %v655
        %v657 = vpop.f32.mrb[0].mxu0
        %658 = vmatprep.mubr.f32.mxu0 0.0
        %659 = vmatmul.mubr.f32.gmra.mrb[0].mxu0 %v435
        %v660 = vpop.f32.mrb[0].mxu0
        %v661 = vadd.f32 0.0, %v660
        %v662 = vpop.f32.mrb[0].mxu0
        %663 = vmatprep.mubr.f32.mxu0 0.0
        %664 = vmatmul.mubr.f32.gmra.mrb[0].mxu0 %v438
        %v665 = vpop.f32.mrb[0].mxu0
        %v666 = vadd.f32 0.0, %v665
        %v667 = vpop.f32.mrb[0].mxu0
        %668 = vdwg.mxu0
        %v669 = vmul.f32 %v511, 2.0
        %v670 = vmul.f32 %v516, 2.0
        %v671 = vmul.f32 %v521, 2.0
        %v672 = vmul.f32 %v526, 2.0
        %v673 = vmul.f32 %v531, 2.0
        %v674 = vmul.f32 %v536, 2.0
        %v675 = vmul.f32 %v541, 2.0
        %v676 = vmul.f32 %v546, 2.0
        %v677 = vmul.f32 %v551, 2.0
        %v678 = vmul.f32 %v556, 2.0
        %v679 = vmul.f32 %v561, 2.0
        %v680 = vmul.f32 %v566, 2.0
        %v681 = vmul.f32 %v571, 2.0
        %v682 = vmul.f32 %v576, 2.0
        %v683 = vmul.f32 %v581, 2.0
        %v684 = vmul.f32 %v586, 2.0
        %v685 = vmul.f32 %v591, 2.0
        %v686 = vmul.f32 %v596, 2.0
        %v687 = vmul.f32 %v601, 2.0
        %v688 = vmul.f32 %v606, 2.0
        %v689 = vmul.f32 %v611, 2.0
        %v690 = vmul.f32 %v616, 2.0
        %v691 = vmul.f32 %v621, 2.0
        %v692 = vmul.f32 %v626, 2.0
        %v693 = vmul.f32 %v631, 2.0
        %v694 = vmul.f32 %v636, 2.0
        %v695 = vmul.f32 %v641, 2.0
        %v696 = vmul.f32 %v646, 2.0
        %v697 = vmul.f32 %v651, 2.0
        %v698 = vmul.f32 %v656, 2.0
        %v699 = vmul.f32 %v661, 2.0
        %v700 = vmul.f32 %v666, 2.0
        %v702 = vlaneseq
        %v703 = vshrl.u32 %v702, 7
        %v704 = vsub.s32 0, %v703
        %v705 = vrot.slane %v275, %v704
        %v707 = vsub.f32 %v705, %v669
        %v708 = vsub.f32 %v705, %v670
        %v709 = vsub.f32 %v705, %v671
        %v710 = vsub.f32 %v705, %v672
        %v711 = vsub.f32 %v705, %v673
        %v712 = vsub.f32 %v705, %v674
        %v713 = vsub.f32 %v705, %v675
        %v714 = vsub.f32 %v705, %v676
        %v715 = vsub.f32 %v705, %v677
        %v716 = vsub.f32 %v705, %v678
        %v717 = vsub.f32 %v705, %v679
        %v718 = vsub.f32 %v705, %v680
        %v719 = vsub.f32 %v705, %v681
        %v720 = vsub.f32 %v705, %v682
        %v721 = vsub.f32 %v705, %v683
        %v722 = vsub.f32 %v705, %v684
        %v723 = vsub.f32 %v705, %v685
        %v724 = vsub.f32 %v705, %v686
        %v725 = vsub.f32 %v705, %v687
        %v726 = vsub.f32 %v705, %v688
        %v727 = vsub.f32 %v705, %v689
        %v728 = vsub.f32 %v705, %v690
        %v729 = vsub.f32 %v705, %v691
        %v730 = vsub.f32 %v705, %v692
        %v731 = vsub.f32 %v705, %v693
        %v732 = vsub.f32 %v705, %v694
        %v733 = vsub.f32 %v705, %v695
        %v734 = vsub.f32 %v705, %v696
        %v735 = vsub.f32 %v705, %v697
        %v736 = vsub.f32 %v705, %v698
        %v737 = vsub.f32 %v705, %v699
        %v738 = vsub.f32 %v705, %v700
        %vm739 = vcmask 64512
        %v740 = vsel %vm739, %v707, inf
        %741 = vmin.index.xlane.f32.xlu0 %v740
        %v742 = vpop.xlane.xlu0 %741
        %v743 = vsel %vm739, %v708, inf
        %744 = vmin.index.xlane.f32.xlu0 %v743
        %v745 = vpop.xlane.xlu0 %744
        %v746 = vsel %vm739, %v709, inf
        %747 = vmin.index.xlane.f32.xlu0 %v746
        %v748 = vpop.xlane.xlu0 %747
        %v749 = vsel %vm739, %v710, inf
        %750 = vmin.index.xlane.f32.xlu0 %v749
        %v751 = vpop.xlane.xlu0 %750
        %v752 = vsel %vm739, %v711, inf
        %753 = vmin.index.xlane.f32.xlu0 %v752
        %v754 = vpop.xlane.xlu0 %753
        %v755 = vsel %vm739, %v712, inf
        %756 = vmin.index.xlane.f32.xlu0 %v755
        %v757 = vpop.xlane.xlu0 %756
        %v758 = vsel %vm739, %v713, inf
        %759 = vmin.index.xlane.f32.xlu0 %v758
        %v760 = vpop.xlane.xlu0 %759
        %v761 = vsel %vm739, %v714, inf
        %762 = vmin.index.xlane.f32.xlu0 %v761
        %v763 = vpop.xlane.xlu0 %762
        %v764 = vsel %vm739, %v715, inf
        %765 = vmin.index.xlane.f32.xlu0 %v764
        %v766 = vpop.xlane.xlu0 %765
        %v767 = vsel %vm739, %v716, inf
        %768 = vmin.index.xlane.f32.xlu0 %v767
        %v769 = vpop.xlane.xlu0 %768
        %v770 = vsel %vm739, %v717, inf
        %771 = vmin.index.xlane.f32.xlu0 %v770
        %v772 = vpop.xlane.xlu0 %771
        %v773 = vsel %vm739, %v718, inf
        %774 = vmin.index.xlane.f32.xlu0 %v773
        %v775 = vpop.xlane.xlu0 %774
        %v776 = vsel %vm739, %v719, inf
        %777 = vmin.index.xlane.f32.xlu0 %v776
        %v778 = vpop.xlane.xlu0 %777
        %v779 = vsel %vm739, %v720, inf
        %780 = vmin.index.xlane.f32.xlu0 %v779
        %v781 = vpop.xlane.xlu0 %780
        %v782 = vsel %vm739, %v721, inf
        %783 = vmin.index.xlane.f32.xlu0 %v782
        %v784 = vpop.xlane.xlu0 %783
        %v785 = vsel %vm739, %v722, inf
        %786 = vmin.index.xlane.f32.xlu0 %v785
        %v787 = vpop.xlane.xlu0 %786
        %v788 = vsel %vm739, %v723, inf
        %789 = vmin.index.xlane.f32.xlu0 %v788
        %v790 = vpop.xlane.xlu0 %789
        %v791 = vsel %vm739, %v724, inf
        %792 = vmin.index.xlane.f32.xlu0 %v791
        %v793 = vpop.xlane.xlu0 %792
        %v794 = vsel %vm739, %v725, inf
        %795 = vmin.index.xlane.f32.xlu0 %v794
        %v796 = vpop.xlane.xlu0 %795
        %v797 = vsel %vm739, %v726, inf
        %798 = vmin.index.xlane.f32.xlu0 %v797
        %v799 = vpop.xlane.xlu0 %798
        %v800 = vsel %vm739, %v727, inf
        %801 = vmin.index.xlane.f32.xlu0 %v800
        %v802 = vpop.xlane.xlu0 %801
        %v803 = vsel %vm739, %v728, inf
        %804 = vmin.index.xlane.f32.xlu0 %v803
        %v805 = vpop.xlane.xlu0 %804
        %v806 = vsel %vm739, %v729, inf
        %807 = vmin.index.xlane.f32.xlu0 %v806
        %v808 = vpop.xlane.xlu0 %807
        %v809 = vsel %vm739, %v730, inf
        %810 = vmin.index.xlane.f32.xlu0 %v809
        %v811 = vpop.xlane.xlu0 %810
        %v812 = vsel %vm739, %v731, inf
        %813 = vmin.index.xlane.f32.xlu0 %v812
        %v814 = vpop.xlane.xlu0 %813
        %v815 = vsel %vm739, %v732, inf
        %816 = vmin.index.xlane.f32.xlu0 %v815
        %v817 = vpop.xlane.xlu0 %816
        %v818 = vsel %vm739, %v733, inf
        %819 = vmin.index.xlane.f32.xlu0 %v818
        %v820 = vpop.xlane.xlu0 %819
        %v821 = vsel %vm739, %v734, inf
        %822 = vmin.index.xlane.f32.xlu0 %v821
        %v823 = vpop.xlane.xlu0 %822
        %v824 = vsel %vm739, %v735, inf
        %825 = vmin.index.xlane.f32.xlu0 %v824
        %v826 = vpop.xlane.xlu0 %825
        %v827 = vsel %vm739, %v736, inf
        %828 = vmin.index.xlane.f32.xlu0 %v827
        %v829 = vpop.xlane.xlu0 %828
        %v830 = vsel %vm739, %v737, inf
        %831 = vmin.index.xlane.f32.xlu0 %v830
        %v832 = vpop.xlane.xlu0 %831
        %v833 = vsel %vm739, %v738, inf
        %834 = vmin.index.xlane.f32.xlu0 %v833
        %v835 = vpop.xlane.xlu0 %834
        %v836 = vlaneseq
        %v837 = vand.u32 %v836, 127
        %vm838 = vcmp.eq.s32.totalorder %v837, %v742
        %vm839 = vcmp.eq.s32.totalorder %v837, %v745
        %vm840 = vcmp.eq.s32.totalorder %v837, %v748
        %vm841 = vcmp.eq.s32.totalorder %v837, %v751
        %vm842 = vcmp.eq.s32.totalorder %v837, %v754
        %vm843 = vcmp.eq.s32.totalorder %v837, %v757
        %vm844 = vcmp.eq.s32.totalorder %v837, %v760
        %vm845 = vcmp.eq.s32.totalorder %v837, %v763
        %vm846 = vcmp.eq.s32.totalorder %v837, %v766
        %vm847 = vcmp.eq.s32.totalorder %v837, %v769
        %vm848 = vcmp.eq.s32.totalorder %v837, %v772
        %vm849 = vcmp.eq.s32.totalorder %v837, %v775
        %vm850 = vcmp.eq.s32.totalorder %v837, %v778
        %vm851 = vcmp.eq.s32.totalorder %v837, %v781
        %vm852 = vcmp.eq.s32.totalorder %v837, %v784
        %vm853 = vcmp.eq.s32.totalorder %v837, %v787
        %vm854 = vcmp.eq.s32.totalorder %v837, %v790
        %vm855 = vcmp.eq.s32.totalorder %v837, %v793
        %vm856 = vcmp.eq.s32.totalorder %v837, %v796
        %vm857 = vcmp.eq.s32.totalorder %v837, %v799
        %vm858 = vcmp.eq.s32.totalorder %v837, %v802
        %vm859 = vcmp.eq.s32.totalorder %v837, %v805
        %vm860 = vcmp.eq.s32.totalorder %v837, %v808
        %vm861 = vcmp.eq.s32.totalorder %v837, %v811
        %vm862 = vcmp.eq.s32.totalorder %v837, %v814
        %vm863 = vcmp.eq.s32.totalorder %v837, %v817
        %vm864 = vcmp.eq.s32.totalorder %v837, %v820
        %vm865 = vcmp.eq.s32.totalorder %v837, %v823
        %vm866 = vcmp.eq.s32.totalorder %v837, %v826
        %vm867 = vcmp.eq.s32.totalorder %v837, %v829
        %vm868 = vcmp.eq.s32.totalorder %v837, %v832
        %vm869 = vcmp.eq.s32.totalorder %v837, %v835
        %v870 = vsel %vm838, 1, 0
        %v871 = vsel %vm839, 1, 0
        %v872 = vsel %vm840, 1, 0
        %v873 = vsel %vm841, 1, 0
        %v874 = vsel %vm842, 1, 0
        %v875 = vsel %vm843, 1, 0
        %v876 = vsel %vm844, 1, 0
        %v877 = vsel %vm845, 1, 0
        %v878 = vsel %vm846, 1, 0
        %v879 = vsel %vm847, 1, 0
        %v880 = vsel %vm848, 1, 0
        %v881 = vsel %vm849, 1, 0
        %v882 = vsel %vm850, 1, 0
        %v883 = vsel %vm851, 1, 0
        %v884 = vsel %vm852, 1, 0
        %v885 = vsel %vm853, 1, 0
        %v886 = vsel %vm854, 1, 0
        %v887 = vsel %vm855, 1, 0
        %v888 = vsel %vm856, 1, 0
        %v889 = vsel %vm857, 1, 0
        %v890 = vsel %vm858, 1, 0
        %v891 = vsel %vm859, 1, 0
        %v892 = vsel %vm860, 1, 0
        %v893 = vsel %vm861, 1, 0
        %v894 = vsel %vm862, 1, 0
        %v895 = vsel %vm863, 1, 0
        %v896 = vsel %vm864, 1, 0
        %v897 = vsel %vm865, 1, 0
        %v898 = vsel %vm866, 1, 0
        %v899 = vsel %vm867, 1, 0
        %v900 = vsel %vm868, 1, 0
        %v901 = vsel %vm869, 1, 0
        %v902 = vcvt.s32.f32 %v870
        %v903 = vcvt.s32.f32 %v871
        %v904 = vcvt.s32.f32 %v872
        %v905 = vcvt.s32.f32 %v873
        %v906 = vcvt.s32.f32 %v874
        %v907 = vcvt.s32.f32 %v875
        %v908 = vcvt.s32.f32 %v876
        %v909 = vcvt.s32.f32 %v877
        %v910 = vcvt.s32.f32 %v878
        %v911 = vcvt.s32.f32 %v879
        %v912 = vcvt.s32.f32 %v880
        %v913 = vcvt.s32.f32 %v881
        %v914 = vcvt.s32.f32 %v882
        %v915 = vcvt.s32.f32 %v883
        %v916 = vcvt.s32.f32 %v884
        %v917 = vcvt.s32.f32 %v885
        %v918 = vcvt.s32.f32 %v886
        %v919 = vcvt.s32.f32 %v887
        %v920 = vcvt.s32.f32 %v888
        %v921 = vcvt.s32.f32 %v889
        %v922 = vcvt.s32.f32 %v890
        %v923 = vcvt.s32.f32 %v891
        %v924 = vcvt.s32.f32 %v892
        %v925 = vcvt.s32.f32 %v893
        %v926 = vcvt.s32.f32 %v894
        %v927 = vcvt.s32.f32 %v895
        %v928 = vcvt.s32.f32 %v896
        %v929 = vcvt.s32.f32 %v897
        %v930 = vcvt.s32.f32 %v898
        %v931 = vcvt.s32.f32 %v899
        %v932 = vcvt.s32.f32 %v900
        %v933 = vcvt.s32.f32 %v901
        %v934 = vsel %vm739, %v274, 0
        %v937 = vsel %vm739, %v902, 0
        %v940 = vsel %vm739, %v903, 0
        %v943 = vsel %vm739, %v904, 0
        %v946 = vsel %vm739, %v905, 0
        %v949 = vsel %vm739, %v906, 0
        %v952 = vsel %vm739, %v907, 0
        %v955 = vsel %vm739, %v908, 0
        %v958 = vsel %vm739, %v909, 0
        %v961 = vsel %vm739, %v910, 0
        %v964 = vsel %vm739, %v911, 0
        %v967 = vsel %vm739, %v912, 0
        %v970 = vsel %vm739, %v913, 0
        %v973 = vsel %vm739, %v914, 0
        %v976 = vsel %vm739, %v915, 0
        %v979 = vsel %vm739, %v916, 0
        %v982 = vsel %vm739, %v917, 0
        %v985 = vsel %vm739, %v918, 0
        %v988 = vsel %vm739, %v919, 0
        %v991 = vsel %vm739, %v920, 0
        %v994 = vsel %vm739, %v921, 0
        %v997 = vsel %vm739, %v922, 0
        %v1000 = vsel %vm739, %v923, 0
        %v1003 = vsel %vm739, %v924, 0
        %v1006 = vsel %vm739, %v925, 0
        %v1009 = vsel %vm739, %v926, 0
        %v1012 = vsel %vm739, %v927, 0
        %v1015 = vsel %vm739, %v928, 0
        %v1018 = vsel %vm739, %v929, 0
        %v1021 = vsel %vm739, %v930, 0
        %v1024 = vsel %vm739, %v931, 0
        %v1027 = vsel %vm739, %v932, 0
        %v1030 = vsel %vm739, %v933, 0
        %1032 = vmatprep.subr.mxu0 0.0
        %1033 = vmatpush1.xpose.msra.mxu0 %v937
        %1034 = vmatprep.subr.mxu0 0.0
        %1035 = vmatpush1.xpose.msra.mxu0 %v940
        %1036 = vmatprep.subr.mxu0 0.0
        %1037 = vmatpush1.xpose.msra.mxu0 %v943
        %1038 = vmatprep.subr.mxu0 0.0
        %1039 = vmatpush1.xpose.msra.mxu0 %v946
        %1040 = vmatprep.subr.mxu0 0.0
        %1041 = vmatpush1.xpose.msra.mxu0 %v949
        %1042 = vmatprep.subr.mxu0 0.0
        %1043 = vmatpush1.xpose.msra.mxu0 %v952
        %1044 = vmatprep.subr.mxu0 0.0
        %1045 = vmatpush1.xpose.msra.mxu0 %v955
        %1046 = vmatprep.subr.mxu0 0.0
        %1047 = vmatpush1.xpose.msra.mxu0 %v958
        %1048 = vmatprep.subr.mxu0 0.0
        %1049 = vmatpush1.xpose.msra.mxu0 %v961
        %1050 = vmatprep.subr.mxu0 0.0
        %1051 = vmatpush1.xpose.msra.mxu0 %v964
        %1052 = vmatprep.subr.mxu0 0.0
        %1053 = vmatpush1.xpose.msra.mxu0 %v967
        %1054 = vmatprep.subr.mxu0 0.0
        %1055 = vmatpush1.xpose.msra.mxu0 %v970
        %1056 = vmatprep.subr.mxu0 0.0
        %1057 = vmatpush1.xpose.msra.mxu0 %v973
        %1058 = vmatprep.subr.mxu0 0.0
        %1059 = vmatpush1.xpose.msra.mxu0 %v976
        %1060 = vmatprep.subr.mxu0 0.0
        %1061 = vmatpush1.xpose.msra.mxu0 %v979
        %1062 = vmatprep.subr.mxu0 0.0
        %1063 = vmatpush1.xpose.msra.mxu0 %v982
        %1064 = vmatprep.subr.mxu0 0.0
        %1065 = vmatpush1.xpose.msra.mxu0 %v985
        %1066 = vmatprep.subr.mxu0 0.0
        %1067 = vmatpush1.xpose.msra.mxu0 %v988
        %1068 = vmatprep.subr.mxu0 0.0
        %1069 = vmatpush1.xpose.msra.mxu0 %v991
        %1070 = vmatprep.subr.mxu0 0.0
        %1071 = vmatpush1.xpose.msra.mxu0 %v994
        %1072 = vmatprep.subr.mxu0 0.0
        %1073 = vmatpush1.xpose.msra.mxu0 %v997
        %1074 = vmatprep.subr.mxu0 0.0
        %1075 = vmatpush1.xpose.msra.mxu0 %v1000
        %1076 = vmatprep.subr.mxu0 0.0
        %1077 = vmatpush1.xpose.msra.mxu0 %v1003
        %1078 = vmatprep.subr.mxu0 0.0
        %1079 = vmatpush1.xpose.msra.mxu0 %v1006
        %1080 = vmatprep.subr.mxu0 0.0
        %1081 = vmatpush1.xpose.msra.mxu0 %v1009
        %1082 = vmatprep.subr.mxu0 0.0
        %1083 = vmatpush1.xpose.msra.mxu0 %v1012
        %1084 = vmatprep.subr.mxu0 0.0
        %1085 = vmatpush1.xpose.msra.mxu0 %v1015
        %1086 = vmatprep.subr.mxu0 0.0
        %1087 = vmatpush1.xpose.msra.mxu0 %v1018
        %1088 = vmatprep.subr.mxu0 0.0
        %1089 = vmatpush1.xpose.msra.mxu0 %v1021
        %1090 = vmatprep.subr.mxu0 0.0
        %1091 = vmatpush1.xpose.msra.mxu0 %v1024
        %1092 = vmatprep.subr.mxu0 0.0
        %1093 = vmatpush1.xpose.msra.mxu0 %v1027
        %1094 = vmatprep.subr.mxu0 0.0
        %1095 = vmatpush1.xpose.msra.mxu0 %v1030
        %1096 = vmatprep.mubr.f32.mxu0 0.0
        %1097 = vmatmul.mubr.f32.gmra.mrb[0].mxu0 %v934
        %v1098 = vpop.f32.mrb[0].mxu0
        %v1099 = vadd.f32 0.0, %v1098
        %v1100 = vpop.f32.mrb[0].mxu0
        %v1101 = vadd.f32 0.0, %v1100
        %1102 = vdwg.mxu0
        %v1105 = vcombine.low %v1099, %v1101
        %1107 = vst [vmem:[%s262] sm:$0xff] %v1105
        %v1108 = vlaneseq
        %v1109 = vshrl.u32 %v1108, 7
        %v1110 = vsub.s32 0, %v1109
        %v1111 = vrot.slane %v742, %v1110
        %v1112 = vlaneseq
        %v1113 = vshrl.u32 %v1112, 7
        %v1114 = vsub.s32 1, %v1113
        %v1115 = vrot.slane %v742, %v1114
        %v1116 = vlaneseq
        %v1117 = vshrl.u32 %v1116, 7
        %v1118 = vsub.s32 2, %v1117
        %v1119 = vrot.slane %v742, %v1118
        %v1120 = vlaneseq
        %v1121 = vshrl.u32 %v1120, 7
        %v1122 = vsub.s32 3, %v1121
        %v1123 = vrot.slane %v742, %v1122
        %v1124 = vlaneseq
        %v1125 = vshrl.u32 %v1124, 7
        %v1126 = vsub.s32 4, %v1125
        %v1127 = vrot.slane %v742, %v1126
        %v1128 = vlaneseq
        %v1129 = vshrl.u32 %v1128, 7
        %v1130 = vsub.s32 5, %v1129
        %v1131 = vrot.slane %v742, %v1130
        %v1132 = vlaneseq
        %v1133 = vshrl.u32 %v1132, 7
        %v1134 = vsub.s32 6, %v1133
        %v1135 = vrot.slane %v742, %v1134
        %v1136 = vlaneseq
        %v1137 = vshrl.u32 %v1136, 7
        %v1138 = vsub.s32 7, %v1137
        %v1139 = vrot.slane %v742, %v1138
        %v1140 = vlaneseq
        %v1141 = vshrl.u32 %v1140, 7
        %v1142 = vsub.s32 0, %v1141
        %v1143 = vrot.slane %v745, %v1142
        %v1144 = vlaneseq
        %v1145 = vshrl.u32 %v1144, 7
        %v1146 = vsub.s32 1, %v1145
        %v1147 = vrot.slane %v745, %v1146
        %v1148 = vlaneseq
        %v1149 = vshrl.u32 %v1148, 7
        %v1150 = vsub.s32 2, %v1149
        %v1151 = vrot.slane %v745, %v1150
        %v1152 = vlaneseq
        %v1153 = vshrl.u32 %v1152, 7
        %v1154 = vsub.s32 3, %v1153
        %v1155 = vrot.slane %v745, %v1154
        %v1156 = vlaneseq
        %v1157 = vshrl.u32 %v1156, 7
        %v1158 = vsub.s32 4, %v1157
        %v1159 = vrot.slane %v745, %v1158
        %v1160 = vlaneseq
        %v1161 = vshrl.u32 %v1160, 7
        %v1162 = vsub.s32 5, %v1161
        %v1163 = vrot.slane %v745, %v1162
        %v1164 = vlaneseq
        %v1165 = vshrl.u32 %v1164, 7
        %v1166 = vsub.s32 6, %v1165
        %v1167 = vrot.slane %v745, %v1166
        %v1168 = vlaneseq
        %v1169 = vshrl.u32 %v1168, 7
        %v1170 = vsub.s32 7, %v1169
        %v1171 = vrot.slane %v745, %v1170
        %v1172 = vlaneseq
        %v1173 = vshrl.u32 %v1172, 7
        %v1174 = vsub.s32 0, %v1173
        %v1175 = vrot.slane %v748, %v1174
        %v1176 = vlaneseq
        %v1177 = vshrl.u32 %v1176, 7
        %v1178 = vsub.s32 1, %v1177
        %v1179 = vrot.slane %v748, %v1178
        %v1180 = vlaneseq
        %v1181 = vshrl.u32 %v1180, 7
        %v1182 = vsub.s32 2, %v1181
        %v1183 = vrot.slane %v748, %v1182
        %v1184 = vlaneseq
        %v1185 = vshrl.u32 %v1184, 7
        %v1186 = vsub.s32 3, %v1185
        %v1187 = vrot.slane %v748, %v1186
        %v1188 = vlaneseq
        %v1189 = vshrl.u32 %v1188, 7
        %v1190 = vsub.s32 4, %v1189
        %v1191 = vrot.slane %v748, %v1190
        %v1192 = vlaneseq
        %v1193 = vshrl.u32 %v1192, 7
        %v1194 = vsub.s32 5, %v1193
        %v1195 = vrot.slane %v748, %v1194
        %v1196 = vlaneseq
        %v1197 = vshrl.u32 %v1196, 7
        %v1198 = vsub.s32 6, %v1197
        %v1199 = vrot.slane %v748, %v1198
        %v1200 = vlaneseq
        %v1201 = vshrl.u32 %v1200, 7
        %v1202 = vsub.s32 7, %v1201
        %v1203 = vrot.slane %v748, %v1202
        %v1204 = vlaneseq
        %v1205 = vshrl.u32 %v1204, 7
        %v1206 = vsub.s32 0, %v1205
        %v1207 = vrot.slane %v751, %v1206
        %v1208 = vlaneseq
        %v1209 = vshrl.u32 %v1208, 7
        %v1210 = vsub.s32 1, %v1209
        %v1211 = vrot.slane %v751, %v1210
        %v1212 = vlaneseq
        %v1213 = vshrl.u32 %v1212, 7
        %v1214 = vsub.s32 2, %v1213
        %v1215 = vrot.slane %v751, %v1214
        %v1216 = vlaneseq
        %v1217 = vshrl.u32 %v1216, 7
        %v1218 = vsub.s32 3, %v1217
        %v1219 = vrot.slane %v751, %v1218
        %v1220 = vlaneseq
        %v1221 = vshrl.u32 %v1220, 7
        %v1222 = vsub.s32 4, %v1221
        %v1223 = vrot.slane %v751, %v1222
        %v1224 = vlaneseq
        %v1225 = vshrl.u32 %v1224, 7
        %v1226 = vsub.s32 5, %v1225
        %v1227 = vrot.slane %v751, %v1226
        %v1228 = vlaneseq
        %v1229 = vshrl.u32 %v1228, 7
        %v1230 = vsub.s32 6, %v1229
        %v1231 = vrot.slane %v751, %v1230
        %v1232 = vlaneseq
        %v1233 = vshrl.u32 %v1232, 7
        %v1234 = vsub.s32 7, %v1233
        %v1235 = vrot.slane %v751, %v1234
        %v1236 = vlaneseq
        %v1237 = vshrl.u32 %v1236, 7
        %v1238 = vsub.s32 0, %v1237
        %v1239 = vrot.slane %v754, %v1238
        %v1240 = vlaneseq
        %v1241 = vshrl.u32 %v1240, 7
        %v1242 = vsub.s32 1, %v1241
        %v1243 = vrot.slane %v754, %v1242
        %v1244 = vlaneseq
        %v1245 = vshrl.u32 %v1244, 7
        %v1246 = vsub.s32 2, %v1245
        %v1247 = vrot.slane %v754, %v1246
        %v1248 = vlaneseq
        %v1249 = vshrl.u32 %v1248, 7
        %v1250 = vsub.s32 3, %v1249
        %v1251 = vrot.slane %v754, %v1250
        %v1252 = vlaneseq
        %v1253 = vshrl.u32 %v1252, 7
        %v1254 = vsub.s32 4, %v1253
        %v1255 = vrot.slane %v754, %v1254
        %v1256 = vlaneseq
        %v1257 = vshrl.u32 %v1256, 7
        %v1258 = vsub.s32 5, %v1257
        %v1259 = vrot.slane %v754, %v1258
        %v1260 = vlaneseq
        %v1261 = vshrl.u32 %v1260, 7
        %v1262 = vsub.s32 6, %v1261
        %v1263 = vrot.slane %v754, %v1262
        %v1264 = vlaneseq
        %v1265 = vshrl.u32 %v1264, 7
        %v1266 = vsub.s32 7, %v1265
        %v1267 = vrot.slane %v754, %v1266
        %v1268 = vlaneseq
        %v1269 = vshrl.u32 %v1268, 7
        %v1270 = vsub.s32 0, %v1269
        %v1271 = vrot.slane %v757, %v1270
        %v1272 = vlaneseq
        %v1273 = vshrl.u32 %v1272, 7
        %v1274 = vsub.s32 1, %v1273
        %v1275 = vrot.slane %v757, %v1274
        %v1276 = vlaneseq
        %v1277 = vshrl.u32 %v1276, 7
        %v1278 = vsub.s32 2, %v1277
        %v1279 = vrot.slane %v757, %v1278
        %v1280 = vlaneseq
        %v1281 = vshrl.u32 %v1280, 7
        %v1282 = vsub.s32 3, %v1281
        %v1283 = vrot.slane %v757, %v1282
        %v1284 = vlaneseq
        %v1285 = vshrl.u32 %v1284, 7
        %v1286 = vsub.s32 4, %v1285
        %v1287 = vrot.slane %v757, %v1286
        %v1288 = vlaneseq
        %v1289 = vshrl.u32 %v1288, 7
        %v1290 = vsub.s32 5, %v1289
        %v1291 = vrot.slane %v757, %v1290
        %v1292 = vlaneseq
        %v1293 = vshrl.u32 %v1292, 7
        %v1294 = vsub.s32 6, %v1293
        %v1295 = vrot.slane %v757, %v1294
        %v1296 = vlaneseq
        %v1297 = vshrl.u32 %v1296, 7
        %v1298 = vsub.s32 7, %v1297
        %v1299 = vrot.slane %v757, %v1298
        %v1300 = vlaneseq
        %v1301 = vshrl.u32 %v1300, 7
        %v1302 = vsub.s32 0, %v1301
        %v1303 = vrot.slane %v760, %v1302
        %v1304 = vlaneseq
        %v1305 = vshrl.u32 %v1304, 7
        %v1306 = vsub.s32 1, %v1305
        %v1307 = vrot.slane %v760, %v1306
        %v1308 = vlaneseq
        %v1309 = vshrl.u32 %v1308, 7
        %v1310 = vsub.s32 2, %v1309
        %v1311 = vrot.slane %v760, %v1310
        %v1312 = vlaneseq
        %v1313 = vshrl.u32 %v1312, 7
        %v1314 = vsub.s32 3, %v1313
        %v1315 = vrot.slane %v760, %v1314
        %v1316 = vlaneseq
        %v1317 = vshrl.u32 %v1316, 7
        %v1318 = vsub.s32 4, %v1317
        %v1319 = vrot.slane %v760, %v1318
        %v1320 = vlaneseq
        %v1321 = vshrl.u32 %v1320, 7
        %v1322 = vsub.s32 5, %v1321
        %v1323 = vrot.slane %v760, %v1322
        %v1324 = vlaneseq
        %v1325 = vshrl.u32 %v1324, 7
        %v1326 = vsub.s32 6, %v1325
        %v1327 = vrot.slane %v760, %v1326
        %v1328 = vlaneseq
        %v1329 = vshrl.u32 %v1328, 7
        %v1330 = vsub.s32 7, %v1329
        %v1331 = vrot.slane %v760, %v1330
        %v1332 = vlaneseq
        %v1333 = vshrl.u32 %v1332, 7
        %v1334 = vsub.s32 0, %v1333
        %v1335 = vrot.slane %v763, %v1334
        %v1336 = vlaneseq
        %v1337 = vshrl.u32 %v1336, 7
        %v1338 = vsub.s32 1, %v1337
        %v1339 = vrot.slane %v763, %v1338
        %v1340 = vlaneseq
        %v1341 = vshrl.u32 %v1340, 7
        %v1342 = vsub.s32 2, %v1341
        %v1343 = vrot.slane %v763, %v1342
        %v1344 = vlaneseq
        %v1345 = vshrl.u32 %v1344, 7
        %v1346 = vsub.s32 3, %v1345
        %v1347 = vrot.slane %v763, %v1346
        %v1348 = vlaneseq
        %v1349 = vshrl.u32 %v1348, 7
        %v1350 = vsub.s32 4, %v1349
        %v1351 = vrot.slane %v763, %v1350
        %v1352 = vlaneseq
        %v1353 = vshrl.u32 %v1352, 7
        %v1354 = vsub.s32 5, %v1353
        %v1355 = vrot.slane %v763, %v1354
        %v1356 = vlaneseq
        %v1357 = vshrl.u32 %v1356, 7
        %v1358 = vsub.s32 6, %v1357
        %v1359 = vrot.slane %v763, %v1358
        %v1360 = vlaneseq
        %v1361 = vshrl.u32 %v1360, 7
        %v1362 = vsub.s32 7, %v1361
        %v1363 = vrot.slane %v763, %v1362
        %v1364 = vlaneseq
        %v1365 = vshrl.u32 %v1364, 7
        %v1366 = vsub.s32 0, %v1365
        %v1367 = vrot.slane %v766, %v1366
        %v1368 = vlaneseq
        %v1369 = vshrl.u32 %v1368, 7
        %v1370 = vsub.s32 1, %v1369
        %v1371 = vrot.slane %v766, %v1370
        %v1372 = vlaneseq
        %v1373 = vshrl.u32 %v1372, 7
        %v1374 = vsub.s32 2, %v1373
        %v1375 = vrot.slane %v766, %v1374
        %v1376 = vlaneseq
        %v1377 = vshrl.u32 %v1376, 7
        %v1378 = vsub.s32 3, %v1377
        %v1379 = vrot.slane %v766, %v1378
        %v1380 = vlaneseq
        %v1381 = vshrl.u32 %v1380, 7
        %v1382 = vsub.s32 4, %v1381
        %v1383 = vrot.slane %v766, %v1382
        %v1384 = vlaneseq
        %v1385 = vshrl.u32 %v1384, 7
        %v1386 = vsub.s32 5, %v1385
        %v1387 = vrot.slane %v766, %v1386
        %v1388 = vlaneseq
        %v1389 = vshrl.u32 %v1388, 7
        %v1390 = vsub.s32 6, %v1389
        %v1391 = vrot.slane %v766, %v1390
        %v1392 = vlaneseq
        %v1393 = vshrl.u32 %v1392, 7
        %v1394 = vsub.s32 7, %v1393
        %v1395 = vrot.slane %v766, %v1394
        %v1396 = vlaneseq
        %v1397 = vshrl.u32 %v1396, 7
        %v1398 = vsub.s32 0, %v1397
        %v1399 = vrot.slane %v769, %v1398
        %v1400 = vlaneseq
        %v1401 = vshrl.u32 %v1400, 7
        %v1402 = vsub.s32 1, %v1401
        %v1403 = vrot.slane %v769, %v1402
        %v1404 = vlaneseq
        %v1405 = vshrl.u32 %v1404, 7
        %v1406 = vsub.s32 2, %v1405
        %v1407 = vrot.slane %v769, %v1406
        %v1408 = vlaneseq
        %v1409 = vshrl.u32 %v1408, 7
        %v1410 = vsub.s32 3, %v1409
        %v1411 = vrot.slane %v769, %v1410
        %v1412 = vlaneseq
        %v1413 = vshrl.u32 %v1412, 7
        %v1414 = vsub.s32 4, %v1413
        %v1415 = vrot.slane %v769, %v1414
        %v1416 = vlaneseq
        %v1417 = vshrl.u32 %v1416, 7
        %v1418 = vsub.s32 5, %v1417
        %v1419 = vrot.slane %v769, %v1418
        %v1420 = vlaneseq
        %v1421 = vshrl.u32 %v1420, 7
        %v1422 = vsub.s32 6, %v1421
        %v1423 = vrot.slane %v769, %v1422
        %v1424 = vlaneseq
        %v1425 = vshrl.u32 %v1424, 7
        %v1426 = vsub.s32 7, %v1425
        %v1427 = vrot.slane %v769, %v1426
        %v1428 = vlaneseq
        %v1429 = vshrl.u32 %v1428, 7
        %v1430 = vsub.s32 0, %v1429
        %v1431 = vrot.slane %v772, %v1430
        %v1432 = vlaneseq
        %v1433 = vshrl.u32 %v1432, 7
        %v1434 = vsub.s32 1, %v1433
        %v1435 = vrot.slane %v772, %v1434
        %v1436 = vlaneseq
        %v1437 = vshrl.u32 %v1436, 7
        %v1438 = vsub.s32 2, %v1437
        %v1439 = vrot.slane %v772, %v1438
        %v1440 = vlaneseq
        %v1441 = vshrl.u32 %v1440, 7
        %v1442 = vsub.s32 3, %v1441
        %v1443 = vrot.slane %v772, %v1442
        %v1444 = vlaneseq
        %v1445 = vshrl.u32 %v1444, 7
        %v1446 = vsub.s32 4, %v1445
        %v1447 = vrot.slane %v772, %v1446
        %v1448 = vlaneseq
        %v1449 = vshrl.u32 %v1448, 7
        %v1450 = vsub.s32 5, %v1449
        %v1451 = vrot.slane %v772, %v1450
        %v1452 = vlaneseq
        %v1453 = vshrl.u32 %v1452, 7
        %v1454 = vsub.s32 6, %v1453
        %v1455 = vrot.slane %v772, %v1454
        %v1456 = vlaneseq
        %v1457 = vshrl.u32 %v1456, 7
        %v1458 = vsub.s32 7, %v1457
        %v1459 = vrot.slane %v772, %v1458
        %v1460 = vlaneseq
        %v1461 = vshrl.u32 %v1460, 7
        %v1462 = vsub.s32 0, %v1461
        %v1463 = vrot.slane %v775, %v1462
        %v1464 = vlaneseq
        %v1465 = vshrl.u32 %v1464, 7
        %v1466 = vsub.s32 1, %v1465
        %v1467 = vrot.slane %v775, %v1466
        %v1468 = vlaneseq
        %v1469 = vshrl.u32 %v1468, 7
        %v1470 = vsub.s32 2, %v1469
        %v1471 = vrot.slane %v775, %v1470
        %v1472 = vlaneseq
        %v1473 = vshrl.u32 %v1472, 7
        %v1474 = vsub.s32 3, %v1473
        %v1475 = vrot.slane %v775, %v1474
        %v1476 = vlaneseq
        %v1477 = vshrl.u32 %v1476, 7
        %v1478 = vsub.s32 4, %v1477
        %v1479 = vrot.slane %v775, %v1478
        %v1480 = vlaneseq
        %v1481 = vshrl.u32 %v1480, 7
        %v1482 = vsub.s32 5, %v1481
        %v1483 = vrot.slane %v775, %v1482
        %v1484 = vlaneseq
        %v1485 = vshrl.u32 %v1484, 7
        %v1486 = vsub.s32 6, %v1485
        %v1487 = vrot.slane %v775, %v1486
        %v1488 = vlaneseq
        %v1489 = vshrl.u32 %v1488, 7
        %v1490 = vsub.s32 7, %v1489
        %v1491 = vrot.slane %v775, %v1490
        %v1492 = vlaneseq
        %v1493 = vshrl.u32 %v1492, 7
        %v1494 = vsub.s32 0, %v1493
        %v1495 = vrot.slane %v778, %v1494
        %v1496 = vlaneseq
        %v1497 = vshrl.u32 %v1496, 7
        %v1498 = vsub.s32 1, %v1497
        %v1499 = vrot.slane %v778, %v1498
        %v1500 = vlaneseq
        %v1501 = vshrl.u32 %v1500, 7
        %v1502 = vsub.s32 2, %v1501
        %v1503 = vrot.slane %v778, %v1502
        %v1504 = vlaneseq
        %v1505 = vshrl.u32 %v1504, 7
        %v1506 = vsub.s32 3, %v1505
        %v1507 = vrot.slane %v778, %v1506
        %v1508 = vlaneseq
        %v1509 = vshrl.u32 %v1508, 7
        %v1510 = vsub.s32 4, %v1509
        %v1511 = vrot.slane %v778, %v1510
        %v1512 = vlaneseq
        %v1513 = vshrl.u32 %v1512, 7
        %v1514 = vsub.s32 5, %v1513
        %v1515 = vrot.slane %v778, %v1514
        %v1516 = vlaneseq
        %v1517 = vshrl.u32 %v1516, 7
        %v1518 = vsub.s32 6, %v1517
        %v1519 = vrot.slane %v778, %v1518
        %v1520 = vlaneseq
        %v1521 = vshrl.u32 %v1520, 7
        %v1522 = vsub.s32 7, %v1521
        %v1523 = vrot.slane %v778, %v1522
        %v1524 = vlaneseq
        %v1525 = vshrl.u32 %v1524, 7
        %v1526 = vsub.s32 0, %v1525
        %v1527 = vrot.slane %v781, %v1526
        %v1528 = vlaneseq
        %v1529 = vshrl.u32 %v1528, 7
        %v1530 = vsub.s32 1, %v1529
        %v1531 = vrot.slane %v781, %v1530
        %v1532 = vlaneseq
        %v1533 = vshrl.u32 %v1532, 7
        %v1534 = vsub.s32 2, %v1533
        %v1535 = vrot.slane %v781, %v1534
        %v1536 = vlaneseq
        %v1537 = vshrl.u32 %v1536, 7
        %v1538 = vsub.s32 3, %v1537
        %v1539 = vrot.slane %v781, %v1538
        %v1540 = vlaneseq
        %v1541 = vshrl.u32 %v1540, 7
        %v1542 = vsub.s32 4, %v1541
        %v1543 = vrot.slane %v781, %v1542
        %v1544 = vlaneseq
        %v1545 = vshrl.u32 %v1544, 7
        %v1546 = vsub.s32 5, %v1545
        %v1547 = vrot.slane %v781, %v1546
        %v1548 = vlaneseq
        %v1549 = vshrl.u32 %v1548, 7
        %v1550 = vsub.s32 6, %v1549
        %v1551 = vrot.slane %v781, %v1550
        %v1552 = vlaneseq
        %v1553 = vshrl.u32 %v1552, 7
        %v1554 = vsub.s32 7, %v1553
        %v1555 = vrot.slane %v781, %v1554
        %v1556 = vlaneseq
        %v1557 = vshrl.u32 %v1556, 7
        %v1558 = vsub.s32 0, %v1557
        %v1559 = vrot.slane %v784, %v1558
        %v1560 = vlaneseq
        %v1561 = vshrl.u32 %v1560, 7
        %v1562 = vsub.s32 1, %v1561
        %v1563 = vrot.slane %v784, %v1562
        %v1564 = vlaneseq
        %v1565 = vshrl.u32 %v1564, 7
        %v1566 = vsub.s32 2, %v1565
        %v1567 = vrot.slane %v784, %v1566
        %v1568 = vlaneseq
        %v1569 = vshrl.u32 %v1568, 7
        %v1570 = vsub.s32 3, %v1569
        %v1571 = vrot.slane %v784, %v1570
        %v1572 = vlaneseq
        %v1573 = vshrl.u32 %v1572, 7
        %v1574 = vsub.s32 4, %v1573
        %v1575 = vrot.slane %v784, %v1574
        %v1576 = vlaneseq
        %v1577 = vshrl.u32 %v1576, 7
        %v1578 = vsub.s32 5, %v1577
        %v1579 = vrot.slane %v784, %v1578
        %v1580 = vlaneseq
        %v1581 = vshrl.u32 %v1580, 7
        %v1582 = vsub.s32 6, %v1581
        %v1583 = vrot.slane %v784, %v1582
        %v1584 = vlaneseq
        %v1585 = vshrl.u32 %v1584, 7
        %v1586 = vsub.s32 7, %v1585
        %v1587 = vrot.slane %v784, %v1586
        %v1588 = vlaneseq
        %v1589 = vshrl.u32 %v1588, 7
        %v1590 = vsub.s32 0, %v1589
        %v1591 = vrot.slane %v787, %v1590
        %v1592 = vlaneseq
        %v1593 = vshrl.u32 %v1592, 7
        %v1594 = vsub.s32 1, %v1593
        %v1595 = vrot.slane %v787, %v1594
        %v1596 = vlaneseq
        %v1597 = vshrl.u32 %v1596, 7
        %v1598 = vsub.s32 2, %v1597
        %v1599 = vrot.slane %v787, %v1598
        %v1600 = vlaneseq
        %v1601 = vshrl.u32 %v1600, 7
        %v1602 = vsub.s32 3, %v1601
        %v1603 = vrot.slane %v787, %v1602
        %v1604 = vlaneseq
        %v1605 = vshrl.u32 %v1604, 7
        %v1606 = vsub.s32 4, %v1605
        %v1607 = vrot.slane %v787, %v1606
        %v1608 = vlaneseq
        %v1609 = vshrl.u32 %v1608, 7
        %v1610 = vsub.s32 5, %v1609
        %v1611 = vrot.slane %v787, %v1610
        %v1612 = vlaneseq
        %v1613 = vshrl.u32 %v1612, 7
        %v1614 = vsub.s32 6, %v1613
        %v1615 = vrot.slane %v787, %v1614
        %v1616 = vlaneseq
        %v1617 = vshrl.u32 %v1616, 7
        %v1618 = vsub.s32 7, %v1617
        %v1619 = vrot.slane %v787, %v1618
        %v1620 = vlaneseq
        %v1621 = vshrl.u32 %v1620, 7
        %v1622 = vsub.s32 0, %v1621
        %v1623 = vrot.slane %v790, %v1622
        %v1624 = vlaneseq
        %v1625 = vshrl.u32 %v1624, 7
        %v1626 = vsub.s32 1, %v1625
        %v1627 = vrot.slane %v790, %v1626
        %v1628 = vlaneseq
        %v1629 = vshrl.u32 %v1628, 7
        %v1630 = vsub.s32 2, %v1629
        %v1631 = vrot.slane %v790, %v1630
        %v1632 = vlaneseq
        %v1633 = vshrl.u32 %v1632, 7
        %v1634 = vsub.s32 3, %v1633
        %v1635 = vrot.slane %v790, %v1634
        %v1636 = vlaneseq
        %v1637 = vshrl.u32 %v1636, 7
        %v1638 = vsub.s32 4, %v1637
        %v1639 = vrot.slane %v790, %v1638
        %v1640 = vlaneseq
        %v1641 = vshrl.u32 %v1640, 7
        %v1642 = vsub.s32 5, %v1641
        %v1643 = vrot.slane %v790, %v1642
        %v1644 = vlaneseq
        %v1645 = vshrl.u32 %v1644, 7
        %v1646 = vsub.s32 6, %v1645
        %v1647 = vrot.slane %v790, %v1646
        %v1648 = vlaneseq
        %v1649 = vshrl.u32 %v1648, 7
        %v1650 = vsub.s32 7, %v1649
        %v1651 = vrot.slane %v790, %v1650
        %v1652 = vlaneseq
        %v1653 = vshrl.u32 %v1652, 7
        %v1654 = vsub.s32 0, %v1653
        %v1655 = vrot.slane %v793, %v1654
        %v1656 = vlaneseq
        %v1657 = vshrl.u32 %v1656, 7
        %v1658 = vsub.s32 1, %v1657
        %v1659 = vrot.slane %v793, %v1658
        %v1660 = vlaneseq
        %v1661 = vshrl.u32 %v1660, 7
        %v1662 = vsub.s32 2, %v1661
        %v1663 = vrot.slane %v793, %v1662
        %v1664 = vlaneseq
        %v1665 = vshrl.u32 %v1664, 7
        %v1666 = vsub.s32 3, %v1665
        %v1667 = vrot.slane %v793, %v1666
        %v1668 = vlaneseq
        %v1669 = vshrl.u32 %v1668, 7
        %v1670 = vsub.s32 4, %v1669
        %v1671 = vrot.slane %v793, %v1670
        %v1672 = vlaneseq
        %v1673 = vshrl.u32 %v1672, 7
        %v1674 = vsub.s32 5, %v1673
        %v1675 = vrot.slane %v793, %v1674
        %v1676 = vlaneseq
        %v1677 = vshrl.u32 %v1676, 7
        %v1678 = vsub.s32 6, %v1677
        %v1679 = vrot.slane %v793, %v1678
        %v1680 = vlaneseq
        %v1681 = vshrl.u32 %v1680, 7
        %v1682 = vsub.s32 7, %v1681
        %v1683 = vrot.slane %v793, %v1682
        %v1684 = vlaneseq
        %v1685 = vshrl.u32 %v1684, 7
        %v1686 = vsub.s32 0, %v1685
        %v1687 = vrot.slane %v796, %v1686
        %v1688 = vlaneseq
        %v1689 = vshrl.u32 %v1688, 7
        %v1690 = vsub.s32 1, %v1689
        %v1691 = vrot.slane %v796, %v1690
        %v1692 = vlaneseq
        %v1693 = vshrl.u32 %v1692, 7
        %v1694 = vsub.s32 2, %v1693
        %v1695 = vrot.slane %v796, %v1694
        %v1696 = vlaneseq
        %v1697 = vshrl.u32 %v1696, 7
        %v1698 = vsub.s32 3, %v1697
        %v1699 = vrot.slane %v796, %v1698
        %v1700 = vlaneseq
        %v1701 = vshrl.u32 %v1700, 7
        %v1702 = vsub.s32 4, %v1701
        %v1703 = vrot.slane %v796, %v1702
        %v1704 = vlaneseq
        %v1705 = vshrl.u32 %v1704, 7
        %v1706 = vsub.s32 5, %v1705
        %v1707 = vrot.slane %v796, %v1706
        %v1708 = vlaneseq
        %v1709 = vshrl.u32 %v1708, 7
        %v1710 = vsub.s32 6, %v1709
        %v1711 = vrot.slane %v796, %v1710
        %v1712 = vlaneseq
        %v1713 = vshrl.u32 %v1712, 7
        %v1714 = vsub.s32 7, %v1713
        %v1715 = vrot.slane %v796, %v1714
        %v1716 = vlaneseq
        %v1717 = vshrl.u32 %v1716, 7
        %v1718 = vsub.s32 0, %v1717
        %v1719 = vrot.slane %v799, %v1718
        %v1720 = vlaneseq
        %v1721 = vshrl.u32 %v1720, 7
        %v1722 = vsub.s32 1, %v1721
        %v1723 = vrot.slane %v799, %v1722
        %v1724 = vlaneseq
        %v1725 = vshrl.u32 %v1724, 7
        %v1726 = vsub.s32 2, %v1725
        %v1727 = vrot.slane %v799, %v1726
        %v1728 = vlaneseq
        %v1729 = vshrl.u32 %v1728, 7
        %v1730 = vsub.s32 3, %v1729
        %v1731 = vrot.slane %v799, %v1730
        %v1732 = vlaneseq
        %v1733 = vshrl.u32 %v1732, 7
        %v1734 = vsub.s32 4, %v1733
        %v1735 = vrot.slane %v799, %v1734
        %v1736 = vlaneseq
        %v1737 = vshrl.u32 %v1736, 7
        %v1738 = vsub.s32 5, %v1737
        %v1739 = vrot.slane %v799, %v1738
        %v1740 = vlaneseq
        %v1741 = vshrl.u32 %v1740, 7
        %v1742 = vsub.s32 6, %v1741
        %v1743 = vrot.slane %v799, %v1742
        %v1744 = vlaneseq
        %v1745 = vshrl.u32 %v1744, 7
        %v1746 = vsub.s32 7, %v1745
        %v1747 = vrot.slane %v799, %v1746
        %v1748 = vlaneseq
        %v1749 = vshrl.u32 %v1748, 7
        %v1750 = vsub.s32 0, %v1749
        %v1751 = vrot.slane %v802, %v1750
        %v1752 = vlaneseq
        %v1753 = vshrl.u32 %v1752, 7
        %v1754 = vsub.s32 1, %v1753
        %v1755 = vrot.slane %v802, %v1754
        %v1756 = vlaneseq
        %v1757 = vshrl.u32 %v1756, 7
        %v1758 = vsub.s32 2, %v1757
        %v1759 = vrot.slane %v802, %v1758
        %v1760 = vlaneseq
        %v1761 = vshrl.u32 %v1760, 7
        %v1762 = vsub.s32 3, %v1761
        %v1763 = vrot.slane %v802, %v1762
        %v1764 = vlaneseq
        %v1765 = vshrl.u32 %v1764, 7
        %v1766 = vsub.s32 4, %v1765
        %v1767 = vrot.slane %v802, %v1766
        %v1768 = vlaneseq
        %v1769 = vshrl.u32 %v1768, 7
        %v1770 = vsub.s32 5, %v1769
        %v1771 = vrot.slane %v802, %v1770
        %v1772 = vlaneseq
        %v1773 = vshrl.u32 %v1772, 7
        %v1774 = vsub.s32 6, %v1773
        %v1775 = vrot.slane %v802, %v1774
        %v1776 = vlaneseq
        %v1777 = vshrl.u32 %v1776, 7
        %v1778 = vsub.s32 7, %v1777
        %v1779 = vrot.slane %v802, %v1778
        %v1780 = vlaneseq
        %v1781 = vshrl.u32 %v1780, 7
        %v1782 = vsub.s32 0, %v1781
        %v1783 = vrot.slane %v805, %v1782
        %v1784 = vlaneseq
        %v1785 = vshrl.u32 %v1784, 7
        %v1786 = vsub.s32 1, %v1785
        %v1787 = vrot.slane %v805, %v1786
        %v1788 = vlaneseq
        %v1789 = vshrl.u32 %v1788, 7
        %v1790 = vsub.s32 2, %v1789
        %v1791 = vrot.slane %v805, %v1790
        %v1792 = vlaneseq
        %v1793 = vshrl.u32 %v1792, 7
        %v1794 = vsub.s32 3, %v1793
        %v1795 = vrot.slane %v805, %v1794
        %v1796 = vlaneseq
        %v1797 = vshrl.u32 %v1796, 7
        %v1798 = vsub.s32 4, %v1797
        %v1799 = vrot.slane %v805, %v1798
        %v1800 = vlaneseq
        %v1801 = vshrl.u32 %v1800, 7
        %v1802 = vsub.s32 5, %v1801
        %v1803 = vrot.slane %v805, %v1802
        %v1804 = vlaneseq
        %v1805 = vshrl.u32 %v1804, 7
        %v1806 = vsub.s32 6, %v1805
        %v1807 = vrot.slane %v805, %v1806
        %v1808 = vlaneseq
        %v1809 = vshrl.u32 %v1808, 7
        %v1810 = vsub.s32 7, %v1809
        %v1811 = vrot.slane %v805, %v1810
        %v1812 = vlaneseq
        %v1813 = vshrl.u32 %v1812, 7
        %v1814 = vsub.s32 0, %v1813
        %v1815 = vrot.slane %v808, %v1814
        %v1816 = vlaneseq
        %v1817 = vshrl.u32 %v1816, 7
        %v1818 = vsub.s32 1, %v1817
        %v1819 = vrot.slane %v808, %v1818
        %v1820 = vlaneseq
        %v1821 = vshrl.u32 %v1820, 7
        %v1822 = vsub.s32 2, %v1821
        %v1823 = vrot.slane %v808, %v1822
        %v1824 = vlaneseq
        %v1825 = vshrl.u32 %v1824, 7
        %v1826 = vsub.s32 3, %v1825
        %v1827 = vrot.slane %v808, %v1826
        %v1828 = vlaneseq
        %v1829 = vshrl.u32 %v1828, 7
        %v1830 = vsub.s32 4, %v1829
        %v1831 = vrot.slane %v808, %v1830
        %v1832 = vlaneseq
        %v1833 = vshrl.u32 %v1832, 7
        %v1834 = vsub.s32 5, %v1833
        %v1835 = vrot.slane %v808, %v1834
        %v1836 = vlaneseq
        %v1837 = vshrl.u32 %v1836, 7
        %v1838 = vsub.s32 6, %v1837
        %v1839 = vrot.slane %v808, %v1838
        %v1840 = vlaneseq
        %v1841 = vshrl.u32 %v1840, 7
        %v1842 = vsub.s32 7, %v1841
        %v1843 = vrot.slane %v808, %v1842
        %v1844 = vlaneseq
        %v1845 = vshrl.u32 %v1844, 7
        %v1846 = vsub.s32 0, %v1845
        %v1847 = vrot.slane %v811, %v1846
        %v1848 = vlaneseq
        %v1849 = vshrl.u32 %v1848, 7
        %v1850 = vsub.s32 1, %v1849
        %v1851 = vrot.slane %v811, %v1850
        %v1852 = vlaneseq
        %v1853 = vshrl.u32 %v1852, 7
        %v1854 = vsub.s32 2, %v1853
        %v1855 = vrot.slane %v811, %v1854
        %v1856 = vlaneseq
        %v1857 = vshrl.u32 %v1856, 7
        %v1858 = vsub.s32 3, %v1857
        %v1859 = vrot.slane %v811, %v1858
        %v1860 = vlaneseq
        %v1861 = vshrl.u32 %v1860, 7
        %v1862 = vsub.s32 4, %v1861
        %v1863 = vrot.slane %v811, %v1862
        %v1864 = vlaneseq
        %v1865 = vshrl.u32 %v1864, 7
        %v1866 = vsub.s32 5, %v1865
        %v1867 = vrot.slane %v811, %v1866
        %v1868 = vlaneseq
        %v1869 = vshrl.u32 %v1868, 7
        %v1870 = vsub.s32 6, %v1869
        %v1871 = vrot.slane %v811, %v1870
        %v1872 = vlaneseq
        %v1873 = vshrl.u32 %v1872, 7
        %v1874 = vsub.s32 7, %v1873
        %v1875 = vrot.slane %v811, %v1874
        %v1876 = vlaneseq
        %v1877 = vshrl.u32 %v1876, 7
        %v1878 = vsub.s32 0, %v1877
        %v1879 = vrot.slane %v814, %v1878
        %v1880 = vlaneseq
        %v1881 = vshrl.u32 %v1880, 7
        %v1882 = vsub.s32 1, %v1881
        %v1883 = vrot.slane %v814, %v1882
        %v1884 = vlaneseq
        %v1885 = vshrl.u32 %v1884, 7
        %v1886 = vsub.s32 2, %v1885
        %v1887 = vrot.slane %v814, %v1886
        %v1888 = vlaneseq
        %v1889 = vshrl.u32 %v1888, 7
        %v1890 = vsub.s32 3, %v1889
        %v1891 = vrot.slane %v814, %v1890
        %v1892 = vlaneseq
        %v1893 = vshrl.u32 %v1892, 7
        %v1894 = vsub.s32 4, %v1893
        %v1895 = vrot.slane %v814, %v1894
        %v1896 = vlaneseq
        %v1897 = vshrl.u32 %v1896, 7
        %v1898 = vsub.s32 5, %v1897
        %v1899 = vrot.slane %v814, %v1898
        %v1900 = vlaneseq
        %v1901 = vshrl.u32 %v1900, 7
        %v1902 = vsub.s32 6, %v1901
        %v1903 = vrot.slane %v814, %v1902
        %v1904 = vlaneseq
        %v1905 = vshrl.u32 %v1904, 7
        %v1906 = vsub.s32 7, %v1905
        %v1907 = vrot.slane %v814, %v1906
        %v1908 = vlaneseq
        %v1909 = vshrl.u32 %v1908, 7
        %v1910 = vsub.s32 0, %v1909
        %v1911 = vrot.slane %v817, %v1910
        %v1912 = vlaneseq
        %v1913 = vshrl.u32 %v1912, 7
        %v1914 = vsub.s32 1, %v1913
        %v1915 = vrot.slane %v817, %v1914
        %v1916 = vlaneseq
        %v1917 = vshrl.u32 %v1916, 7
        %v1918 = vsub.s32 2, %v1917
        %v1919 = vrot.slane %v817, %v1918
        %v1920 = vlaneseq
        %v1921 = vshrl.u32 %v1920, 7
        %v1922 = vsub.s32 3, %v1921
        %v1923 = vrot.slane %v817, %v1922
        %v1924 = vlaneseq
        %v1925 = vshrl.u32 %v1924, 7
        %v1926 = vsub.s32 4, %v1925
        %v1927 = vrot.slane %v817, %v1926
        %v1928 = vlaneseq
        %v1929 = vshrl.u32 %v1928, 7
        %v1930 = vsub.s32 5, %v1929
        %v1931 = vrot.slane %v817, %v1930
        %v1932 = vlaneseq
        %v1933 = vshrl.u32 %v1932, 7
        %v1934 = vsub.s32 6, %v1933
        %v1935 = vrot.slane %v817, %v1934
        %v1936 = vlaneseq
        %v1937 = vshrl.u32 %v1936, 7
        %v1938 = vsub.s32 7, %v1937
        %v1939 = vrot.slane %v817, %v1938
        %v1940 = vlaneseq
        %v1941 = vshrl.u32 %v1940, 7
        %v1942 = vsub.s32 0, %v1941
        %v1943 = vrot.slane %v820, %v1942
        %v1944 = vlaneseq
        %v1945 = vshrl.u32 %v1944, 7
        %v1946 = vsub.s32 1, %v1945
        %v1947 = vrot.slane %v820, %v1946
        %v1948 = vlaneseq
        %v1949 = vshrl.u32 %v1948, 7
        %v1950 = vsub.s32 2, %v1949
        %v1951 = vrot.slane %v820, %v1950
        %v1952 = vlaneseq
        %v1953 = vshrl.u32 %v1952, 7
        %v1954 = vsub.s32 3, %v1953
        %v1955 = vrot.slane %v820, %v1954
        %v1956 = vlaneseq
        %v1957 = vshrl.u32 %v1956, 7
        %v1958 = vsub.s32 4, %v1957
        %v1959 = vrot.slane %v820, %v1958
        %v1960 = vlaneseq
        %v1961 = vshrl.u32 %v1960, 7
        %v1962 = vsub.s32 5, %v1961
        %v1963 = vrot.slane %v820, %v1962
        %v1964 = vlaneseq
        %v1965 = vshrl.u32 %v1964, 7
        %v1966 = vsub.s32 6, %v1965
        %v1967 = vrot.slane %v820, %v1966
        %v1968 = vlaneseq
        %v1969 = vshrl.u32 %v1968, 7
        %v1970 = vsub.s32 7, %v1969
        %v1971 = vrot.slane %v820, %v1970
        %v1972 = vlaneseq
        %v1973 = vshrl.u32 %v1972, 7
        %v1974 = vsub.s32 0, %v1973
        %v1975 = vrot.slane %v823, %v1974
        %v1976 = vlaneseq
        %v1977 = vshrl.u32 %v1976, 7
        %v1978 = vsub.s32 1, %v1977
        %v1979 = vrot.slane %v823, %v1978
        %v1980 = vlaneseq
        %v1981 = vshrl.u32 %v1980, 7
        %v1982 = vsub.s32 2, %v1981
        %v1983 = vrot.slane %v823, %v1982
        %v1984 = vlaneseq
        %v1985 = vshrl.u32 %v1984, 7
        %v1986 = vsub.s32 3, %v1985
        %v1987 = vrot.slane %v823, %v1986
        %v1988 = vlaneseq
        %v1989 = vshrl.u32 %v1988, 7
        %v1990 = vsub.s32 4, %v1989
        %v1991 = vrot.slane %v823, %v1990
        %v1992 = vlaneseq
        %v1993 = vshrl.u32 %v1992, 7
        %v1994 = vsub.s32 5, %v1993
        %v1995 = vrot.slane %v823, %v1994
        %v1996 = vlaneseq
        %v1997 = vshrl.u32 %v1996, 7
        %v1998 = vsub.s32 6, %v1997
        %v1999 = vrot.slane %v823, %v1998
        %v2000 = vlaneseq
        %v2001 = vshrl.u32 %v2000, 7
        %v2002 = vsub.s32 7, %v2001
        %v2003 = vrot.slane %v823, %v2002
        %v2004 = vlaneseq
        %v2005 = vshrl.u32 %v2004, 7
        %v2006 = vsub.s32 0, %v2005
        %v2007 = vrot.slane %v826, %v2006
        %v2008 = vlaneseq
        %v2009 = vshrl.u32 %v2008, 7
        %v2010 = vsub.s32 1, %v2009
        %v2011 = vrot.slane %v826, %v2010
        %v2012 = vlaneseq
        %v2013 = vshrl.u32 %v2012, 7
        %v2014 = vsub.s32 2, %v2013
        %v2015 = vrot.slane %v826, %v2014
        %v2016 = vlaneseq
        %v2017 = vshrl.u32 %v2016, 7
        %v2018 = vsub.s32 3, %v2017
        %v2019 = vrot.slane %v826, %v2018
        %v2020 = vlaneseq
        %v2021 = vshrl.u32 %v2020, 7
        %v2022 = vsub.s32 4, %v2021
        %v2023 = vrot.slane %v826, %v2022
        %v2024 = vlaneseq
        %v2025 = vshrl.u32 %v2024, 7
        %v2026 = vsub.s32 5, %v2025
        %v2027 = vrot.slane %v826, %v2026
        %v2028 = vlaneseq
        %v2029 = vshrl.u32 %v2028, 7
        %v2030 = vsub.s32 6, %v2029
        %v2031 = vrot.slane %v826, %v2030
        %v2032 = vlaneseq
        %v2033 = vshrl.u32 %v2032, 7
        %v2034 = vsub.s32 7, %v2033
        %v2035 = vrot.slane %v826, %v2034
        %v2036 = vlaneseq
        %v2037 = vshrl.u32 %v2036, 7
        %v2038 = vsub.s32 0, %v2037
        %v2039 = vrot.slane %v829, %v2038
        %v2040 = vlaneseq
        %v2041 = vshrl.u32 %v2040, 7
        %v2042 = vsub.s32 1, %v2041
        %v2043 = vrot.slane %v829, %v2042
        %v2044 = vlaneseq
        %v2045 = vshrl.u32 %v2044, 7
        %v2046 = vsub.s32 2, %v2045
        %v2047 = vrot.slane %v829, %v2046
        %v2048 = vlaneseq
        %v2049 = vshrl.u32 %v2048, 7
        %v2050 = vsub.s32 3, %v2049
        %v2051 = vrot.slane %v829, %v2050
        %v2052 = vlaneseq
        %v2053 = vshrl.u32 %v2052, 7
        %v2054 = vsub.s32 4, %v2053
        %v2055 = vrot.slane %v829, %v2054
        %v2056 = vlaneseq
        %v2057 = vshrl.u32 %v2056, 7
        %v2058 = vsub.s32 5, %v2057
        %v2059 = vrot.slane %v829, %v2058
        %v2060 = vlaneseq
        %v2061 = vshrl.u32 %v2060, 7
        %v2062 = vsub.s32 6, %v2061
        %v2063 = vrot.slane %v829, %v2062
        %v2064 = vlaneseq
        %v2065 = vshrl.u32 %v2064, 7
        %v2066 = vsub.s32 7, %v2065
        %v2067 = vrot.slane %v829, %v2066
        %v2068 = vlaneseq
        %v2069 = vshrl.u32 %v2068, 7
        %v2070 = vsub.s32 0, %v2069
        %v2071 = vrot.slane %v832, %v2070
        %v2072 = vlaneseq
        %v2073 = vshrl.u32 %v2072, 7
        %v2074 = vsub.s32 1, %v2073
        %v2075 = vrot.slane %v832, %v2074
        %v2076 = vlaneseq
        %v2077 = vshrl.u32 %v2076, 7
        %v2078 = vsub.s32 2, %v2077
        %v2079 = vrot.slane %v832, %v2078
        %v2080 = vlaneseq
        %v2081 = vshrl.u32 %v2080, 7
        %v2082 = vsub.s32 3, %v2081
        %v2083 = vrot.slane %v832, %v2082
        %v2084 = vlaneseq
        %v2085 = vshrl.u32 %v2084, 7
        %v2086 = vsub.s32 4, %v2085
        %v2087 = vrot.slane %v832, %v2086
        %v2088 = vlaneseq
        %v2089 = vshrl.u32 %v2088, 7
        %v2090 = vsub.s32 5, %v2089
        %v2091 = vrot.slane %v832, %v2090
        %v2092 = vlaneseq
        %v2093 = vshrl.u32 %v2092, 7
        %v2094 = vsub.s32 6, %v2093
        %v2095 = vrot.slane %v832, %v2094
        %v2096 = vlaneseq
        %v2097 = vshrl.u32 %v2096, 7
        %v2098 = vsub.s32 7, %v2097
        %v2099 = vrot.slane %v832, %v2098
        %v2100 = vlaneseq
        %v2101 = vshrl.u32 %v2100, 7
        %v2102 = vsub.s32 0, %v2101
        %v2103 = vrot.slane %v835, %v2102
        %v2104 = vlaneseq
        %v2105 = vshrl.u32 %v2104, 7
        %v2106 = vsub.s32 1, %v2105
        %v2107 = vrot.slane %v835, %v2106
        %v2108 = vlaneseq
        %v2109 = vshrl.u32 %v2108, 7
        %v2110 = vsub.s32 2, %v2109
        %v2111 = vrot.slane %v835, %v2110
        %v2112 = vlaneseq
        %v2113 = vshrl.u32 %v2112, 7
        %v2114 = vsub.s32 3, %v2113
        %v2115 = vrot.slane %v835, %v2114
        %v2116 = vlaneseq
        %v2117 = vshrl.u32 %v2116, 7
        %v2118 = vsub.s32 4, %v2117
        %v2119 = vrot.slane %v835, %v2118
        %v2120 = vlaneseq
        %v2121 = vshrl.u32 %v2120, 7
        %v2122 = vsub.s32 5, %v2121
        %v2123 = vrot.slane %v835, %v2122
        %v2124 = vlaneseq
        %v2125 = vshrl.u32 %v2124, 7
        %v2126 = vsub.s32 6, %v2125
        %v2127 = vrot.slane %v835, %v2126
        %v2128 = vlaneseq
        %v2129 = vshrl.u32 %v2128, 7
        %v2130 = vsub.s32 7, %v2129
        %v2131 = vrot.slane %v835, %v2130
        %v2132 = vcombine.low %v1111, %v1115
        %v2133 = vcombine.low %v1119, %v1123
        %v2134 = vcombine.low %v1127, %v1131
        %v2135 = vcombine.low %v1135, %v1139
        %v2137 = vunpack.c.l.s4 1966171168
        %v2138 = vunpack.c.0.s8 %v2137
        %v2139 = vlaneseq
        %v2140 = vshrl.u32 %v2139, 7
        %v2141 = vsub.s32 %v2138, %v2140
        %v2142 = vrot.slane %v2132, %v2141
        %v2144 = vunpack.c.l.s4 1966171168
        %v2145 = vunpack.c.0.s8 %v2144
        %v2146 = vlaneseq
        %v2147 = vshrl.u32 %v2146, 7
        %v2148 = vsub.s32 %v2145, %v2147
        %v2149 = vrot.slane %v2133, %v2148
        %v2151 = vunpack.c.l.s4 1966171168
        %v2152 = vunpack.c.0.s8 %v2151
        %v2153 = vlaneseq
        %v2154 = vshrl.u32 %v2153, 7
        %v2155 = vsub.s32 %v2152, %v2154
        %v2156 = vrot.slane %v2134, %v2155
        %v2158 = vunpack.c.l.s4 1966171168
        %v2159 = vunpack.c.0.s8 %v2158
        %v2160 = vlaneseq
        %v2161 = vshrl.u32 %v2160, 7
        %v2162 = vsub.s32 %v2159, %v2161
        %v2163 = vrot.slane %v2135, %v2162
        %v2164 = vcombine.low %v2142, %v2149
        %v2165 = vcombine.low %v2156, %v2163
        %v2167 = vunpack.c.l.s4 1966171168
        %v2168 = vunpack.c.0.s8 %v2167
        %v2169 = vlaneseq
        %v2170 = vshrl.u32 %v2169, 7
        %v2171 = vsub.s32 %v2168, %v2170
        %v2172 = vrot.slane %v2164, %v2171
        %v2174 = vunpack.c.l.s4 1966171168
        %v2175 = vunpack.c.0.s8 %v2174
        %v2176 = vlaneseq
        %v2177 = vshrl.u32 %v2176, 7
        %v2178 = vsub.s32 %v2175, %v2177
        %v2179 = vrot.slane %v2165, %v2178
        %v2180 = vcombine.low %v2172, %v2179
        %v2181 = vcombine.low %v1143, %v1147
        %v2182 = vcombine.low %v1151, %v1155
        %v2183 = vcombine.low %v1159, %v1163
        %v2184 = vcombine.low %v1167, %v1171
        %v2186 = vunpack.c.l.s4 1966171168
        %v2187 = vunpack.c.0.s8 %v2186
        %v2188 = vlaneseq
        %v2189 = vshrl.u32 %v2188, 7
        %v2190 = vsub.s32 %v2187, %v2189
        %v2191 = vrot.slane %v2181, %v2190
        %v2193 = vunpack.c.l.s4 1966171168
        %v2194 = vunpack.c.0.s8 %v2193
        %v2195 = vlaneseq
        %v2196 = vshrl.u32 %v2195, 7
        %v2197 = vsub.s32 %v2194, %v2196
        %v2198 = vrot.slane %v2182, %v2197
        %v2200 = vunpack.c.l.s4 1966171168
        %v2201 = vunpack.c.0.s8 %v2200
        %v2202 = vlaneseq
        %v2203 = vshrl.u32 %v2202, 7
        %v2204 = vsub.s32 %v2201, %v2203
        %v2205 = vrot.slane %v2183, %v2204
        %v2207 = vunpack.c.l.s4 1966171168
        %v2208 = vunpack.c.0.s8 %v2207
        %v2209 = vlaneseq
        %v2210 = vshrl.u32 %v2209, 7
        %v2211 = vsub.s32 %v2208, %v2210
        %v2212 = vrot.slane %v2184, %v2211
        %v2213 = vcombine.low %v2191, %v2198
        %v2214 = vcombine.low %v2205, %v2212
        %v2216 = vunpack.c.l.s4 1966171168
        %v2217 = vunpack.c.0.s8 %v2216
        %v2218 = vlaneseq
        %v2219 = vshrl.u32 %v2218, 7
        %v2220 = vsub.s32 %v2217, %v2219
        %v2221 = vrot.slane %v2213, %v2220
        %v2223 = vunpack.c.l.s4 1966171168
        %v2224 = vunpack.c.0.s8 %v2223
        %v2225 = vlaneseq
        %v2226 = vshrl.u32 %v2225, 7
        %v2227 = vsub.s32 %v2224, %v2226
        %v2228 = vrot.slane %v2214, %v2227
        %v2229 = vcombine.low %v2221, %v2228
        %v2230 = vcombine.low %v1175, %v1179
        %v2231 = vcombine.low %v1183, %v1187
        %v2232 = vcombine.low %v1191, %v1195
        %v2233 = vcombine.low %v1199, %v1203
        %v2235 = vunpack.c.l.s4 1966171168
        %v2236 = vunpack.c.0.s8 %v2235
        %v2237 = vlaneseq
        %v2238 = vshrl.u32 %v2237, 7
        %v2239 = vsub.s32 %v2236, %v2238
        %v2240 = vrot.slane %v2230, %v2239
        %v2242 = vunpack.c.l.s4 1966171168
        %v2243 = vunpack.c.0.s8 %v2242
        %v2244 = vlaneseq
        %v2245 = vshrl.u32 %v2244, 7
        %v2246 = vsub.s32 %v2243, %v2245
        %v2247 = vrot.slane %v2231, %v2246
        %v2249 = vunpack.c.l.s4 1966171168
        %v2250 = vunpack.c.0.s8 %v2249
        %v2251 = vlaneseq
        %v2252 = vshrl.u32 %v2251, 7
        %v2253 = vsub.s32 %v2250, %v2252
        %v2254 = vrot.slane %v2232, %v2253
        %v2256 = vunpack.c.l.s4 1966171168
        %v2257 = vunpack.c.0.s8 %v2256
        %v2258 = vlaneseq
        %v2259 = vshrl.u32 %v2258, 7
        %v2260 = vsub.s32 %v2257, %v2259
        %v2261 = vrot.slane %v2233, %v2260
        %v2262 = vcombine.low %v2240, %v2247
        %v2263 = vcombine.low %v2254, %v2261
        %v2265 = vunpack.c.l.s4 1966171168
        %v2266 = vunpack.c.0.s8 %v2265
        %v2267 = vlaneseq
        %v2268 = vshrl.u32 %v2267, 7
        %v2269 = vsub.s32 %v2266, %v2268
        %v2270 = vrot.slane %v2262, %v2269
        %v2272 = vunpack.c.l.s4 1966171168
        %v2273 = vunpack.c.0.s8 %v2272
        %v2274 = vlaneseq
        %v2275 = vshrl.u32 %v2274, 7
        %v2276 = vsub.s32 %v2273, %v2275
        %v2277 = vrot.slane %v2263, %v2276
        %v2278 = vcombine.low %v2270, %v2277
        %v2279 = vcombine.low %v1207, %v1211
        %v2280 = vcombine.low %v1215, %v1219
        %v2281 = vcombine.low %v1223, %v1227
        %v2282 = vcombine.low %v1231, %v1235
        %v2284 = vunpack.c.l.s4 1966171168
        %v2285 = vunpack.c.0.s8 %v2284
        %v2286 = vlaneseq
        %v2287 = vshrl.u32 %v2286, 7
        %v2288 = vsub.s32 %v2285, %v2287
        %v2289 = vrot.slane %v2279, %v2288
        %v2291 = vunpack.c.l.s4 1966171168
        %v2292 = vunpack.c.0.s8 %v2291
        %v2293 = vlaneseq
        %v2294 = vshrl.u32 %v2293, 7
        %v2295 = vsub.s32 %v2292, %v2294
        %v2296 = vrot.slane %v2280, %v2295
        %v2298 = vunpack.c.l.s4 1966171168
        %v2299 = vunpack.c.0.s8 %v2298
        %v2300 = vlaneseq
        %v2301 = vshrl.u32 %v2300, 7
        %v2302 = vsub.s32 %v2299, %v2301
        %v2303 = vrot.slane %v2281, %v2302
        %v2305 = vunpack.c.l.s4 1966171168
        %v2306 = vunpack.c.0.s8 %v2305
        %v2307 = vlaneseq
        %v2308 = vshrl.u32 %v2307, 7
        %v2309 = vsub.s32 %v2306, %v2308
        %v2310 = vrot.slane %v2282, %v2309
        %v2311 = vcombine.low %v2289, %v2296
        %v2312 = vcombine.low %v2303, %v2310
        %v2314 = vunpack.c.l.s4 1966171168
        %v2315 = vunpack.c.0.s8 %v2314
        %v2316 = vlaneseq
        %v2317 = vshrl.u32 %v2316, 7
        %v2318 = vsub.s32 %v2315, %v2317
        %v2319 = vrot.slane %v2311, %v2318
        %v2321 = vunpack.c.l.s4 1966171168
        %v2322 = vunpack.c.0.s8 %v2321
        %v2323 = vlaneseq
        %v2324 = vshrl.u32 %v2323, 7
        %v2325 = vsub.s32 %v2322, %v2324
        %v2326 = vrot.slane %v2312, %v2325
        %v2327 = vcombine.low %v2319, %v2326
        %v2328 = vcombine.low %v1239, %v1243
        %v2329 = vcombine.low %v1247, %v1251
        %v2330 = vcombine.low %v1255, %v1259
        %v2331 = vcombine.low %v1263, %v1267
        %v2333 = vunpack.c.l.s4 1966171168
        %v2334 = vunpack.c.0.s8 %v2333
        %v2335 = vlaneseq
        %v2336 = vshrl.u32 %v2335, 7
        %v2337 = vsub.s32 %v2334, %v2336
        %v2338 = vrot.slane %v2328, %v2337
        %v2340 = vunpack.c.l.s4 1966171168
        %v2341 = vunpack.c.0.s8 %v2340
        %v2342 = vlaneseq
        %v2343 = vshrl.u32 %v2342, 7
        %v2344 = vsub.s32 %v2341, %v2343
        %v2345 = vrot.slane %v2329, %v2344
        %v2347 = vunpack.c.l.s4 1966171168
        %v2348 = vunpack.c.0.s8 %v2347
        %v2349 = vlaneseq
        %v2350 = vshrl.u32 %v2349, 7
        %v2351 = vsub.s32 %v2348, %v2350
        %v2352 = vrot.slane %v2330, %v2351
        %v2354 = vunpack.c.l.s4 1966171168
        %v2355 = vunpack.c.0.s8 %v2354
        %v2356 = vlaneseq
        %v2357 = vshrl.u32 %v2356, 7
        %v2358 = vsub.s32 %v2355, %v2357
        %v2359 = vrot.slane %v2331, %v2358
        %v2360 = vcombine.low %v2338, %v2345
        %v2361 = vcombine.low %v2352, %v2359
        %v2363 = vunpack.c.l.s4 1966171168
        %v2364 = vunpack.c.0.s8 %v2363
        %v2365 = vlaneseq
        %v2366 = vshrl.u32 %v2365, 7
        %v2367 = vsub.s32 %v2364, %v2366
        %v2368 = vrot.slane %v2360, %v2367
        %v2370 = vunpack.c.l.s4 1966171168
        %v2371 = vunpack.c.0.s8 %v2370
        %v2372 = vlaneseq
        %v2373 = vshrl.u32 %v2372, 7
        %v2374 = vsub.s32 %v2371, %v2373
        %v2375 = vrot.slane %v2361, %v2374
        %v2376 = vcombine.low %v2368, %v2375
        %v2377 = vcombine.low %v1271, %v1275
        %v2378 = vcombine.low %v1279, %v1283
        %v2379 = vcombine.low %v1287, %v1291
        %v2380 = vcombine.low %v1295, %v1299
        %v2382 = vunpack.c.l.s4 1966171168
        %v2383 = vunpack.c.0.s8 %v2382
        %v2384 = vlaneseq
        %v2385 = vshrl.u32 %v2384, 7
        %v2386 = vsub.s32 %v2383, %v2385
        %v2387 = vrot.slane %v2377, %v2386
        %v2389 = vunpack.c.l.s4 1966171168
        %v2390 = vunpack.c.0.s8 %v2389
        %v2391 = vlaneseq
        %v2392 = vshrl.u32 %v2391, 7
        %v2393 = vsub.s32 %v2390, %v2392
        %v2394 = vrot.slane %v2378, %v2393
        %v2396 = vunpack.c.l.s4 1966171168
        %v2397 = vunpack.c.0.s8 %v2396
        %v2398 = vlaneseq
        %v2399 = vshrl.u32 %v2398, 7
        %v2400 = vsub.s32 %v2397, %v2399
        %v2401 = vrot.slane %v2379, %v2400
        %v2403 = vunpack.c.l.s4 1966171168
        %v2404 = vunpack.c.0.s8 %v2403
        %v2405 = vlaneseq
        %v2406 = vshrl.u32 %v2405, 7
        %v2407 = vsub.s32 %v2404, %v2406
        %v2408 = vrot.slane %v2380, %v2407
        %v2409 = vcombine.low %v2387, %v2394
        %v2410 = vcombine.low %v2401, %v2408
        %v2412 = vunpack.c.l.s4 1966171168
        %v2413 = vunpack.c.0.s8 %v2412
        %v2414 = vlaneseq
        %v2415 = vshrl.u32 %v2414, 7
        %v2416 = vsub.s32 %v2413, %v2415
        %v2417 = vrot.slane %v2409, %v2416
        %v2419 = vunpack.c.l.s4 1966171168
        %v2420 = vunpack.c.0.s8 %v2419
        %v2421 = vlaneseq
        %v2422 = vshrl.u32 %v2421, 7
        %v2423 = vsub.s32 %v2420, %v2422
        %v2424 = vrot.slane %v2410, %v2423
        %v2425 = vcombine.low %v2417, %v2424
        %v2426 = vcombine.low %v1303, %v1307
        %v2427 = vcombine.low %v1311, %v1315
        %v2428 = vcombine.low %v1319, %v1323
        %v2429 = vcombine.low %v1327, %v1331
        %v2431 = vunpack.c.l.s4 1966171168
        %v2432 = vunpack.c.0.s8 %v2431
        %v2433 = vlaneseq
        %v2434 = vshrl.u32 %v2433, 7
        %v2435 = vsub.s32 %v2432, %v2434
        %v2436 = vrot.slane %v2426, %v2435
        %v2438 = vunpack.c.l.s4 1966171168
        %v2439 = vunpack.c.0.s8 %v2438
        %v2440 = vlaneseq
        %v2441 = vshrl.u32 %v2440, 7
        %v2442 = vsub.s32 %v2439, %v2441
        %v2443 = vrot.slane %v2427, %v2442
        %v2445 = vunpack.c.l.s4 1966171168
        %v2446 = vunpack.c.0.s8 %v2445
        %v2447 = vlaneseq
        %v2448 = vshrl.u32 %v2447, 7
        %v2449 = vsub.s32 %v2446, %v2448
        %v2450 = vrot.slane %v2428, %v2449
        %v2452 = vunpack.c.l.s4 1966171168
        %v2453 = vunpack.c.0.s8 %v2452
        %v2454 = vlaneseq
        %v2455 = vshrl.u32 %v2454, 7
        %v2456 = vsub.s32 %v2453, %v2455
        %v2457 = vrot.slane %v2429, %v2456
        %v2458 = vcombine.low %v2436, %v2443
        %v2459 = vcombine.low %v2450, %v2457
        %v2461 = vunpack.c.l.s4 1966171168
        %v2462 = vunpack.c.0.s8 %v2461
        %v2463 = vlaneseq
        %v2464 = vshrl.u32 %v2463, 7
        %v2465 = vsub.s32 %v2462, %v2464
        %v2466 = vrot.slane %v2458, %v2465
        %v2468 = vunpack.c.l.s4 1966171168
        %v2469 = vunpack.c.0.s8 %v2468
        %v2470 = vlaneseq
        %v2471 = vshrl.u32 %v2470, 7
        %v2472 = vsub.s32 %v2469, %v2471
        %v2473 = vrot.slane %v2459, %v2472
        %v2474 = vcombine.low %v2466, %v2473
        %v2475 = vcombine.low %v1335, %v1339
        %v2476 = vcombine.low %v1343, %v1347
        %v2477 = vcombine.low %v1351, %v1355
        %v2478 = vcombine.low %v1359, %v1363
        %v2480 = vunpack.c.l.s4 1966171168
        %v2481 = vunpack.c.0.s8 %v2480
        %v2482 = vlaneseq
        %v2483 = vshrl.u32 %v2482, 7
        %v2484 = vsub.s32 %v2481, %v2483
        %v2485 = vrot.slane %v2475, %v2484
        %v2487 = vunpack.c.l.s4 1966171168
        %v2488 = vunpack.c.0.s8 %v2487
        %v2489 = vlaneseq
        %v2490 = vshrl.u32 %v2489, 7
        %v2491 = vsub.s32 %v2488, %v2490
        %v2492 = vrot.slane %v2476, %v2491
        %v2494 = vunpack.c.l.s4 1966171168
        %v2495 = vunpack.c.0.s8 %v2494
        %v2496 = vlaneseq
        %v2497 = vshrl.u32 %v2496, 7
        %v2498 = vsub.s32 %v2495, %v2497
        %v2499 = vrot.slane %v2477, %v2498
        %v2501 = vunpack.c.l.s4 1966171168
        %v2502 = vunpack.c.0.s8 %v2501
        %v2503 = vlaneseq
        %v2504 = vshrl.u32 %v2503, 7
        %v2505 = vsub.s32 %v2502, %v2504
        %v2506 = vrot.slane %v2478, %v2505
        %v2507 = vcombine.low %v2485, %v2492
        %v2508 = vcombine.low %v2499, %v2506
        %v2510 = vunpack.c.l.s4 1966171168
        %v2511 = vunpack.c.0.s8 %v2510
        %v2512 = vlaneseq
        %v2513 = vshrl.u32 %v2512, 7
        %v2514 = vsub.s32 %v2511, %v2513
        %v2515 = vrot.slane %v2507, %v2514
        %v2517 = vunpack.c.l.s4 1966171168
        %v2518 = vunpack.c.0.s8 %v2517
        %v2519 = vlaneseq
        %v2520 = vshrl.u32 %v2519, 7
        %v2521 = vsub.s32 %v2518, %v2520
        %v2522 = vrot.slane %v2508, %v2521
        %v2523 = vcombine.low %v2515, %v2522
        %v2524 = vcombine.low %v1367, %v1371
        %v2525 = vcombine.low %v1375, %v1379
        %v2526 = vcombine.low %v1383, %v1387
        %v2527 = vcombine.low %v1391, %v1395
        %v2529 = vunpack.c.l.s4 1966171168
        %v2530 = vunpack.c.0.s8 %v2529
        %v2531 = vlaneseq
        %v2532 = vshrl.u32 %v2531, 7
        %v2533 = vsub.s32 %v2530, %v2532
        %v2534 = vrot.slane %v2524, %v2533
        %v2536 = vunpack.c.l.s4 1966171168
        %v2537 = vunpack.c.0.s8 %v2536
        %v2538 = vlaneseq
        %v2539 = vshrl.u32 %v2538, 7
        %v2540 = vsub.s32 %v2537, %v2539
        %v2541 = vrot.slane %v2525, %v2540
        %v2543 = vunpack.c.l.s4 1966171168
        %v2544 = vunpack.c.0.s8 %v2543
        %v2545 = vlaneseq
        %v2546 = vshrl.u32 %v2545, 7
        %v2547 = vsub.s32 %v2544, %v2546
        %v2548 = vrot.slane %v2526, %v2547
        %v2550 = vunpack.c.l.s4 1966171168
        %v2551 = vunpack.c.0.s8 %v2550
        %v2552 = vlaneseq
        %v2553 = vshrl.u32 %v2552, 7
        %v2554 = vsub.s32 %v2551, %v2553
        %v2555 = vrot.slane %v2527, %v2554
        %v2556 = vcombine.low %v2534, %v2541
        %v2557 = vcombine.low %v2548, %v2555
        %v2559 = vunpack.c.l.s4 1966171168
        %v2560 = vunpack.c.0.s8 %v2559
        %v2561 = vlaneseq
        %v2562 = vshrl.u32 %v2561, 7
        %v2563 = vsub.s32 %v2560, %v2562
        %v2564 = vrot.slane %v2556, %v2563
        %v2566 = vunpack.c.l.s4 1966171168
        %v2567 = vunpack.c.0.s8 %v2566
        %v2568 = vlaneseq
        %v2569 = vshrl.u32 %v2568, 7
        %v2570 = vsub.s32 %v2567, %v2569
        %v2571 = vrot.slane %v2557, %v2570
        %v2572 = vcombine.low %v2564, %v2571
        %v2573 = vcombine.low %v1399, %v1403
        %v2574 = vcombine.low %v1407, %v1411
        %v2575 = vcombine.low %v1415, %v1419
        %v2576 = vcombine.low %v1423, %v1427
        %v2578 = vunpack.c.l.s4 1966171168
        %v2579 = vunpack.c.0.s8 %v2578
        %v2580 = vlaneseq
        %v2581 = vshrl.u32 %v2580, 7
        %v2582 = vsub.s32 %v2579, %v2581
        %v2583 = vrot.slane %v2573, %v2582
        %v2585 = vunpack.c.l.s4 1966171168
        %v2586 = vunpack.c.0.s8 %v2585
        %v2587 = vlaneseq
        %v2588 = vshrl.u32 %v2587, 7
        %v2589 = vsub.s32 %v2586, %v2588
        %v2590 = vrot.slane %v2574, %v2589
        %v2592 = vunpack.c.l.s4 1966171168
        %v2593 = vunpack.c.0.s8 %v2592
        %v2594 = vlaneseq
        %v2595 = vshrl.u32 %v2594, 7
        %v2596 = vsub.s32 %v2593, %v2595
        %v2597 = vrot.slane %v2575, %v2596
        %v2599 = vunpack.c.l.s4 1966171168
        %v2600 = vunpack.c.0.s8 %v2599
        %v2601 = vlaneseq
        %v2602 = vshrl.u32 %v2601, 7
        %v2603 = vsub.s32 %v2600, %v2602
        %v2604 = vrot.slane %v2576, %v2603
        %v2605 = vcombine.low %v2583, %v2590
        %v2606 = vcombine.low %v2597, %v2604
        %v2608 = vunpack.c.l.s4 1966171168
        %v2609 = vunpack.c.0.s8 %v2608
        %v2610 = vlaneseq
        %v2611 = vshrl.u32 %v2610, 7
        %v2612 = vsub.s32 %v2609, %v2611
        %v2613 = vrot.slane %v2605, %v2612
        %v2615 = vunpack.c.l.s4 1966171168
        %v2616 = vunpack.c.0.s8 %v2615
        %v2617 = vlaneseq
        %v2618 = vshrl.u32 %v2617, 7
        %v2619 = vsub.s32 %v2616, %v2618
        %v2620 = vrot.slane %v2606, %v2619
        %v2621 = vcombine.low %v2613, %v2620
        %v2622 = vcombine.low %v1431, %v1435
        %v2623 = vcombine.low %v1439, %v1443
        %v2624 = vcombine.low %v1447, %v1451
        %v2625 = vcombine.low %v1455, %v1459
        %v2627 = vunpack.c.l.s4 1966171168
        %v2628 = vunpack.c.0.s8 %v2627
        %v2629 = vlaneseq
        %v2630 = vshrl.u32 %v2629, 7
        %v2631 = vsub.s32 %v2628, %v2630
        %v2632 = vrot.slane %v2622, %v2631
        %v2634 = vunpack.c.l.s4 1966171168
        %v2635 = vunpack.c.0.s8 %v2634
        %v2636 = vlaneseq
        %v2637 = vshrl.u32 %v2636, 7
        %v2638 = vsub.s32 %v2635, %v2637
        %v2639 = vrot.slane %v2623, %v2638
        %v2641 = vunpack.c.l.s4 1966171168
        %v2642 = vunpack.c.0.s8 %v2641
        %v2643 = vlaneseq
        %v2644 = vshrl.u32 %v2643, 7
        %v2645 = vsub.s32 %v2642, %v2644
        %v2646 = vrot.slane %v2624, %v2645
        %v2648 = vunpack.c.l.s4 1966171168
        %v2649 = vunpack.c.0.s8 %v2648
        %v2650 = vlaneseq
        %v2651 = vshrl.u32 %v2650, 7
        %v2652 = vsub.s32 %v2649, %v2651
        %v2653 = vrot.slane %v2625, %v2652
        %v2654 = vcombine.low %v2632, %v2639
        %v2655 = vcombine.low %v2646, %v2653
        %v2657 = vunpack.c.l.s4 1966171168
        %v2658 = vunpack.c.0.s8 %v2657
        %v2659 = vlaneseq
        %v2660 = vshrl.u32 %v2659, 7
        %v2661 = vsub.s32 %v2658, %v2660
        %v2662 = vrot.slane %v2654, %v2661
        %v2664 = vunpack.c.l.s4 1966171168
        %v2665 = vunpack.c.0.s8 %v2664
        %v2666 = vlaneseq
        %v2667 = vshrl.u32 %v2666, 7
        %v2668 = vsub.s32 %v2665, %v2667
        %v2669 = vrot.slane %v2655, %v2668
        %v2670 = vcombine.low %v2662, %v2669
        %v2671 = vcombine.low %v1463, %v1467
        %v2672 = vcombine.low %v1471, %v1475
        %v2673 = vcombine.low %v1479, %v1483
        %v2674 = vcombine.low %v1487, %v1491
        %v2676 = vunpack.c.l.s4 1966171168
        %v2677 = vunpack.c.0.s8 %v2676
        %v2678 = vlaneseq
        %v2679 = vshrl.u32 %v2678, 7
        %v2680 = vsub.s32 %v2677, %v2679
        %v2681 = vrot.slane %v2671, %v2680
        %v2683 = vunpack.c.l.s4 1966171168
        %v2684 = vunpack.c.0.s8 %v2683
        %v2685 = vlaneseq
        %v2686 = vshrl.u32 %v2685, 7
        %v2687 = vsub.s32 %v2684, %v2686
        %v2688 = vrot.slane %v2672, %v2687
        %v2690 = vunpack.c.l.s4 1966171168
        %v2691 = vunpack.c.0.s8 %v2690
        %v2692 = vlaneseq
        %v2693 = vshrl.u32 %v2692, 7
        %v2694 = vsub.s32 %v2691, %v2693
        %v2695 = vrot.slane %v2673, %v2694
        %v2697 = vunpack.c.l.s4 1966171168
        %v2698 = vunpack.c.0.s8 %v2697
        %v2699 = vlaneseq
        %v2700 = vshrl.u32 %v2699, 7
        %v2701 = vsub.s32 %v2698, %v2700
        %v2702 = vrot.slane %v2674, %v2701
        %v2703 = vcombine.low %v2681, %v2688
        %v2704 = vcombine.low %v2695, %v2702
        %v2706 = vunpack.c.l.s4 1966171168
        %v2707 = vunpack.c.0.s8 %v2706
        %v2708 = vlaneseq
        %v2709 = vshrl.u32 %v2708, 7
        %v2710 = vsub.s32 %v2707, %v2709
        %v2711 = vrot.slane %v2703, %v2710
        %v2713 = vunpack.c.l.s4 1966171168
        %v2714 = vunpack.c.0.s8 %v2713
        %v2715 = vlaneseq
        %v2716 = vshrl.u32 %v2715, 7
        %v2717 = vsub.s32 %v2714, %v2716
        %v2718 = vrot.slane %v2704, %v2717
        %v2719 = vcombine.low %v2711, %v2718
        %v2720 = vcombine.low %v1495, %v1499
        %v2721 = vcombine.low %v1503, %v1507
        %v2722 = vcombine.low %v1511, %v1515
        %v2723 = vcombine.low %v1519, %v1523
        %v2725 = vunpack.c.l.s4 1966171168
        %v2726 = vunpack.c.0.s8 %v2725
        %v2727 = vlaneseq
        %v2728 = vshrl.u32 %v2727, 7
        %v2729 = vsub.s32 %v2726, %v2728
        %v2730 = vrot.slane %v2720, %v2729
        %v2732 = vunpack.c.l.s4 1966171168
        %v2733 = vunpack.c.0.s8 %v2732
        %v2734 = vlaneseq
        %v2735 = vshrl.u32 %v2734, 7
        %v2736 = vsub.s32 %v2733, %v2735
        %v2737 = vrot.slane %v2721, %v2736
        %v2739 = vunpack.c.l.s4 1966171168
        %v2740 = vunpack.c.0.s8 %v2739
        %v2741 = vlaneseq
        %v2742 = vshrl.u32 %v2741, 7
        %v2743 = vsub.s32 %v2740, %v2742
        %v2744 = vrot.slane %v2722, %v2743
        %v2746 = vunpack.c.l.s4 1966171168
        %v2747 = vunpack.c.0.s8 %v2746
        %v2748 = vlaneseq
        %v2749 = vshrl.u32 %v2748, 7
        %v2750 = vsub.s32 %v2747, %v2749
        %v2751 = vrot.slane %v2723, %v2750
        %v2752 = vcombine.low %v2730, %v2737
        %v2753 = vcombine.low %v2744, %v2751
        %v2755 = vunpack.c.l.s4 1966171168
        %v2756 = vunpack.c.0.s8 %v2755
        %v2757 = vlaneseq
        %v2758 = vshrl.u32 %v2757, 7
        %v2759 = vsub.s32 %v2756, %v2758
        %v2760 = vrot.slane %v2752, %v2759
        %v2762 = vunpack.c.l.s4 1966171168
        %v2763 = vunpack.c.0.s8 %v2762
        %v2764 = vlaneseq
        %v2765 = vshrl.u32 %v2764, 7
        %v2766 = vsub.s32 %v2763, %v2765
        %v2767 = vrot.slane %v2753, %v2766
        %v2768 = vcombine.low %v2760, %v2767
        %v2769 = vcombine.low %v1527, %v1531
        %v2770 = vcombine.low %v1535, %v1539
        %v2771 = vcombine.low %v1543, %v1547
        %v2772 = vcombine.low %v1551, %v1555
        %v2774 = vunpack.c.l.s4 1966171168
        %v2775 = vunpack.c.0.s8 %v2774
        %v2776 = vlaneseq
        %v2777 = vshrl.u32 %v2776, 7
        %v2778 = vsub.s32 %v2775, %v2777
        %v2779 = vrot.slane %v2769, %v2778
        %v2781 = vunpack.c.l.s4 1966171168
        %v2782 = vunpack.c.0.s8 %v2781
        %v2783 = vlaneseq
        %v2784 = vshrl.u32 %v2783, 7
        %v2785 = vsub.s32 %v2782, %v2784
        %v2786 = vrot.slane %v2770, %v2785
        %v2788 = vunpack.c.l.s4 1966171168
        %v2789 = vunpack.c.0.s8 %v2788
        %v2790 = vlaneseq
        %v2791 = vshrl.u32 %v2790, 7
        %v2792 = vsub.s32 %v2789, %v2791
        %v2793 = vrot.slane %v2771, %v2792
        %v2795 = vunpack.c.l.s4 1966171168
        %v2796 = vunpack.c.0.s8 %v2795
        %v2797 = vlaneseq
        %v2798 = vshrl.u32 %v2797, 7
        %v2799 = vsub.s32 %v2796, %v2798
        %v2800 = vrot.slane %v2772, %v2799
        %v2801 = vcombine.low %v2779, %v2786
        %v2802 = vcombine.low %v2793, %v2800
        %v2804 = vunpack.c.l.s4 1966171168
        %v2805 = vunpack.c.0.s8 %v2804
        %v2806 = vlaneseq
        %v2807 = vshrl.u32 %v2806, 7
        %v2808 = vsub.s32 %v2805, %v2807
        %v2809 = vrot.slane %v2801, %v2808
        %v2811 = vunpack.c.l.s4 1966171168
        %v2812 = vunpack.c.0.s8 %v2811
        %v2813 = vlaneseq
        %v2814 = vshrl.u32 %v2813, 7
        %v2815 = vsub.s32 %v2812, %v2814
        %v2816 = vrot.slane %v2802, %v2815
        %v2817 = vcombine.low %v2809, %v2816
        %v2818 = vcombine.low %v1559, %v1563
        %v2819 = vcombine.low %v1567, %v1571
        %v2820 = vcombine.low %v1575, %v1579
        %v2821 = vcombine.low %v1583, %v1587
        %v2823 = vunpack.c.l.s4 1966171168
        %v2824 = vunpack.c.0.s8 %v2823
        %v2825 = vlaneseq
        %v2826 = vshrl.u32 %v2825, 7
        %v2827 = vsub.s32 %v2824, %v2826
        %v2828 = vrot.slane %v2818, %v2827
        %v2830 = vunpack.c.l.s4 1966171168
        %v2831 = vunpack.c.0.s8 %v2830
        %v2832 = vlaneseq
        %v2833 = vshrl.u32 %v2832, 7
        %v2834 = vsub.s32 %v2831, %v2833
        %v2835 = vrot.slane %v2819, %v2834
        %v2837 = vunpack.c.l.s4 1966171168
        %v2838 = vunpack.c.0.s8 %v2837
        %v2839 = vlaneseq
        %v2840 = vshrl.u32 %v2839, 7
        %v2841 = vsub.s32 %v2838, %v2840
        %v2842 = vrot.slane %v2820, %v2841
        %v2844 = vunpack.c.l.s4 1966171168
        %v2845 = vunpack.c.0.s8 %v2844
        %v2846 = vlaneseq
        %v2847 = vshrl.u32 %v2846, 7
        %v2848 = vsub.s32 %v2845, %v2847
        %v2849 = vrot.slane %v2821, %v2848
        %v2850 = vcombine.low %v2828, %v2835
        %v2851 = vcombine.low %v2842, %v2849
        %v2853 = vunpack.c.l.s4 1966171168
        %v2854 = vunpack.c.0.s8 %v2853
        %v2855 = vlaneseq
        %v2856 = vshrl.u32 %v2855, 7
        %v2857 = vsub.s32 %v2854, %v2856
        %v2858 = vrot.slane %v2850, %v2857
        %v2860 = vunpack.c.l.s4 1966171168
        %v2861 = vunpack.c.0.s8 %v2860
        %v2862 = vlaneseq
        %v2863 = vshrl.u32 %v2862, 7
        %v2864 = vsub.s32 %v2861, %v2863
        %v2865 = vrot.slane %v2851, %v2864
        %v2866 = vcombine.low %v2858, %v2865
        %v2867 = vcombine.low %v1591, %v1595
        %v2868 = vcombine.low %v1599, %v1603
        %v2869 = vcombine.low %v1607, %v1611
        %v2870 = vcombine.low %v1615, %v1619
        %v2872 = vunpack.c.l.s4 1966171168
        %v2873 = vunpack.c.0.s8 %v2872
        %v2874 = vlaneseq
        %v2875 = vshrl.u32 %v2874, 7
        %v2876 = vsub.s32 %v2873, %v2875
        %v2877 = vrot.slane %v2867, %v2876
        %v2879 = vunpack.c.l.s4 1966171168
        %v2880 = vunpack.c.0.s8 %v2879
        %v2881 = vlaneseq
        %v2882 = vshrl.u32 %v2881, 7
        %v2883 = vsub.s32 %v2880, %v2882
        %v2884 = vrot.slane %v2868, %v2883
        %v2886 = vunpack.c.l.s4 1966171168
        %v2887 = vunpack.c.0.s8 %v2886
        %v2888 = vlaneseq
        %v2889 = vshrl.u32 %v2888, 7
        %v2890 = vsub.s32 %v2887, %v2889
        %v2891 = vrot.slane %v2869, %v2890
        %v2893 = vunpack.c.l.s4 1966171168
        %v2894 = vunpack.c.0.s8 %v2893
        %v2895 = vlaneseq
        %v2896 = vshrl.u32 %v2895, 7
        %v2897 = vsub.s32 %v2894, %v2896
        %v2898 = vrot.slane %v2870, %v2897
        %v2899 = vcombine.low %v2877, %v2884
        %v2900 = vcombine.low %v2891, %v2898
        %v2902 = vunpack.c.l.s4 1966171168
        %v2903 = vunpack.c.0.s8 %v2902
        %v2904 = vlaneseq
        %v2905 = vshrl.u32 %v2904, 7
        %v2906 = vsub.s32 %v2903, %v2905
        %v2907 = vrot.slane %v2899, %v2906
        %v2909 = vunpack.c.l.s4 1966171168
        %v2910 = vunpack.c.0.s8 %v2909
        %v2911 = vlaneseq
        %v2912 = vshrl.u32 %v2911, 7
        %v2913 = vsub.s32 %v2910, %v2912
        %v2914 = vrot.slane %v2900, %v2913
        %v2915 = vcombine.low %v2907, %v2914
        %v2916 = vcombine.low %v1623, %v1627
        %v2917 = vcombine.low %v1631, %v1635
        %v2918 = vcombine.low %v1639, %v1643
        %v2919 = vcombine.low %v1647, %v1651
        %v2921 = vunpack.c.l.s4 1966171168
        %v2922 = vunpack.c.0.s8 %v2921
        %v2923 = vlaneseq
        %v2924 = vshrl.u32 %v2923, 7
        %v2925 = vsub.s32 %v2922, %v2924
        %v2926 = vrot.slane %v2916, %v2925
        %v2928 = vunpack.c.l.s4 1966171168
        %v2929 = vunpack.c.0.s8 %v2928
        %v2930 = vlaneseq
        %v2931 = vshrl.u32 %v2930, 7
        %v2932 = vsub.s32 %v2929, %v2931
        %v2933 = vrot.slane %v2917, %v2932
        %v2935 = vunpack.c.l.s4 1966171168
        %v2936 = vunpack.c.0.s8 %v2935
        %v2937 = vlaneseq
        %v2938 = vshrl.u32 %v2937, 7
        %v2939 = vsub.s32 %v2936, %v2938
        %v2940 = vrot.slane %v2918, %v2939
        %v2942 = vunpack.c.l.s4 1966171168
        %v2943 = vunpack.c.0.s8 %v2942
        %v2944 = vlaneseq
        %v2945 = vshrl.u32 %v2944, 7
        %v2946 = vsub.s32 %v2943, %v2945
        %v2947 = vrot.slane %v2919, %v2946
        %v2948 = vcombine.low %v2926, %v2933
        %v2949 = vcombine.low %v2940, %v2947
        %v2951 = vunpack.c.l.s4 1966171168
        %v2952 = vunpack.c.0.s8 %v2951
        %v2953 = vlaneseq
        %v2954 = vshrl.u32 %v2953, 7
        %v2955 = vsub.s32 %v2952, %v2954
        %v2956 = vrot.slane %v2948, %v2955
        %v2958 = vunpack.c.l.s4 1966171168
        %v2959 = vunpack.c.0.s8 %v2958
        %v2960 = vlaneseq
        %v2961 = vshrl.u32 %v2960, 7
        %v2962 = vsub.s32 %v2959, %v2961
        %v2963 = vrot.slane %v2949, %v2962
        %v2964 = vcombine.low %v2956, %v2963
        %v2965 = vcombine.low %v1655, %v1659
        %v2966 = vcombine.low %v1663, %v1667
        %v2967 = vcombine.low %v1671, %v1675
        %v2968 = vcombine.low %v1679, %v1683
        %v2970 = vunpack.c.l.s4 1966171168
        %v2971 = vunpack.c.0.s8 %v2970
        %v2972 = vlaneseq
        %v2973 = vshrl.u32 %v2972, 7
        %v2974 = vsub.s32 %v2971, %v2973
        %v2975 = vrot.slane %v2965, %v2974
        %v2977 = vunpack.c.l.s4 1966171168
        %v2978 = vunpack.c.0.s8 %v2977
        %v2979 = vlaneseq
        %v2980 = vshrl.u32 %v2979, 7
        %v2981 = vsub.s32 %v2978, %v2980
        %v2982 = vrot.slane %v2966, %v2981
        %v2984 = vunpack.c.l.s4 1966171168
        %v2985 = vunpack.c.0.s8 %v2984
        %v2986 = vlaneseq
        %v2987 = vshrl.u32 %v2986, 7
        %v2988 = vsub.s32 %v2985, %v2987
        %v2989 = vrot.slane %v2967, %v2988
        %v2991 = vunpack.c.l.s4 1966171168
        %v2992 = vunpack.c.0.s8 %v2991
        %v2993 = vlaneseq
        %v2994 = vshrl.u32 %v2993, 7
        %v2995 = vsub.s32 %v2992, %v2994
        %v2996 = vrot.slane %v2968, %v2995
        %v2997 = vcombine.low %v2975, %v2982
        %v2998 = vcombine.low %v2989, %v2996
        %v3000 = vunpack.c.l.s4 1966171168
        %v3001 = vunpack.c.0.s8 %v3000
        %v3002 = vlaneseq
        %v3003 = vshrl.u32 %v3002, 7
        %v3004 = vsub.s32 %v3001, %v3003
        %v3005 = vrot.slane %v2997, %v3004
        %v3007 = vunpack.c.l.s4 1966171168
        %v3008 = vunpack.c.0.s8 %v3007
        %v3009 = vlaneseq
        %v3010 = vshrl.u32 %v3009, 7
        %v3011 = vsub.s32 %v3008, %v3010
        %v3012 = vrot.slane %v2998, %v3011
        %v3013 = vcombine.low %v3005, %v3012
        %v3014 = vcombine.low %v1687, %v1691
        %v3015 = vcombine.low %v1695, %v1699
        %v3016 = vcombine.low %v1703, %v1707
        %v3017 = vcombine.low %v1711, %v1715
        %v3019 = vunpack.c.l.s4 1966171168
        %v3020 = vunpack.c.0.s8 %v3019
        %v3021 = vlaneseq
        %v3022 = vshrl.u32 %v3021, 7
        %v3023 = vsub.s32 %v3020, %v3022
        %v3024 = vrot.slane %v3014, %v3023
        %v3026 = vunpack.c.l.s4 1966171168
        %v3027 = vunpack.c.0.s8 %v3026
        %v3028 = vlaneseq
        %v3029 = vshrl.u32 %v3028, 7
        %v3030 = vsub.s32 %v3027, %v3029
        %v3031 = vrot.slane %v3015, %v3030
        %v3033 = vunpack.c.l.s4 1966171168
        %v3034 = vunpack.c.0.s8 %v3033
        %v3035 = vlaneseq
        %v3036 = vshrl.u32 %v3035, 7
        %v3037 = vsub.s32 %v3034, %v3036
        %v3038 = vrot.slane %v3016, %v3037
        %v3040 = vunpack.c.l.s4 1966171168
        %v3041 = vunpack.c.0.s8 %v3040
        %v3042 = vlaneseq
        %v3043 = vshrl.u32 %v3042, 7
        %v3044 = vsub.s32 %v3041, %v3043
        %v3045 = vrot.slane %v3017, %v3044
        %v3046 = vcombine.low %v3024, %v3031
        %v3047 = vcombine.low %v3038, %v3045
        %v3049 = vunpack.c.l.s4 1966171168
        %v3050 = vunpack.c.0.s8 %v3049
        %v3051 = vlaneseq
        %v3052 = vshrl.u32 %v3051, 7
        %v3053 = vsub.s32 %v3050, %v3052
        %v3054 = vrot.slane %v3046, %v3053
        %v3056 = vunpack.c.l.s4 1966171168
        %v3057 = vunpack.c.0.s8 %v3056
        %v3058 = vlaneseq
        %v3059 = vshrl.u32 %v3058, 7
        %v3060 = vsub.s32 %v3057, %v3059
        %v3061 = vrot.slane %v3047, %v3060
        %v3062 = vcombine.low %v3054, %v3061
        %v3063 = vcombine.low %v1719, %v1723
        %v3064 = vcombine.low %v1727, %v1731
        %v3065 = vcombine.low %v1735, %v1739
        %v3066 = vcombine.low %v1743, %v1747
        %v3068 = vunpack.c.l.s4 1966171168
        %v3069 = vunpack.c.0.s8 %v3068
        %v3070 = vlaneseq
        %v3071 = vshrl.u32 %v3070, 7
        %v3072 = vsub.s32 %v3069, %v3071
        %v3073 = vrot.slane %v3063, %v3072
        %v3075 = vunpack.c.l.s4 1966171168
        %v3076 = vunpack.c.0.s8 %v3075
        %v3077 = vlaneseq
        %v3078 = vshrl.u32 %v3077, 7
        %v3079 = vsub.s32 %v3076, %v3078
        %v3080 = vrot.slane %v3064, %v3079
        %v3082 = vunpack.c.l.s4 1966171168
        %v3083 = vunpack.c.0.s8 %v3082
        %v3084 = vlaneseq
        %v3085 = vshrl.u32 %v3084, 7
        %v3086 = vsub.s32 %v3083, %v3085
        %v3087 = vrot.slane %v3065, %v3086
        %v3089 = vunpack.c.l.s4 1966171168
        %v3090 = vunpack.c.0.s8 %v3089
        %v3091 = vlaneseq
        %v3092 = vshrl.u32 %v3091, 7
        %v3093 = vsub.s32 %v3090, %v3092
        %v3094 = vrot.slane %v3066, %v3093
        %v3095 = vcombine.low %v3073, %v3080
        %v3096 = vcombine.low %v3087, %v3094
        %v3098 = vunpack.c.l.s4 1966171168
        %v3099 = vunpack.c.0.s8 %v3098
        %v3100 = vlaneseq
        %v3101 = vshrl.u32 %v3100, 7
        %v3102 = vsub.s32 %v3099, %v3101
        %v3103 = vrot.slane %v3095, %v3102
        %v3105 = vunpack.c.l.s4 1966171168
        %v3106 = vunpack.c.0.s8 %v3105
        %v3107 = vlaneseq
        %v3108 = vshrl.u32 %v3107, 7
        %v3109 = vsub.s32 %v3106, %v3108
        %v3110 = vrot.slane %v3096, %v3109
        %v3111 = vcombine.low %v3103, %v3110
        %v3112 = vcombine.low %v1751, %v1755
        %v3113 = vcombine.low %v1759, %v1763
        %v3114 = vcombine.low %v1767, %v1771
        %v3115 = vcombine.low %v1775, %v1779
        %v3117 = vunpack.c.l.s4 1966171168
        %v3118 = vunpack.c.0.s8 %v3117
        %v3119 = vlaneseq
        %v3120 = vshrl.u32 %v3119, 7
        %v3121 = vsub.s32 %v3118, %v3120
        %v3122 = vrot.slane %v3112, %v3121
        %v3124 = vunpack.c.l.s4 1966171168
        %v3125 = vunpack.c.0.s8 %v3124
        %v3126 = vlaneseq
        %v3127 = vshrl.u32 %v3126, 7
        %v3128 = vsub.s32 %v3125, %v3127
        %v3129 = vrot.slane %v3113, %v3128
        %v3131 = vunpack.c.l.s4 1966171168
        %v3132 = vunpack.c.0.s8 %v3131
        %v3133 = vlaneseq
        %v3134 = vshrl.u32 %v3133, 7
        %v3135 = vsub.s32 %v3132, %v3134
        %v3136 = vrot.slane %v3114, %v3135
        %v3138 = vunpack.c.l.s4 1966171168
        %v3139 = vunpack.c.0.s8 %v3138
        %v3140 = vlaneseq
        %v3141 = vshrl.u32 %v3140, 7
        %v3142 = vsub.s32 %v3139, %v3141
        %v3143 = vrot.slane %v3115, %v3142
        %v3144 = vcombine.low %v3122, %v3129
        %v3145 = vcombine.low %v3136, %v3143
        %v3147 = vunpack.c.l.s4 1966171168
        %v3148 = vunpack.c.0.s8 %v3147
        %v3149 = vlaneseq
        %v3150 = vshrl.u32 %v3149, 7
        %v3151 = vsub.s32 %v3148, %v3150
        %v3152 = vrot.slane %v3144, %v3151
        %v3154 = vunpack.c.l.s4 1966171168
        %v3155 = vunpack.c.0.s8 %v3154
        %v3156 = vlaneseq
        %v3157 = vshrl.u32 %v3156, 7
        %v3158 = vsub.s32 %v3155, %v3157
        %v3159 = vrot.slane %v3145, %v3158
        %v3160 = vcombine.low %v3152, %v3159
        %v3161 = vcombine.low %v1783, %v1787
        %v3162 = vcombine.low %v1791, %v1795
        %v3163 = vcombine.low %v1799, %v1803
        %v3164 = vcombine.low %v1807, %v1811
        %v3166 = vunpack.c.l.s4 1966171168
        %v3167 = vunpack.c.0.s8 %v3166
        %v3168 = vlaneseq
        %v3169 = vshrl.u32 %v3168, 7
        %v3170 = vsub.s32 %v3167, %v3169
        %v3171 = vrot.slane %v3161, %v3170
        %v3173 = vunpack.c.l.s4 1966171168
        %v3174 = vunpack.c.0.s8 %v3173
        %v3175 = vlaneseq
        %v3176 = vshrl.u32 %v3175, 7
        %v3177 = vsub.s32 %v3174, %v3176
        %v3178 = vrot.slane %v3162, %v3177
        %v3180 = vunpack.c.l.s4 1966171168
        %v3181 = vunpack.c.0.s8 %v3180
        %v3182 = vlaneseq
        %v3183 = vshrl.u32 %v3182, 7
        %v3184 = vsub.s32 %v3181, %v3183
        %v3185 = vrot.slane %v3163, %v3184
        %v3187 = vunpack.c.l.s4 1966171168
        %v3188 = vunpack.c.0.s8 %v3187
        %v3189 = vlaneseq
        %v3190 = vshrl.u32 %v3189, 7
        %v3191 = vsub.s32 %v3188, %v3190
        %v3192 = vrot.slane %v3164, %v3191
        %v3193 = vcombine.low %v3171, %v3178
        %v3194 = vcombine.low %v3185, %v3192
        %v3196 = vunpack.c.l.s4 1966171168
        %v3197 = vunpack.c.0.s8 %v3196
        %v3198 = vlaneseq
        %v3199 = vshrl.u32 %v3198, 7
        %v3200 = vsub.s32 %v3197, %v3199
        %v3201 = vrot.slane %v3193, %v3200
        %v3203 = vunpack.c.l.s4 1966171168
        %v3204 = vunpack.c.0.s8 %v3203
        %v3205 = vlaneseq
        %v3206 = vshrl.u32 %v3205, 7
        %v3207 = vsub.s32 %v3204, %v3206
        %v3208 = vrot.slane %v3194, %v3207
        %v3209 = vcombine.low %v3201, %v3208
        %v3210 = vcombine.low %v1815, %v1819
        %v3211 = vcombine.low %v1823, %v1827
        %v3212 = vcombine.low %v1831, %v1835
        %v3213 = vcombine.low %v1839, %v1843
        %v3215 = vunpack.c.l.s4 1966171168
        %v3216 = vunpack.c.0.s8 %v3215
        %v3217 = vlaneseq
        %v3218 = vshrl.u32 %v3217, 7
        %v3219 = vsub.s32 %v3216, %v3218
        %v3220 = vrot.slane %v3210, %v3219
        %v3222 = vunpack.c.l.s4 1966171168
        %v3223 = vunpack.c.0.s8 %v3222
        %v3224 = vlaneseq
        %v3225 = vshrl.u32 %v3224, 7
        %v3226 = vsub.s32 %v3223, %v3225
        %v3227 = vrot.slane %v3211, %v3226
        %v3229 = vunpack.c.l.s4 1966171168
        %v3230 = vunpack.c.0.s8 %v3229
        %v3231 = vlaneseq
        %v3232 = vshrl.u32 %v3231, 7
        %v3233 = vsub.s32 %v3230, %v3232
        %v3234 = vrot.slane %v3212, %v3233
        %v3236 = vunpack.c.l.s4 1966171168
        %v3237 = vunpack.c.0.s8 %v3236
        %v3238 = vlaneseq
        %v3239 = vshrl.u32 %v3238, 7
        %v3240 = vsub.s32 %v3237, %v3239
        %v3241 = vrot.slane %v3213, %v3240
        %v3242 = vcombine.low %v3220, %v3227
        %v3243 = vcombine.low %v3234, %v3241
        %v3245 = vunpack.c.l.s4 1966171168
        %v3246 = vunpack.c.0.s8 %v3245
        %v3247 = vlaneseq
        %v3248 = vshrl.u32 %v3247, 7
        %v3249 = vsub.s32 %v3246, %v3248
        %v3250 = vrot.slane %v3242, %v3249
        %v3252 = vunpack.c.l.s4 1966171168
        %v3253 = vunpack.c.0.s8 %v3252
        %v3254 = vlaneseq
        %v3255 = vshrl.u32 %v3254, 7
        %v3256 = vsub.s32 %v3253, %v3255
        %v3257 = vrot.slane %v3243, %v3256
        %v3258 = vcombine.low %v3250, %v3257
        %v3259 = vcombine.low %v1847, %v1851
        %v3260 = vcombine.low %v1855, %v1859
        %v3261 = vcombine.low %v1863, %v1867
        %v3262 = vcombine.low %v1871, %v1875
        %v3264 = vunpack.c.l.s4 1966171168
        %v3265 = vunpack.c.0.s8 %v3264
        %v3266 = vlaneseq
        %v3267 = vshrl.u32 %v3266, 7
        %v3268 = vsub.s32 %v3265, %v3267
        %v3269 = vrot.slane %v3259, %v3268
        %v3271 = vunpack.c.l.s4 1966171168
        %v3272 = vunpack.c.0.s8 %v3271
        %v3273 = vlaneseq
        %v3274 = vshrl.u32 %v3273, 7
        %v3275 = vsub.s32 %v3272, %v3274
        %v3276 = vrot.slane %v3260, %v3275
        %v3278 = vunpack.c.l.s4 1966171168
        %v3279 = vunpack.c.0.s8 %v3278
        %v3280 = vlaneseq
        %v3281 = vshrl.u32 %v3280, 7
        %v3282 = vsub.s32 %v3279, %v3281
        %v3283 = vrot.slane %v3261, %v3282
        %v3285 = vunpack.c.l.s4 1966171168
        %v3286 = vunpack.c.0.s8 %v3285
        %v3287 = vlaneseq
        %v3288 = vshrl.u32 %v3287, 7
        %v3289 = vsub.s32 %v3286, %v3288
        %v3290 = vrot.slane %v3262, %v3289
        %v3291 = vcombine.low %v3269, %v3276
        %v3292 = vcombine.low %v3283, %v3290
        %v3294 = vunpack.c.l.s4 1966171168
        %v3295 = vunpack.c.0.s8 %v3294
        %v3296 = vlaneseq
        %v3297 = vshrl.u32 %v3296, 7
        %v3298 = vsub.s32 %v3295, %v3297
        %v3299 = vrot.slane %v3291, %v3298
        %v3301 = vunpack.c.l.s4 1966171168
        %v3302 = vunpack.c.0.s8 %v3301
        %v3303 = vlaneseq
        %v3304 = vshrl.u32 %v3303, 7
        %v3305 = vsub.s32 %v3302, %v3304
        %v3306 = vrot.slane %v3292, %v3305
        %v3307 = vcombine.low %v3299, %v3306
        %v3308 = vcombine.low %v1879, %v1883
        %v3309 = vcombine.low %v1887, %v1891
        %v3310 = vcombine.low %v1895, %v1899
        %v3311 = vcombine.low %v1903, %v1907
        %v3313 = vunpack.c.l.s4 1966171168
        %v3314 = vunpack.c.0.s8 %v3313
        %v3315 = vlaneseq
        %v3316 = vshrl.u32 %v3315, 7
        %v3317 = vsub.s32 %v3314, %v3316
        %v3318 = vrot.slane %v3308, %v3317
        %v3320 = vunpack.c.l.s4 1966171168
        %v3321 = vunpack.c.0.s8 %v3320
        %v3322 = vlaneseq
        %v3323 = vshrl.u32 %v3322, 7
        %v3324 = vsub.s32 %v3321, %v3323
        %v3325 = vrot.slane %v3309, %v3324
        %v3327 = vunpack.c.l.s4 1966171168
        %v3328 = vunpack.c.0.s8 %v3327
        %v3329 = vlaneseq
        %v3330 = vshrl.u32 %v3329, 7
        %v3331 = vsub.s32 %v3328, %v3330
        %v3332 = vrot.slane %v3310, %v3331
        %v3334 = vunpack.c.l.s4 1966171168
        %v3335 = vunpack.c.0.s8 %v3334
        %v3336 = vlaneseq
        %v3337 = vshrl.u32 %v3336, 7
        %v3338 = vsub.s32 %v3335, %v3337
        %v3339 = vrot.slane %v3311, %v3338
        %v3340 = vcombine.low %v3318, %v3325
        %v3341 = vcombine.low %v3332, %v3339
        %v3343 = vunpack.c.l.s4 1966171168
        %v3344 = vunpack.c.0.s8 %v3343
        %v3345 = vlaneseq
        %v3346 = vshrl.u32 %v3345, 7
        %v3347 = vsub.s32 %v3344, %v3346
        %v3348 = vrot.slane %v3340, %v3347
        %v3350 = vunpack.c.l.s4 1966171168
        %v3351 = vunpack.c.0.s8 %v3350
        %v3352 = vlaneseq
        %v3353 = vshrl.u32 %v3352, 7
        %v3354 = vsub.s32 %v3351, %v3353
        %v3355 = vrot.slane %v3341, %v3354
        %v3356 = vcombine.low %v3348, %v3355
        %v3357 = vcombine.low %v1911, %v1915
        %v3358 = vcombine.low %v1919, %v1923
        %v3359 = vcombine.low %v1927, %v1931
        %v3360 = vcombine.low %v1935, %v1939
        %v3362 = vunpack.c.l.s4 1966171168
        %v3363 = vunpack.c.0.s8 %v3362
        %v3364 = vlaneseq
        %v3365 = vshrl.u32 %v3364, 7
        %v3366 = vsub.s32 %v3363, %v3365
        %v3367 = vrot.slane %v3357, %v3366
        %v3369 = vunpack.c.l.s4 1966171168
        %v3370 = vunpack.c.0.s8 %v3369
        %v3371 = vlaneseq
        %v3372 = vshrl.u32 %v3371, 7
        %v3373 = vsub.s32 %v3370, %v3372
        %v3374 = vrot.slane %v3358, %v3373
        %v3376 = vunpack.c.l.s4 1966171168
        %v3377 = vunpack.c.0.s8 %v3376
        %v3378 = vlaneseq
        %v3379 = vshrl.u32 %v3378, 7
        %v3380 = vsub.s32 %v3377, %v3379
        %v3381 = vrot.slane %v3359, %v3380
        %v3383 = vunpack.c.l.s4 1966171168
        %v3384 = vunpack.c.0.s8 %v3383
        %v3385 = vlaneseq
        %v3386 = vshrl.u32 %v3385, 7
        %v3387 = vsub.s32 %v3384, %v3386
        %v3388 = vrot.slane %v3360, %v3387
        %v3389 = vcombine.low %v3367, %v3374
        %v3390 = vcombine.low %v3381, %v3388
        %v3392 = vunpack.c.l.s4 1966171168
        %v3393 = vunpack.c.0.s8 %v3392
        %v3394 = vlaneseq
        %v3395 = vshrl.u32 %v3394, 7
        %v3396 = vsub.s32 %v3393, %v3395
        %v3397 = vrot.slane %v3389, %v3396
        %v3399 = vunpack.c.l.s4 1966171168
        %v3400 = vunpack.c.0.s8 %v3399
        %v3401 = vlaneseq
        %v3402 = vshrl.u32 %v3401, 7
        %v3403 = vsub.s32 %v3400, %v3402
        %v3404 = vrot.slane %v3390, %v3403
        %v3405 = vcombine.low %v3397, %v3404
        %v3406 = vcombine.low %v1943, %v1947
        %v3407 = vcombine.low %v1951, %v1955
        %v3408 = vcombine.low %v1959, %v1963
        %v3409 = vcombine.low %v1967, %v1971
        %v3411 = vunpack.c.l.s4 1966171168
        %v3412 = vunpack.c.0.s8 %v3411
        %v3413 = vlaneseq
        %v3414 = vshrl.u32 %v3413, 7
        %v3415 = vsub.s32 %v3412, %v3414
        %v3416 = vrot.slane %v3406, %v3415
        %v3418 = vunpack.c.l.s4 1966171168
        %v3419 = vunpack.c.0.s8 %v3418
        %v3420 = vlaneseq
        %v3421 = vshrl.u32 %v3420, 7
        %v3422 = vsub.s32 %v3419, %v3421
        %v3423 = vrot.slane %v3407, %v3422
        %v3425 = vunpack.c.l.s4 1966171168
        %v3426 = vunpack.c.0.s8 %v3425
        %v3427 = vlaneseq
        %v3428 = vshrl.u32 %v3427, 7
        %v3429 = vsub.s32 %v3426, %v3428
        %v3430 = vrot.slane %v3408, %v3429
        %v3432 = vunpack.c.l.s4 1966171168
        %v3433 = vunpack.c.0.s8 %v3432
        %v3434 = vlaneseq
        %v3435 = vshrl.u32 %v3434, 7
        %v3436 = vsub.s32 %v3433, %v3435
        %v3437 = vrot.slane %v3409, %v3436
        %v3438 = vcombine.low %v3416, %v3423
        %v3439 = vcombine.low %v3430, %v3437
        %v3441 = vunpack.c.l.s4 1966171168
        %v3442 = vunpack.c.0.s8 %v3441
        %v3443 = vlaneseq
        %v3444 = vshrl.u32 %v3443, 7
        %v3445 = vsub.s32 %v3442, %v3444
        %v3446 = vrot.slane %v3438, %v3445
        %v3448 = vunpack.c.l.s4 1966171168
        %v3449 = vunpack.c.0.s8 %v3448
        %v3450 = vlaneseq
        %v3451 = vshrl.u32 %v3450, 7
        %v3452 = vsub.s32 %v3449, %v3451
        %v3453 = vrot.slane %v3439, %v3452
        %v3454 = vcombine.low %v3446, %v3453
        %v3455 = vcombine.low %v1975, %v1979
        %v3456 = vcombine.low %v1983, %v1987
        %v3457 = vcombine.low %v1991, %v1995
        %v3458 = vcombine.low %v1999, %v2003
        %v3460 = vunpack.c.l.s4 1966171168
        %v3461 = vunpack.c.0.s8 %v3460
        %v3462 = vlaneseq
        %v3463 = vshrl.u32 %v3462, 7
        %v3464 = vsub.s32 %v3461, %v3463
        %v3465 = vrot.slane %v3455, %v3464
        %v3467 = vunpack.c.l.s4 1966171168
        %v3468 = vunpack.c.0.s8 %v3467
        %v3469 = vlaneseq
        %v3470 = vshrl.u32 %v3469, 7
        %v3471 = vsub.s32 %v3468, %v3470
        %v3472 = vrot.slane %v3456, %v3471
        %v3474 = vunpack.c.l.s4 1966171168
        %v3475 = vunpack.c.0.s8 %v3474
        %v3476 = vlaneseq
        %v3477 = vshrl.u32 %v3476, 7
        %v3478 = vsub.s32 %v3475, %v3477
        %v3479 = vrot.slane %v3457, %v3478
        %v3481 = vunpack.c.l.s4 1966171168
        %v3482 = vunpack.c.0.s8 %v3481
        %v3483 = vlaneseq
        %v3484 = vshrl.u32 %v3483, 7
        %v3485 = vsub.s32 %v3482, %v3484
        %v3486 = vrot.slane %v3458, %v3485
        %v3487 = vcombine.low %v3465, %v3472
        %v3488 = vcombine.low %v3479, %v3486
        %v3490 = vunpack.c.l.s4 1966171168
        %v3491 = vunpack.c.0.s8 %v3490
        %v3492 = vlaneseq
        %v3493 = vshrl.u32 %v3492, 7
        %v3494 = vsub.s32 %v3491, %v3493
        %v3495 = vrot.slane %v3487, %v3494
        %v3497 = vunpack.c.l.s4 1966171168
        %v3498 = vunpack.c.0.s8 %v3497
        %v3499 = vlaneseq
        %v3500 = vshrl.u32 %v3499, 7
        %v3501 = vsub.s32 %v3498, %v3500
        %v3502 = vrot.slane %v3488, %v3501
        %v3503 = vcombine.low %v3495, %v3502
        %v3504 = vcombine.low %v2007, %v2011
        %v3505 = vcombine.low %v2015, %v2019
        %v3506 = vcombine.low %v2023, %v2027
        %v3507 = vcombine.low %v2031, %v2035
        %v3509 = vunpack.c.l.s4 1966171168
        %v3510 = vunpack.c.0.s8 %v3509
        %v3511 = vlaneseq
        %v3512 = vshrl.u32 %v3511, 7
        %v3513 = vsub.s32 %v3510, %v3512
        %v3514 = vrot.slane %v3504, %v3513
        %v3516 = vunpack.c.l.s4 1966171168
        %v3517 = vunpack.c.0.s8 %v3516
        %v3518 = vlaneseq
        %v3519 = vshrl.u32 %v3518, 7
        %v3520 = vsub.s32 %v3517, %v3519
        %v3521 = vrot.slane %v3505, %v3520
        %v3523 = vunpack.c.l.s4 1966171168
        %v3524 = vunpack.c.0.s8 %v3523
        %v3525 = vlaneseq
        %v3526 = vshrl.u32 %v3525, 7
        %v3527 = vsub.s32 %v3524, %v3526
        %v3528 = vrot.slane %v3506, %v3527
        %v3530 = vunpack.c.l.s4 1966171168
        %v3531 = vunpack.c.0.s8 %v3530
        %v3532 = vlaneseq
        %v3533 = vshrl.u32 %v3532, 7
        %v3534 = vsub.s32 %v3531, %v3533
        %v3535 = vrot.slane %v3507, %v3534
        %v3536 = vcombine.low %v3514, %v3521
        %v3537 = vcombine.low %v3528, %v3535
        %v3539 = vunpack.c.l.s4 1966171168
        %v3540 = vunpack.c.0.s8 %v3539
        %v3541 = vlaneseq
        %v3542 = vshrl.u32 %v3541, 7
        %v3543 = vsub.s32 %v3540, %v3542
        %v3544 = vrot.slane %v3536, %v3543
        %v3546 = vunpack.c.l.s4 1966171168
        %v3547 = vunpack.c.0.s8 %v3546
        %v3548 = vlaneseq
        %v3549 = vshrl.u32 %v3548, 7
        %v3550 = vsub.s32 %v3547, %v3549
        %v3551 = vrot.slane %v3537, %v3550
        %v3552 = vcombine.low %v3544, %v3551
        %v3553 = vcombine.low %v2039, %v2043
        %v3554 = vcombine.low %v2047, %v2051
        %v3555 = vcombine.low %v2055, %v2059
        %v3556 = vcombine.low %v2063, %v2067
        %v3558 = vunpack.c.l.s4 1966171168
        %v3559 = vunpack.c.0.s8 %v3558
        %v3560 = vlaneseq
        %v3561 = vshrl.u32 %v3560, 7
        %v3562 = vsub.s32 %v3559, %v3561
        %v3563 = vrot.slane %v3553, %v3562
        %v3565 = vunpack.c.l.s4 1966171168
        %v3566 = vunpack.c.0.s8 %v3565
        %v3567 = vlaneseq
        %v3568 = vshrl.u32 %v3567, 7
        %v3569 = vsub.s32 %v3566, %v3568
        %v3570 = vrot.slane %v3554, %v3569
        %v3572 = vunpack.c.l.s4 1966171168
        %v3573 = vunpack.c.0.s8 %v3572
        %v3574 = vlaneseq
        %v3575 = vshrl.u32 %v3574, 7
        %v3576 = vsub.s32 %v3573, %v3575
        %v3577 = vrot.slane %v3555, %v3576
        %v3579 = vunpack.c.l.s4 1966171168
        %v3580 = vunpack.c.0.s8 %v3579
        %v3581 = vlaneseq
        %v3582 = vshrl.u32 %v3581, 7
        %v3583 = vsub.s32 %v3580, %v3582
        %v3584 = vrot.slane %v3556, %v3583
        %v3585 = vcombine.low %v3563, %v3570
        %v3586 = vcombine.low %v3577, %v3584
        %v3588 = vunpack.c.l.s4 1966171168
        %v3589 = vunpack.c.0.s8 %v3588
        %v3590 = vlaneseq
        %v3591 = vshrl.u32 %v3590, 7
        %v3592 = vsub.s32 %v3589, %v3591
        %v3593 = vrot.slane %v3585, %v3592
        %v3595 = vunpack.c.l.s4 1966171168
        %v3596 = vunpack.c.0.s8 %v3595
        %v3597 = vlaneseq
        %v3598 = vshrl.u32 %v3597, 7
        %v3599 = vsub.s32 %v3596, %v3598
        %v3600 = vrot.slane %v3586, %v3599
        %v3601 = vcombine.low %v3593, %v3600
        %v3602 = vcombine.low %v2071, %v2075
        %v3603 = vcombine.low %v2079, %v2083
        %v3604 = vcombine.low %v2087, %v2091
        %v3605 = vcombine.low %v2095, %v2099
        %v3607 = vunpack.c.l.s4 1966171168
        %v3608 = vunpack.c.0.s8 %v3607
        %v3609 = vlaneseq
        %v3610 = vshrl.u32 %v3609, 7
        %v3611 = vsub.s32 %v3608, %v3610
        %v3612 = vrot.slane %v3602, %v3611
        %v3614 = vunpack.c.l.s4 1966171168
        %v3615 = vunpack.c.0.s8 %v3614
        %v3616 = vlaneseq
        %v3617 = vshrl.u32 %v3616, 7
        %v3618 = vsub.s32 %v3615, %v3617
        %v3619 = vrot.slane %v3603, %v3618
        %v3621 = vunpack.c.l.s4 1966171168
        %v3622 = vunpack.c.0.s8 %v3621
        %v3623 = vlaneseq
        %v3624 = vshrl.u32 %v3623, 7
        %v3625 = vsub.s32 %v3622, %v3624
        %v3626 = vrot.slane %v3604, %v3625
        %v3628 = vunpack.c.l.s4 1966171168
        %v3629 = vunpack.c.0.s8 %v3628
        %v3630 = vlaneseq
        %v3631 = vshrl.u32 %v3630, 7
        %v3632 = vsub.s32 %v3629, %v3631
        %v3633 = vrot.slane %v3605, %v3632
        %v3634 = vcombine.low %v3612, %v3619
        %v3635 = vcombine.low %v3626, %v3633
        %v3637 = vunpack.c.l.s4 1966171168
        %v3638 = vunpack.c.0.s8 %v3637
        %v3639 = vlaneseq
        %v3640 = vshrl.u32 %v3639, 7
        %v3641 = vsub.s32 %v3638, %v3640
        %v3642 = vrot.slane %v3634, %v3641
        %v3644 = vunpack.c.l.s4 1966171168
        %v3645 = vunpack.c.0.s8 %v3644
        %v3646 = vlaneseq
        %v3647 = vshrl.u32 %v3646, 7
        %v3648 = vsub.s32 %v3645, %v3647
        %v3649 = vrot.slane %v3635, %v3648
        %v3650 = vcombine.low %v3642, %v3649
        %v3651 = vcombine.low %v2103, %v2107
        %v3652 = vcombine.low %v2111, %v2115
        %v3653 = vcombine.low %v2119, %v2123
        %v3654 = vcombine.low %v2127, %v2131
        %v3656 = vunpack.c.l.s4 1966171168
        %v3657 = vunpack.c.0.s8 %v3656
        %v3658 = vlaneseq
        %v3659 = vshrl.u32 %v3658, 7
        %v3660 = vsub.s32 %v3657, %v3659
        %v3661 = vrot.slane %v3651, %v3660
        %v3663 = vunpack.c.l.s4 1966171168
        %v3664 = vunpack.c.0.s8 %v3663
        %v3665 = vlaneseq
        %v3666 = vshrl.u32 %v3665, 7
        %v3667 = vsub.s32 %v3664, %v3666
        %v3668 = vrot.slane %v3652, %v3667
        %v3670 = vunpack.c.l.s4 1966171168
        %v3671 = vunpack.c.0.s8 %v3670
        %v3672 = vlaneseq
        %v3673 = vshrl.u32 %v3672, 7
        %v3674 = vsub.s32 %v3671, %v3673
        %v3675 = vrot.slane %v3653, %v3674
        %v3677 = vunpack.c.l.s4 1966171168
        %v3678 = vunpack.c.0.s8 %v3677
        %v3679 = vlaneseq
        %v3680 = vshrl.u32 %v3679, 7
        %v3681 = vsub.s32 %v3678, %v3680
        %v3682 = vrot.slane %v3654, %v3681
        %v3683 = vcombine.low %v3661, %v3668
        %v3684 = vcombine.low %v3675, %v3682
        %v3686 = vunpack.c.l.s4 1966171168
        %v3687 = vunpack.c.0.s8 %v3686
        %v3688 = vlaneseq
        %v3689 = vshrl.u32 %v3688, 7
        %v3690 = vsub.s32 %v3687, %v3689
        %v3691 = vrot.slane %v3683, %v3690
        %v3693 = vunpack.c.l.s4 1966171168
        %v3694 = vunpack.c.0.s8 %v3693
        %v3695 = vlaneseq
        %v3696 = vshrl.u32 %v3695, 7
        %v3697 = vsub.s32 %v3694, %v3696
        %v3698 = vrot.slane %v3684, %v3697
        %v3699 = vcombine.low %v3691, %v3698
        %3700 = vset.pattern.permute.xlu0 0
        %3701 = vperm.xlu0 %3700, %v2180
        %v3702 = vpop.permute.xlu0 %3701
        %3703 = vset.pattern.permute.xlu0 0
        %3704 = vperm.xlu0 %3703, %v2229
        %v3705 = vpop.permute.xlu0 %3704
        %3706 = vset.pattern.permute.xlu0 0
        %3707 = vperm.xlu0 %3706, %v2278
        %v3708 = vpop.permute.xlu0 %3707
        %3709 = vset.pattern.permute.xlu0 0
        %3710 = vperm.xlu0 %3709, %v2327
        %v3711 = vpop.permute.xlu0 %3710
        %3712 = vset.pattern.permute.xlu0 0
        %3713 = vperm.xlu0 %3712, %v2376
        %v3714 = vpop.permute.xlu0 %3713
        %3715 = vset.pattern.permute.xlu0 0
        %3716 = vperm.xlu0 %3715, %v2425
        %v3717 = vpop.permute.xlu0 %3716
        %3718 = vset.pattern.permute.xlu0 0
        %3719 = vperm.xlu0 %3718, %v2474
        %v3720 = vpop.permute.xlu0 %3719
        %3721 = vset.pattern.permute.xlu0 0
        %3722 = vperm.xlu0 %3721, %v2523
        %v3723 = vpop.permute.xlu0 %3722
        %3724 = vset.pattern.permute.xlu0 0
        %3725 = vperm.xlu0 %3724, %v2572
        %v3726 = vpop.permute.xlu0 %3725
        %3727 = vset.pattern.permute.xlu0 0
        %3728 = vperm.xlu0 %3727, %v2621
        %v3729 = vpop.permute.xlu0 %3728
        %3730 = vset.pattern.permute.xlu0 0
        %3731 = vperm.xlu0 %3730, %v2670
        %v3732 = vpop.permute.xlu0 %3731
        %3733 = vset.pattern.permute.xlu0 0
        %3734 = vperm.xlu0 %3733, %v2719
        %v3735 = vpop.permute.xlu0 %3734
        %3736 = vset.pattern.permute.xlu0 0
        %3737 = vperm.xlu0 %3736, %v2768
        %v3738 = vpop.permute.xlu0 %3737
        %3739 = vset.pattern.permute.xlu0 0
        %3740 = vperm.xlu0 %3739, %v2817
        %v3741 = vpop.permute.xlu0 %3740
        %3742 = vset.pattern.permute.xlu0 0
        %3743 = vperm.xlu0 %3742, %v2866
        %v3744 = vpop.permute.xlu0 %3743
        %3745 = vset.pattern.permute.xlu0 0
        %3746 = vperm.xlu0 %3745, %v2915
        %v3747 = vpop.permute.xlu0 %3746
        %3748 = vset.pattern.permute.xlu0 0
        %3749 = vperm.xlu0 %3748, %v2964
        %v3750 = vpop.permute.xlu0 %3749
        %3751 = vset.pattern.permute.xlu0 0
        %3752 = vperm.xlu0 %3751, %v3013
        %v3753 = vpop.permute.xlu0 %3752
        %3754 = vset.pattern.permute.xlu0 0
        %3755 = vperm.xlu0 %3754, %v3062
        %v3756 = vpop.permute.xlu0 %3755
        %3757 = vset.pattern.permute.xlu0 0
        %3758 = vperm.xlu0 %3757, %v3111
        %v3759 = vpop.permute.xlu0 %3758
        %3760 = vset.pattern.permute.xlu0 0
        %3761 = vperm.xlu0 %3760, %v3160
        %v3762 = vpop.permute.xlu0 %3761
        %3763 = vset.pattern.permute.xlu0 0
        %3764 = vperm.xlu0 %3763, %v3209
        %v3765 = vpop.permute.xlu0 %3764
        %3766 = vset.pattern.permute.xlu0 0
        %3767 = vperm.xlu0 %3766, %v3258
        %v3768 = vpop.permute.xlu0 %3767
        %3769 = vset.pattern.permute.xlu0 0
        %3770 = vperm.xlu0 %3769, %v3307
        %v3771 = vpop.permute.xlu0 %3770
        %3772 = vset.pattern.permute.xlu0 0
        %3773 = vperm.xlu0 %3772, %v3356
        %v3774 = vpop.permute.xlu0 %3773
        %3775 = vset.pattern.permute.xlu0 0
        %3776 = vperm.xlu0 %3775, %v3405
        %v3777 = vpop.permute.xlu0 %3776
        %3778 = vset.pattern.permute.xlu0 0
        %3779 = vperm.xlu0 %3778, %v3454
        %v3780 = vpop.permute.xlu0 %3779
        %3781 = vset.pattern.permute.xlu0 0
        %3782 = vperm.xlu0 %3781, %v3503
        %v3783 = vpop.permute.xlu0 %3782
        %3784 = vset.pattern.permute.xlu0 0
        %3785 = vperm.xlu0 %3784, %v3552
        %v3786 = vpop.permute.xlu0 %3785
        %3787 = vset.pattern.permute.xlu0 0
        %3788 = vperm.xlu0 %3787, %v3601
        %v3789 = vpop.permute.xlu0 %3788
        %3790 = vset.pattern.permute.xlu0 0
        %3791 = vperm.xlu0 %3790, %v3650
        %v3792 = vpop.permute.xlu0 %3791
        %3793 = vset.pattern.permute.xlu0 0
        %3794 = vperm.xlu0 %3793, %v3699
        %v3795 = vpop.permute.xlu0 %3794
        %v3796 = vlaneseq
        %v3797 = vshrl.u32 %v3796, 7
        %v3798 = vsub.s32 %v837, %v3797
        %v3799 = vrot.slane %v3702, %v3798
        %v3800 = vadd.s32 %v837, 4294967288
        %v3801 = vlaneseq
        %v3802 = vshrl.u32 %v3801, 7
        %v3803 = vsub.s32 %v3800, %v3802
        %v3804 = vrot.slane %v3705, %v3803
        %vm3805 = vcmask 130112
        %v3806 = vsel %vm3805, %v3804, %v3799
        %v3807 = vadd.s32 %v837, 4294967280
        %v3808 = vlaneseq
        %v3809 = vshrl.u32 %v3808, 7
        %v3810 = vsub.s32 %v3807, %v3809
        %v3811 = vrot.slane %v3708, %v3810
        %vm3812 = vcmask 195712
        %v3813 = vsel %vm3812, %v3811, %v3806
        %v3814 = vadd.s32 %v837, 4294967272
        %v3815 = vlaneseq
        %v3816 = vshrl.u32 %v3815, 7
        %v3817 = vsub.s32 %v3814, %v3816
        %v3818 = vrot.slane %v3711, %v3817
        %vm3819 = vcmask 261312
        %v3820 = vsel %vm3819, %v3818, %v3813
        %v3821 = vadd.s32 %v837, 4294967264
        %v3822 = vlaneseq
        %v3823 = vshrl.u32 %v3822, 7
        %v3824 = vsub.s32 %v3821, %v3823
        %v3825 = vrot.slane %v3714, %v3824
        %vm3826 = vcmask 326912
        %v3827 = vsel %vm3826, %v3825, %v3820
        %v3828 = vadd.s32 %v837, 4294967256
        %v3829 = vlaneseq
        %v3830 = vshrl.u32 %v3829, 7
        %v3831 = vsub.s32 %v3828, %v3830
        %v3832 = vrot.slane %v3717, %v3831
        %vm3833 = vcmask 392512
        %v3834 = vsel %vm3833, %v3832, %v3827
        %v3835 = vadd.s32 %v837, 4294967248
        %v3836 = vlaneseq
        %v3837 = vshrl.u32 %v3836, 7
        %v3838 = vsub.s32 %v3835, %v3837
        %v3839 = vrot.slane %v3720, %v3838
        %vm3840 = vcmask 458112
        %v3841 = vsel %vm3840, %v3839, %v3834
        %v3842 = vadd.s32 %v837, 4294967240
        %v3843 = vlaneseq
        %v3844 = vshrl.u32 %v3843, 7
        %v3845 = vsub.s32 %v3842, %v3844
        %v3846 = vrot.slane %v3723, %v3845
        %vm3847 = vcmask 523712
        %v3848 = vsel %vm3847, %v3846, %v3841
        %v3849 = vadd.s32 %v837, 4294967232
        %v3850 = vlaneseq
        %v3851 = vshrl.u32 %v3850, 7
        %v3852 = vsub.s32 %v3849, %v3851
        %v3853 = vrot.slane %v3726, %v3852
        %vm3854 = vcmask 589312
        %v3855 = vsel %vm3854, %v3853, %v3848
        %v3856 = vadd.s32 %v837, 4294967224
        %v3857 = vlaneseq
        %v3858 = vshrl.u32 %v3857, 7
        %v3859 = vsub.s32 %v3856, %v3858
        %v3860 = vrot.slane %v3729, %v3859
        %vm3861 = vcmask 654912
        %v3862 = vsel %vm3861, %v3860, %v3855
        %v3863 = vadd.s32 %v837, 4294967216
        %v3864 = vlaneseq
        %v3865 = vshrl.u32 %v3864, 7
        %v3866 = vsub.s32 %v3863, %v3865
        %v3867 = vrot.slane %v3732, %v3866
        %vm3868 = vcmask 720512
        %v3869 = vsel %vm3868, %v3867, %v3862
        %v3870 = vadd.s32 %v837, 4294967208
        %v3871 = vlaneseq
        %v3872 = vshrl.u32 %v3871, 7
        %v3873 = vsub.s32 %v3870, %v3872
        %v3874 = vrot.slane %v3735, %v3873
        %vm3875 = vcmask 786112
        %v3876 = vsel %vm3875, %v3874, %v3869
        %v3877 = vadd.s32 %v837, 4294967200
        %v3878 = vlaneseq
        %v3879 = vshrl.u32 %v3878, 7
        %v3880 = vsub.s32 %v3877, %v3879
        %v3881 = vrot.slane %v3738, %v3880
        %vm3882 = vcmask 851712
        %v3883 = vsel %vm3882, %v3881, %v3876
        %v3884 = vadd.s32 %v837, 4294967192
        %v3885 = vlaneseq
        %v3886 = vshrl.u32 %v3885, 7
        %v3887 = vsub.s32 %v3884, %v3886
        %v3888 = vrot.slane %v3741, %v3887
        %vm3889 = vcmask 917312
        %v3890 = vsel %vm3889, %v3888, %v3883
        %v3891 = vadd.s32 %v837, 4294967184
        %v3892 = vlaneseq
        %v3893 = vshrl.u32 %v3892, 7
        %v3894 = vsub.s32 %v3891, %v3893
        %v3895 = vrot.slane %v3744, %v3894
        %vm3896 = vcmask 982912
        %v3897 = vsel %vm3896, %v3895, %v3890
        %v3898 = vadd.s32 %v837, 4294967176
        %v3899 = vlaneseq
        %v3900 = vshrl.u32 %v3899, 7
        %v3901 = vsub.s32 %v3898, %v3900
        %v3902 = vrot.slane %v3747, %v3901
        %vm3903 = vcmask 1048512
        %v3904 = vsel %vm3903, %v3902, %v3897
        %v3905 = vlaneseq
        %v3906 = vshrl.u32 %v3905, 7
        %v3907 = vsub.s32 %v837, %v3906
        %v3908 = vrot.slane %v3750, %v3907
        %v3909 = vlaneseq
        %v3910 = vshrl.u32 %v3909, 7
        %v3911 = vsub.s32 %v3800, %v3910
        %v3912 = vrot.slane %v3753, %v3911
        %v3913 = vsel %vm3805, %v3912, %v3908
        %v3914 = vlaneseq
        %v3915 = vshrl.u32 %v3914, 7
        %v3916 = vsub.s32 %v3807, %v3915
        %v3917 = vrot.slane %v3756, %v3916
        %v3918 = vsel %vm3812, %v3917, %v3913
        %v3919 = vlaneseq
        %v3920 = vshrl.u32 %v3919, 7
        %v3921 = vsub.s32 %v3814, %v3920
        %v3922 = vrot.slane %v3759, %v3921
        %v3923 = vsel %vm3819, %v3922, %v3918
        %v3924 = vlaneseq
        %v3925 = vshrl.u32 %v3924, 7
        %v3926 = vsub.s32 %v3821, %v3925
        %v3927 = vrot.slane %v3762, %v3926
        %v3928 = vsel %vm3826, %v3927, %v3923
        %v3929 = vlaneseq
        %v3930 = vshrl.u32 %v3929, 7
        %v3931 = vsub.s32 %v3828, %v3930
        %v3932 = vrot.slane %v3765, %v3931
        %v3933 = vsel %vm3833, %v3932, %v3928
        %v3934 = vlaneseq
        %v3935 = vshrl.u32 %v3934, 7
        %v3936 = vsub.s32 %v3835, %v3935
        %v3937 = vrot.slane %v3768, %v3936
        %v3938 = vsel %vm3840, %v3937, %v3933
        %v3939 = vlaneseq
        %v3940 = vshrl.u32 %v3939, 7
        %v3941 = vsub.s32 %v3842, %v3940
        %v3942 = vrot.slane %v3771, %v3941
        %v3943 = vsel %vm3847, %v3942, %v3938
        %v3944 = vlaneseq
        %v3945 = vshrl.u32 %v3944, 7
        %v3946 = vsub.s32 %v3849, %v3945
        %v3947 = vrot.slane %v3774, %v3946
        %v3948 = vsel %vm3854, %v3947, %v3943
        %v3949 = vlaneseq
        %v3950 = vshrl.u32 %v3949, 7
        %v3951 = vsub.s32 %v3856, %v3950
        %v3952 = vrot.slane %v3777, %v3951
        %v3953 = vsel %vm3861, %v3952, %v3948
        %v3954 = vlaneseq
        %v3955 = vshrl.u32 %v3954, 7
        %v3956 = vsub.s32 %v3863, %v3955
        %v3957 = vrot.slane %v3780, %v3956
        %v3958 = vsel %vm3868, %v3957, %v3953
        %v3959 = vlaneseq
        %v3960 = vshrl.u32 %v3959, 7
        %v3961 = vsub.s32 %v3870, %v3960
        %v3962 = vrot.slane %v3783, %v3961
        %v3963 = vsel %vm3875, %v3962, %v3958
        %v3964 = vlaneseq
        %v3965 = vshrl.u32 %v3964, 7
        %v3966 = vsub.s32 %v3877, %v3965
        %v3967 = vrot.slane %v3786, %v3966
        %v3968 = vsel %vm3882, %v3967, %v3963
        %v3969 = vlaneseq
        %v3970 = vshrl.u32 %v3969, 7
        %v3971 = vsub.s32 %v3884, %v3970
        %v3972 = vrot.slane %v3789, %v3971
        %v3973 = vsel %vm3889, %v3972, %v3968
        %v3974 = vlaneseq
        %v3975 = vshrl.u32 %v3974, 7
        %v3976 = vsub.s32 %v3891, %v3975
        %v3977 = vrot.slane %v3792, %v3976
        %v3978 = vsel %vm3896, %v3977, %v3973
        %v3979 = vlaneseq
        %v3980 = vshrl.u32 %v3979, 7
        %v3981 = vsub.s32 %v3898, %v3980
        %v3982 = vrot.slane %v3795, %v3981
        %v3983 = vsel %vm3903, %v3982, %v3978
        %v3984 = vcombine.low %v3904, %v3983
        %v3986 = vunpack.c.l.s4 1966171168
        %v3987 = vunpack.c.0.s8 %v3986
        %v3988 = vlaneseq
        %v3989 = vshrl.u32 %v3988, 7
        %v3990 = vsub.s32 %v3987, %v3989
        %v3991 = vrot.slane %v3984, %v3990
        %v3993 = vunpack.c.l.s4 1966171168
        %v3994 = vunpack.c.0.s8 %v3993
        %v3995 = vlaneseq
        %v3996 = vshrl.u32 %v3995, 7
        %v3997 = vsub.s32 %v3994, %v3996
        %v3998 = vrot.slane %v3991, %v3997
        %v3999 = vlaneseq
        %vm4000 = vcmp.ge.s32.totalorder %v3999, 0
        %vm4001 = vcmp.lt.s32.totalorder %v3999, 256
        %vm4002 = vmand %vm4000, %vm4001
        %4003 = vst.msk [vmem:[%s269] sm:$0x3] %vm4002, %v3998
        %s4004 = sand.u32 %s118, 1
        %s4005 = scalar_lea.sflag [#allocation4], %s4004
        %s4006 = sand.u32 %s118, 1
        %s4007 = smul.addr %s4006, 8
        %s4008 = scalar_lea.vmem [#allocation8], %s4007
        %s4009 = sand.u32 %s146, 1
        %s4010 = scalar_lea.sflag [#allocation10], %s4009
        %s4011 = sand.u32 %s146, 1
        %s4012 = smul.addr %s4011, 2
        %s4013 = scalar_lea.vmem [#allocation9], %s4012
        // Predicated region
        $region45: #{nearest_embed_forward.1} parent=31 // pred_check
          %p4014 = pneg %p128
        $region46: #{nearest_embed_forward.1} parent=31 // pred_check_branch
          %4016 = sbr.rel (%p4014) target = $region48
        $region47: #{nearest_embed_forward.1} parent=31 // pred_region
          %s4017 = smul.u32 2, %s31
          %s4019 = ssub.s32 128, 128
          %4020 = vsyncadd %s4005, %s4019
          %s4021 = smul.addr %s30, 2
          %s4022 = sadd.s32 %s4017, %s4021
          %s4023 = smul.addr %s4022, 64
          %s4024 = scalar_lea.hbm %s3, %s4023
          %s4026 = sshll.u32 %s4008, 4
          %s4027 = int_to_ptr.vmem [resolvable:$true] %s4026
          %4029 = dma.vmem_to_hbm [thread:$0]  %s4027, 128, %s4024, %s4005
        $region48: #{nearest_embed_forward.1} parent=31 // pred_fallthru
          _
        // Predicated region
        $region49: #{nearest_embed_forward.1} parent=31 // pred_check
          %p4030 = pneg %p156
        $region50: #{nearest_embed_forward.1} parent=31 // pred_check_branch
          %4032 = sbr.rel (%p4030) target = $region52
        $region51: #{nearest_embed_forward.1} parent=31 // pred_region
          %s4033 = smul.u32 2, %s31
          %s4035 = ssub.s32 32, 32
          %4036 = vsyncadd %s4010, %s4035
          %s4037 = smul.addr %s30, 2
          %s4038 = sadd.s32 %s4033, %s4037
          %s4039 = smul.addr %s4038, 16
          %s4040 = scalar_lea.hbm %s4, %s4039
          %s4042 = sshll.u32 %s4013, 4
          %s4043 = int_to_ptr.vmem [resolvable:$true] %s4042
          %4045 = dma.vmem_to_hbm [thread:$0]  %s4043, 32, %s4040, %s4010
        $region52: #{nearest_embed_forward.1} parent=31 // pred_fallthru
          _
      $region32: #{nearest_embed_forward.1} parent=5 // pred_fallthru
        _
      %p4046 = scmp.le.s32.totalorder 2, %s21
      // Predicated region
      $region53: #{nearest_embed_forward.1} parent=5 // pred_check
        %p4047 = pneg %p4046
      $region54: #{nearest_embed_forward.1} parent=5 // pred_check_branch
        %4049 = sbr.rel (%p4047) target = $region56
      $region55: #{nearest_embed_forward.1} parent=5 // pred_region
        %s4050 = ssub.s32 %s21, 2
        // Predicated region
        $region57: #{nearest_embed_forward.1} parent=55 // pred_check
          %p4051 = pneg %p134
        $region58: #{nearest_embed_forward.1} parent=55 // pred_check_branch
          %4053 = sbr.rel (%p4051) target = $region60
        $region59: #{nearest_embed_forward.1} parent=55 // pred_region
          %s4054 = sand.u32 %s119, 1
          %s4055 = scalar_lea.sflag [#allocation4], %s4054
          %s4056 = sand.u32 %s119, 1
          %s4057 = smul.addr %s4056, 8
          %s4058 = scalar_lea.vmem [#allocation8], %s4057
          %4059 = dma.done %s4055, 128
        $region60: #{nearest_embed_forward.1} parent=55 // pred_fallthru
          _
        // Predicated region
        $region61: #{nearest_embed_forward.1} parent=55 // pred_check
          %p4060 = pneg %p162
        $region62: #{nearest_embed_forward.1} parent=55 // pred_check_branch
          %4062 = sbr.rel (%p4060) target = $region64
        $region63: #{nearest_embed_forward.1} parent=55 // pred_region
          %s4063 = sand.u32 %s147, 1
          %s4064 = scalar_lea.sflag [#allocation10], %s4063
          %s4065 = sand.u32 %s147, 1
          %s4066 = smul.addr %s4065, 2
          %s4067 = scalar_lea.vmem [#allocation9], %s4066
          %4068 = dma.done %s4064, 32
        $region64: #{nearest_embed_forward.1} parent=55 // pred_fallthru
          _
      $region56: #{nearest_embed_forward.1} parent=5 // pred_fallthru
        _
    $region6: #{nearest_embed_forward.1} parent=1 // loop_footer
      %s25 = sadd.s32 1, %s21
    $region7: #{nearest_embed_forward.1} parent=1 // loop_footer_branch
      %20 = sbr.rel target = $region3
    $region8: #{nearest_embed_forward.1} parent=1 // loop_exit
      _
    %4069 = vsyncpa [#allocation3], 1
    %s4070 = scalar_lea.sflag [#allocation3], 1
    %4071 = vsyncpa %s4070, 1
    %4072 = vsyncpa [#allocation6], 1
    %4073 = vsyncpa [#allocation4], 1
    %s4074 = scalar_lea.sflag [#allocation4], 1
    %4075 = vsyncpa %s4074, 1
    %4076 = vsyncpa [#allocation10], 1
    %s4077 = scalar_lea.sflag [#allocation10], 1
    %4078 = vsyncpa %s4077, 1

</llo_original>
